<compile_context>
chip_gen: v7x
topology: tpu7x:2x2x1
jax: 0.10.0
libtpu: 0.0.40
codegen_flags: <defaults>
</compile_context>

<pallas_src>
import jax
import jax.numpy as jnp
from jax.experimental import pallas as pl
from jax.experimental.pallas import tpu as pltpu


def _pick_row_tile(H, W, target_rows=1024):
    """Largest divisor of H (capped at H//2 when possible) with th*W <= target."""
    cap = max(1, H // 2)
    best = 1
    for cand in range(1, H + 1):
        if H % cand == 0 and cand <= cap and cand * W <= target_rows:
            best = cand
    return best


# ---------------------------------------------------------------------------
# Conv 3x3 (stride 1, pad 1) + bias + fused ReLU
# ---------------------------------------------------------------------------
def _conv3x3_bias_relu_kernel(xp_ref, w_ref, b_ref, pre_ref, post_ref):
    """One (batch, row-tile) grid step.

    xp_ref : (1, H+2, W+2, Cin) padded NHWC image (f32), resident per batch
    w_ref  : (9*Cin, Cout)      (kh, kw, cin)-flattened weights (MXU dtype)
    b_ref  : (1, Cout)          f32 bias
    pre_ref, post_ref : (th*W, Cout) f32 output row blocks
    """
    W = xp_ref.shape[2] - 2
    cin = xp_ref.shape[3]
    rows = pre_ref.shape[0]
    th = rows // W                        # output rows handled by this step
    i = pl.program_id(1)
    row0 = pl.multiple_of(i * th, th)     # first output row of this tile

    # Build this tile's im2col block inside VMEM: 9 shifted views of the
    # resident padded image, concatenated along K.
    cols = []
    for kh in range(3):
        for kw in range(3):
            patch = xp_ref[0, pl.ds(row0 + kh, th), pl.ds(kw, W), :]
            cols.append(patch.reshape(rows, cin))
    patches = jnp.concatenate(cols, axis=1).astype(w_ref.dtype)   # (rows, 9*Cin)

    acc = jnp.dot(patches, w_ref[...], preferred_element_type=jnp.float32)
    pre = acc + b_ref[...]                                        # fused bias
    pre_ref[...] = pre.astype(pre_ref.dtype)
    post_ref[...] = jnp.maximum(pre, 0.0).astype(post_ref.dtype)  # fused ReLU


def conv2d_3x3_bias_relu(x_nhwc, w, b, *, mxu_dtype=jnp.bfloat16,
                         target_rows=1024):
    """3x3 conv (stride 1, pad 1) + bias; returns (pre_relu, relu) in NHWC.

    x_nhwc: (N, H, W, Cin) f32, w: (Cout, Cin, 3, 3) OIHW, b: (Cout,)
    """
    N, H, W, Cin = x_nhwc.shape
    Cout = w.shape[0]
    xp = jnp.pad(x_nhwc, ((0, 0), (1, 1), (1, 1), (0, 0)))        # (N,H+2,W+2,Cin)
    # OIHW -> (kh, kw, cin, cout) -> (9*Cin, Cout): matches im2col column order.
    w2d = jnp.transpose(w, (2, 3, 1, 0)).reshape(9 * Cin, Cout).astype(mxu_dtype)
    b2d = b.reshape(1, Cout).astype(jnp.float32)

    th = _pick_row_tile(H, W, target_rows)
    nt = H // th
    rows = th * W
    out2d = jax.ShapeDtypeStruct((N * H * W, Cout), jnp.float32)

    pre2d, post2d = pl.pallas_call(
        _conv3x3_bias_relu_kernel,
        grid=(N, nt),
        in_specs=[
            # whole padded image of batch n: resident across its row tiles
            pl.BlockSpec((1, H + 2, W + 2, Cin), lambda n, i: (n, 0, 0, 0)),
            # weights / bias: resident for the whole grid
            pl.BlockSpec((9 * Cin, Cout), lambda n, i: (0, 0)),
            pl.BlockSpec((1, Cout), lambda n, i: (0, 0)),
        ],
        out_specs=[
            pl.BlockSpec((rows, Cout), lambda n, i: (n * nt + i, 0)),
            pl.BlockSpec((rows, Cout), lambda n, i: (n * nt + i, 0)),
        ],
        out_shape=(out2d, out2d),
        compiler_params=pltpu.CompilerParams(
            dimension_semantics=("parallel", "parallel"),
            vmem_limit_bytes=32 * 1024 * 1024,
        ),
        cost_estimate=pl.CostEstimate(
            flops=2 * N * H * W * 9 * Cin * Cout,
            transcendentals=0,
            bytes_accessed=(xp.size * xp.dtype.itemsize
                            + w2d.size * w2d.dtype.itemsize
                            + 2 * N * H * W * Cout * 4),
        ),
    )(xp, w2d, b2d)

    pre = pre2d.reshape(N, H, W, Cout)
    post = post2d.reshape(N, H, W, Cout)
    return pre, post


# ---------------------------------------------------------------------------
# MaxPool2d(kernel_size=2, stride=2)
# ---------------------------------------------------------------------------
def _maxpool2x2_kernel(x_ref, o_ref):
    """x_ref: (1, tho, 2, Wo, 2*C) row-pair / [left|right]*C view.
    o_ref: (1, tho, Wo, C)."""
    C = o_ref.shape[-1]
    top = x_ref[0, :, 0, :, :]                     # rows 2h     : (tho, Wo, 2C)
    bot = x_ref[0, :, 1, :, :]                     # rows 2h + 1
    m = jnp.maximum(top, bot)                      # vertical max
    o_ref[0] = jnp.maximum(m[:, :, :C], m[:, :, C:])   # horizontal max


def maxpool2x2(x_nhwc, *, target_rows=1024):
    """MaxPool2d(2, 2) on an NHWC tensor (even H, W)."""
    N, H, W, C = x_nhwc.shape
    assert H % 2 == 0 and W % 2 == 0, "maxpool2x2 requires even H and W"
    Ho, Wo = H // 2, W // 2
    # Free row-major reinterpretation: (n, 2h+r, 2w+s, c) -> (n, h, r, w, s*C+c)
    xr = x_nhwc.reshape(N, Ho, 2, Wo, 2 * C)
    tho = _pick_row_tile(Ho, Wo, target_rows)
    return pl.pallas_call(
        _maxpool2x2_kernel,
        grid=(N, Ho // tho),
        in_specs=[pl.BlockSpec((1, tho, 2, Wo, 2 * C),
                               lambda n, i: (n, i, 0, 0, 0))],
        out_specs=pl.BlockSpec((1, tho, Wo, C), lambda n, i: (n, i, 0, 0)),
        out_shape=jax.ShapeDtypeStruct((N, Ho, Wo, C), x_nhwc.dtype),
        compiler_params=pltpu.CompilerParams(
            dimension_semantics=("parallel", "parallel")),
    )(xr)


# ---------------------------------------------------------------------------
# Standalone ReLU (fallback only; every VGG ReLU is fused into the conv above)
# ---------------------------------------------------------------------------
def _relu_kernel(x_ref, o_ref):
    o_ref[...] = jnp.maximum(x_ref[...], 0.0).astype(o_ref.dtype)


def relu(x_nhwc, *, target_rows=2048):
    N, H, W, C = x_nhwc.shape
    th = _pick_row_tile(H, W, target_rows)
    spec = pl.BlockSpec((1, th, W, C), lambda n, i: (n, i, 0, 0))
    return pl.pallas_call(
        _relu_kernel,
        grid=(N, H // th),
        in_specs=[spec],
        out_specs=spec,
        out_shape=jax.ShapeDtypeStruct(x_nhwc.shape, x_nhwc.dtype),
        compiler_params=pltpu.CompilerParams(
            dimension_semantics=("parallel", "parallel")),
    )(x_nhwc)


# ---------------------------------------------------------------------------
# Synthetic VGG-style `features` stack + VGG_Encoder forward
# ---------------------------------------------------------------------------
def init_vgg_features(key, cfg, in_ch):
    """Build a list of (kind, params) layers mimicking torchvision VGG features."""
    layers = []
    for v in cfg:
        if v == "M":
            layers.append(("maxpool", None))
        else:
            key, wk, bk = jax.random.split(key, 3)
            fan_in = in_ch * 9
            w = jax.random.normal(wk, (v, in_ch, 3, 3), jnp.float32) * (2.0 / fan_in) ** 0.5
            b = jax.random.normal(bk, (v,), jnp.float32) * 0.01
            layers.append(("conv", (w, b)))
            layers.append(("relu", None))
            in_ch = v
    return layers


def _nhwc_to_nchw(t):
    return jnp.transpose(t, (0, 3, 1, 2))


def vgg_encoder_forward(layers, x_nchw, *, mxu_dtype=jnp.bfloat16):
    """Equivalent of VGG_Encoder.forward: [x] + every `features` intermediate.

    Internally channels-last; returned tensors are NCHW like the PyTorch
    module.  Conv+ReLU pairs run as one fused Pallas kernel that emits both
    intermediates.
    """
    features = [x_nchw]
    h = jnp.transpose(x_nchw, (0, 2, 3, 1))          # NHWC, lane-dense channels
    idx = 0
    while idx < len(layers):
        kind, params = layers[idx]
        if kind == "conv":
            w, b = params
            pre, post = conv2d_3x3_bias_relu(h, w, b, mxu_dtype=mxu_dtype)
            features.append(_nhwc_to_nchw(pre))
            if idx + 1 < len(layers) and layers[idx + 1][0] == "relu":
                features.append(_nhwc_to_nchw(post))   # fused ReLU output
                h = post
                idx += 2
            else:
                h = pre
                idx += 1
        elif kind == "relu":
            h = relu(h)                                # fallback (unused by VGG cfgs)
            features.append(_nhwc_to_nchw(h))
            idx += 1
        elif kind == "maxpool":
            h = maxpool2x2(h)
            features.append(_nhwc_to_nchw(h))
            idx += 1
        else:
            raise ValueError(f"unknown layer kind: {kind}")
    return features


# ---------------------------------------------------------------------------
# Pure-JAX reference (same MXU-operand rounding) for the correctness check
# ---------------------------------------------------------------------------
def _ref_forward(layers, x, mxu_dtype=jnp.bfloat16):
    feats = [x]
    for kind, params in layers:
        h = feats[-1]
        if kind == "conv":
            w, b = params
            y = jax.lax.conv_general_dilated(
                h.astype(mxu_dtype), w.astype(mxu_dtype),
                window_strides=(1, 1), padding=((1, 1), (1, 1)),
                dimension_numbers=("NCHW", "OIHW", "NCHW"),
                preferred_element_type=jnp.float32)
            feats.append(y + b.reshape(1, -1, 1, 1))
        elif kind == "relu":
            feats.append(jnp.maximum(h, 0.0))
        elif kind == "maxpool":
            feats.append(jax.lax.reduce_window(
                h, -jnp.inf, jax.lax.max,
                window_dimensions=(1, 1, 2, 2),
                window_strides=(1, 1, 2, 2), padding="VALID"))
    return feats


if __name__ == "__main__":
    key = jax.random.PRNGKey(0)
    key, xk, pk = jax.random.split(key, 3)

    # Small synthetic shapes: batch=2, in_channels=4, spatial=16
    x = jax.random.normal(xk, (2, 4, 16, 16), jnp.float32)

    # Mini VGG-style features: conv8,relu,conv8,relu,M,conv16,relu,conv16,relu,M
    cfg = [8, 8, "M", 16, 16, "M"]
    layers = init_vgg_features(pk, cfg, in_ch=4)

    fwd = jax.jit(lambda inp: vgg_encoder_forward(layers, inp))
    feats = fwd(x)
    feats = [jax.block_until_ready(f) for f in feats]

    # sanity check against pure-JAX reference (matched bf16 operand rounding)
    ref_feats = _ref_forward(layers, x)
    assert len(feats) == len(ref_feats) == 1 + len(layers)
    for k_i, (got, ref) in enumerate(zip(feats, ref_feats)):
        assert got.shape == ref.shape, (k_i, got.shape, ref.shape)
        assert got.dtype == ref.dtype, (k_i, got.dtype, ref.dtype)
        err = float(jnp.max(jnp.abs(got - ref)))
        assert err < 2e-2, f"feature {k_i}: max abs err {err}"

    print("KERNEL_OK")
</pallas_src>

<mosaic_0001>
module attributes {stable_mosaic.version = 11 : i64} {
  func.func @_conv3x3_bias_relu_kernel(%arg0: i32, %arg1: i32, %arg2: memref<1x18x18x4xf32, #tpu.memory_space<vmem>>, %arg3: memref<36x8xbf16, #tpu.memory_space<vmem>>, %arg4: memref<1x8xf32, #tpu.memory_space<vmem>>, %arg5: memref<128x8xf32, #tpu.memory_space<vmem>>, %arg6: memref<128x8xf32, #tpu.memory_space<vmem>>) attributes {dimension_semantics = [#tpu.dimension_semantics<parallel>, #tpu.dimension_semantics<parallel>], iteration_bounds = array<i64: 2, 2>, scalar_prefetch = 0 : i64, scratch_operands = 0 : i64, tpu.core_type = #tpu.core_type<tc>, window_params = [{transform_indices = @transform_0, window_bounds = array<i64: 1, 18, 18, 4>}, {pipeline_mode = #tpu.pipeline_mode<synchronous>, transform_indices = @transform_1, window_bounds = array<i64: 36, 8>}, {pipeline_mode = #tpu.pipeline_mode<synchronous>, transform_indices = @transform_2, window_bounds = array<i64: 1, 8>}, {transform_indices = @transform_3, window_bounds = array<i64: 128, 8>}, {transform_indices = @transform_4, window_bounds = array<i64: 128, 8>}]} {
    %c8_i32 = arith.constant 8 : i32
    %0 = arith.muli %arg1, %c8_i32 : i32
    %1 = tpu.assume_multiple %0, 8 : i32
    %c0_i32 = arith.constant 0 : i32
    %2 = arith.addi %1, %c0_i32 : i32
    %c0 = arith.constant 0 : index
    %3 = arith.index_cast %2 : i32 to index
    %c0_0 = arith.constant 0 : index
    %c0_1 = arith.constant 0 : index
    %4 = vector.load %arg2[%c0, %3, %c0_0, %c0_1] : memref<1x18x18x4xf32, #tpu.memory_space<vmem>>, vector<1x8x16x4xf32>
    %5 = vector.shape_cast %4 : vector<1x8x16x4xf32> to vector<8x16x4xf32>
    %6 = vector.shape_cast %5 : vector<8x16x4xf32> to vector<128x4xf32>
    %c0_i32_2 = arith.constant 0 : i32
    %7 = arith.addi %1, %c0_i32_2 : i32
    %c0_3 = arith.constant 0 : index
    %8 = arith.index_cast %7 : i32 to index
    %c1 = arith.constant 1 : index
    %c0_4 = arith.constant 0 : index
    %9 = vector.load %arg2[%c0_3, %8, %c1, %c0_4] : memref<1x18x18x4xf32, #tpu.memory_space<vmem>>, vector<1x8x16x4xf32>
    %10 = vector.shape_cast %9 : vector<1x8x16x4xf32> to vector<8x16x4xf32>
    %11 = vector.shape_cast %10 : vector<8x16x4xf32> to vector<128x4xf32>
    %c0_i32_5 = arith.constant 0 : i32
    %12 = arith.addi %1, %c0_i32_5 : i32
    %c0_6 = arith.constant 0 : index
    %13 = arith.index_cast %12 : i32 to index
    %c2 = arith.constant 2 : index
    %c0_7 = arith.constant 0 : index
    %14 = vector.load %arg2[%c0_6, %13, %c2, %c0_7] : memref<1x18x18x4xf32, #tpu.memory_space<vmem>>, vector<1x8x16x4xf32>
    %15 = vector.shape_cast %14 : vector<1x8x16x4xf32> to vector<8x16x4xf32>
    %16 = vector.shape_cast %15 : vector<8x16x4xf32> to vector<128x4xf32>
    %c1_i32 = arith.constant 1 : i32
    %17 = arith.addi %1, %c1_i32 : i32
    %c0_8 = arith.constant 0 : index
    %18 = arith.index_cast %17 : i32 to index
    %c0_9 = arith.constant 0 : index
    %c0_10 = arith.constant 0 : index
    %19 = vector.load %arg2[%c0_8, %18, %c0_9, %c0_10] : memref<1x18x18x4xf32, #tpu.memory_space<vmem>>, vector<1x8x16x4xf32>
    %20 = vector.shape_cast %19 : vector<1x8x16x4xf32> to vector<8x16x4xf32>
    %21 = vector.shape_cast %20 : vector<8x16x4xf32> to vector<128x4xf32>
    %c1_i32_11 = arith.constant 1 : i32
    %22 = arith.addi %1, %c1_i32_11 : i32
    %c0_12 = arith.constant 0 : index
    %23 = arith.index_cast %22 : i32 to index
    %c1_13 = arith.constant 1 : index
    %c0_14 = arith.constant 0 : index
    %24 = vector.load %arg2[%c0_12, %23, %c1_13, %c0_14] : memref<1x18x18x4xf32, #tpu.memory_space<vmem>>, vector<1x8x16x4xf32>
    %25 = vector.shape_cast %24 : vector<1x8x16x4xf32> to vector<8x16x4xf32>
    %26 = vector.shape_cast %25 : vector<8x16x4xf32> to vector<128x4xf32>
    %c1_i32_15 = arith.constant 1 : i32
    %27 = arith.addi %1, %c1_i32_15 : i32
    %c0_16 = arith.constant 0 : index
    %28 = arith.index_cast %27 : i32 to index
    %c2_17 = arith.constant 2 : index
    %c0_18 = arith.constant 0 : index
    %29 = vector.load %arg2[%c0_16, %28, %c2_17, %c0_18] : memref<1x18x18x4xf32, #tpu.memory_space<vmem>>, vector<1x8x16x4xf32>
    %30 = vector.shape_cast %29 : vector<1x8x16x4xf32> to vector<8x16x4xf32>
    %31 = vector.shape_cast %30 : vector<8x16x4xf32> to vector<128x4xf32>
    %c2_i32 = arith.constant 2 : i32
    %32 = arith.addi %1, %c2_i32 : i32
    %c0_19 = arith.constant 0 : index
    %33 = arith.index_cast %32 : i32 to index
    %c0_20 = arith.constant 0 : index
    %c0_21 = arith.constant 0 : index
    %34 = vector.load %arg2[%c0_19, %33, %c0_20, %c0_21] : memref<1x18x18x4xf32, #tpu.memory_space<vmem>>, vector<1x8x16x4xf32>
    %35 = vector.shape_cast %34 : vector<1x8x16x4xf32> to vector<8x16x4xf32>
    %36 = vector.shape_cast %35 : vector<8x16x4xf32> to vector<128x4xf32>
    %c2_i32_22 = arith.constant 2 : i32
    %37 = arith.addi %1, %c2_i32_22 : i32
    %c0_23 = arith.constant 0 : index
    %38 = arith.index_cast %37 : i32 to index
    %c1_24 = arith.constant 1 : index
    %c0_25 = arith.constant 0 : index
    %39 = vector.load %arg2[%c0_23, %38, %c1_24, %c0_25] : memref<1x18x18x4xf32, #tpu.memory_space<vmem>>, vector<1x8x16x4xf32>
    %40 = vector.shape_cast %39 : vector<1x8x16x4xf32> to vector<8x16x4xf32>
    %41 = vector.shape_cast %40 : vector<8x16x4xf32> to vector<128x4xf32>
    %c2_i32_26 = arith.constant 2 : i32
    %42 = arith.addi %1, %c2_i32_26 : i32
    %c0_27 = arith.constant 0 : index
    %43 = arith.index_cast %42 : i32 to index
    %c2_28 = arith.constant 2 : index
    %c0_29 = arith.constant 0 : index
    %44 = vector.load %arg2[%c0_27, %43, %c2_28, %c0_29] : memref<1x18x18x4xf32, #tpu.memory_space<vmem>>, vector<1x8x16x4xf32>
    %45 = vector.shape_cast %44 : vector<1x8x16x4xf32> to vector<8x16x4xf32>
    %46 = vector.shape_cast %45 : vector<8x16x4xf32> to vector<128x4xf32>
    %47 = tpu.concatenate %6, %11, %16, %21, %26, %31, %36, %41, %46 in 1 : vector<128x4xf32>, vector<128x4xf32>, vector<128x4xf32>, vector<128x4xf32>, vector<128x4xf32>, vector<128x4xf32>, vector<128x4xf32>, vector<128x4xf32>, vector<128x4xf32> -> vector<128x36xf32>
    %48 = arith.truncf %47 : vector<128x36xf32> to vector<128x36xbf16>
    %c0_30 = arith.constant 0 : index
    %c0_31 = arith.constant 0 : index
    %49 = vector.load %arg3[%c0_30, %c0_31] : memref<36x8xbf16, #tpu.memory_space<vmem>>, vector<36x8xbf16>
    %cst = arith.constant dense<0.000000e+00> : vector<128x8xf32>
    %50 = tpu.matmul %48, %49, %cst {dimension_numbers = #tpu.dot_dimension_numbers<[1], [0], [0], [1], [0, 0, 1, 1], [], []>} : vector<128x36xbf16>, vector<36x8xbf16>, vector<128x8xf32> -> vector<128x8xf32>
    %c0_32 = arith.constant 0 : index
    %c0_33 = arith.constant 0 : index
    %51 = vector.load %arg4[%c0_32, %c0_33] : memref<1x8xf32, #tpu.memory_space<vmem>>, vector<1x8xf32>
    %52 = vector.broadcast %51 : vector<1x8xf32> to vector<128x8xf32>
    %53 = arith.addf %50, %52 : vector<128x8xf32>
    %c0_34 = arith.constant 0 : index
    %c0_35 = arith.constant 0 : index
    %54 = vector.load %arg5[%c0_34, %c0_35] : memref<128x8xf32, #tpu.memory_space<vmem>>, vector<128x8xf32>
    tpu.vector_store %arg5[%c0_34, %c0_35], %53 {strides = array<i32>} : memref<128x8xf32, #tpu.memory_space<vmem>>, vector<128x8xf32>,
    %cst_36 = arith.constant 0.000000e+00 : f32
    %55 = vector.broadcast %cst_36 : f32 to vector<128x8xf32>
    %56 = arith.maximumf %53, %55 : vector<128x8xf32>
    %c0_37 = arith.constant 0 : index
    %c0_38 = arith.constant 0 : index
    %57 = vector.load %arg6[%c0_37, %c0_38] : memref<128x8xf32, #tpu.memory_space<vmem>>, vector<128x8xf32>
    tpu.vector_store %arg6[%c0_37, %c0_38], %56 {strides = array<i32>} : memref<128x8xf32, #tpu.memory_space<vmem>>, vector<128x8xf32>,
    return
  }
  func.func @transform_0(%arg0: i32, %arg1: i32) -> (i32, i32, i32, i32) {
    %c0_i32 = arith.constant 0 : i32
    %c0_i32_0 = arith.constant 0 : i32
    %c0_i32_1 = arith.constant 0 : i32
    %c0_i32_2 = arith.constant 0 : i32
    return %arg0, %c0_i32, %c0_i32_0, %c0_i32_1 : i32, i32, i32, i32
  }
  func.func @transform_1(%arg0: i32, %arg1: i32) -> (i32, i32) {
    %c0_i32 = arith.constant 0 : i32
    %c0_i32_0 = arith.constant 0 : i32
    %c0_i32_1 = arith.constant 0 : i32
    return %c0_i32, %c0_i32_0 : i32, i32
  }
  func.func @transform_2(%arg0: i32, %arg1: i32) -> (i32, i32) {
    %c0_i32 = arith.constant 0 : i32
    %c0_i32_0 = arith.constant 0 : i32
    %c0_i32_1 = arith.constant 0 : i32
    return %c0_i32, %c0_i32_0 : i32, i32
  }
  func.func @transform_3(%arg0: i32, %arg1: i32) -> (i32, i32) {
    %c2_i32 = arith.constant 2 : i32
    %0 = arith.muli %arg0, %c2_i32 : i32
    %1 = arith.addi %0, %arg1 : i32
    %c0_i32 = arith.constant 0 : i32
    %c0_i32_0 = arith.constant 0 : i32
    return %1, %c0_i32 : i32, i32
  }
  func.func @transform_4(%arg0: i32, %arg1: i32) -> (i32, i32) {
    %c2_i32 = arith.constant 2 : i32
    %0 = arith.muli %arg0, %c2_i32 : i32
    %1 = arith.addi %0, %arg1 : i32
    %c0_i32 = arith.constant 0 : i32
    %c0_i32_0 = arith.constant 0 : i32
    return %1, %c0_i32 : i32, i32
  }
}

module attributes {stable_mosaic.version = 11 : i64} {
  func.func @_conv3x3_bias_relu_kernel(%arg0: i32, %arg1: i32, %arg2: memref<1x18x18x8xf32, #tpu.memory_space<vmem>>, %arg3: memref<72x8xbf16, #tpu.memory_space<vmem>>, %arg4: memref<1x8xf32, #tpu.memory_space<vmem>>, %arg5: memref<128x8xf32, #tpu.memory_space<vmem>>, %arg6: memref<128x8xf32, #tpu.memory_space<vmem>>) attributes {dimension_semantics = [#tpu.dimension_semantics<parallel>, #tpu.dimension_semantics<parallel>], iteration_bounds = array<i64: 2, 2>, scalar_prefetch = 0 : i64, scratch_operands = 0 : i64, tpu.core_type = #tpu.core_type<tc>, window_params = [{transform_indices = @transform_0, window_bounds = array<i64: 1, 18, 18, 8>}, {pipeline_mode = #tpu.pipeline_mode<synchronous>, transform_indices = @transform_1, window_bounds = array<i64: 72, 8>}, {pipeline_mode = #tpu.pipeline_mode<synchronous>, transform_indices = @transform_2, window_bounds = array<i64: 1, 8>}, {transform_indices = @transform_3, window_bounds = array<i64: 128, 8>}, {transform_indices = @transform_4, window_bounds = array<i64: 128, 8>}]} {
    %c8_i32 = arith.constant 8 : i32
    %0 = arith.muli %arg1, %c8_i32 : i32
    %1 = tpu.assume_multiple %0, 8 : i32
    %c0_i32 = arith.constant 0 : i32
    %2 = arith.addi %1, %c0_i32 : i32
    %c0 = arith.constant 0 : index
    %3 = arith.index_cast %2 : i32 to index
    %c0_0 = arith.constant 0 : index
    %c0_1 = arith.constant 0 : index
    %4 = vector.load %arg2[%c0, %3, %c0_0, %c0_1] : memref<1x18x18x8xf32, #tpu.memory_space<vmem>>, vector<1x8x16x8xf32>
    %5 = vector.shape_cast %4 : vector<1x8x16x8xf32> to vector<8x16x8xf32>
    %6 = vector.shape_cast %5 : vector<8x16x8xf32> to vector<128x8xf32>
    %c0_i32_2 = arith.constant 0 : i32
    %7 = arith.addi %1, %c0_i32_2 : i32
    %c0_3 = arith.constant 0 : index
    %8 = arith.index_cast %7 : i32 to index
    %c1 = arith.constant 1 : index
    %c0_4 = arith.constant 0 : index
    %9 = vector.load %arg2[%c0_3, %8, %c1, %c0_4] : memref<1x18x18x8xf32, #tpu.memory_space<vmem>>, vector<1x8x16x8xf32>
    %10 = vector.shape_cast %9 : vector<1x8x16x8xf32> to vector<8x16x8xf32>
    %11 = vector.shape_cast %10 : vector<8x16x8xf32> to vector<128x8xf32>
    %c0_i32_5 = arith.constant 0 : i32
    %12 = arith.addi %1, %c0_i32_5 : i32
    %c0_6 = arith.constant 0 : index
    %13 = arith.index_cast %12 : i32 to index
    %c2 = arith.constant 2 : index
    %c0_7 = arith.constant 0 : index
    %14 = vector.load %arg2[%c0_6, %13, %c2, %c0_7] : memref<1x18x18x8xf32, #tpu.memory_space<vmem>>, vector<1x8x16x8xf32>
    %15 = vector.shape_cast %14 : vector<1x8x16x8xf32> to vector<8x16x8xf32>
    %16 = vector.shape_cast %15 : vector<8x16x8xf32> to vector<128x8xf32>
    %c1_i32 = arith.constant 1 : i32
    %17 = arith.addi %1, %c1_i32 : i32
    %c0_8 = arith.constant 0 : index
    %18 = arith.index_cast %17 : i32 to index
    %c0_9 = arith.constant 0 : index
    %c0_10 = arith.constant 0 : index
    %19 = vector.load %arg2[%c0_8, %18, %c0_9, %c0_10] : memref<1x18x18x8xf32, #tpu.memory_space<vmem>>, vector<1x8x16x8xf32>
    %20 = vector.shape_cast %19 : vector<1x8x16x8xf32> to vector<8x16x8xf32>
    %21 = vector.shape_cast %20 : vector<8x16x8xf32> to vector<128x8xf32>
    %c1_i32_11 = arith.constant 1 : i32
    %22 = arith.addi %1, %c1_i32_11 : i32
    %c0_12 = arith.constant 0 : index
    %23 = arith.index_cast %22 : i32 to index
    %c1_13 = arith.constant 1 : index
    %c0_14 = arith.constant 0 : index
    %24 = vector.load %arg2[%c0_12, %23, %c1_13, %c0_14] : memref<1x18x18x8xf32, #tpu.memory_space<vmem>>, vector<1x8x16x8xf32>
    %25 = vector.shape_cast %24 : vector<1x8x16x8xf32> to vector<8x16x8xf32>
    %26 = vector.shape_cast %25 : vector<8x16x8xf32> to vector<128x8xf32>
    %c1_i32_15 = arith.constant 1 : i32
    %27 = arith.addi %1, %c1_i32_15 : i32
    %c0_16 = arith.constant 0 : index
    %28 = arith.index_cast %27 : i32 to index
    %c2_17 = arith.constant 2 : index
    %c0_18 = arith.constant 0 : index
    %29 = vector.load %arg2[%c0_16, %28, %c2_17, %c0_18] : memref<1x18x18x8xf32, #tpu.memory_space<vmem>>, vector<1x8x16x8xf32>
    %30 = vector.shape_cast %29 : vector<1x8x16x8xf32> to vector<8x16x8xf32>
    %31 = vector.shape_cast %30 : vector<8x16x8xf32> to vector<128x8xf32>
    %c2_i32 = arith.constant 2 : i32
    %32 = arith.addi %1, %c2_i32 : i32
    %c0_19 = arith.constant 0 : index
    %33 = arith.index_cast %32 : i32 to index
    %c0_20 = arith.constant 0 : index
    %c0_21 = arith.constant 0 : index
    %34 = vector.load %arg2[%c0_19, %33, %c0_20, %c0_21] : memref<1x18x18x8xf32, #tpu.memory_space<vmem>>, vector<1x8x16x8xf32>
    %35 = vector.shape_cast %34 : vector<1x8x16x8xf32> to vector<8x16x8xf32>
    %36 = vector.shape_cast %35 : vector<8x16x8xf32> to vector<128x8xf32>
    %c2_i32_22 = arith.constant 2 : i32
    %37 = arith.addi %1, %c2_i32_22 : i32
    %c0_23 = arith.constant 0 : index
    %38 = arith.index_cast %37 : i32 to index
    %c1_24 = arith.constant 1 : index
    %c0_25 = arith.constant 0 : index
    %39 = vector.load %arg2[%c0_23, %38, %c1_24, %c0_25] : memref<1x18x18x8xf32, #tpu.memory_space<vmem>>, vector<1x8x16x8xf32>
    %40 = vector.shape_cast %39 : vector<1x8x16x8xf32> to vector<8x16x8xf32>
    %41 = vector.shape_cast %40 : vector<8x16x8xf32> to vector<128x8xf32>
    %c2_i32_26 = arith.constant 2 : i32
    %42 = arith.addi %1, %c2_i32_26 : i32
    %c0_27 = arith.constant 0 : index
    %43 = arith.index_cast %42 : i32 to index
    %c2_28 = arith.constant 2 : index
    %c0_29 = arith.constant 0 : index
    %44 = vector.load %arg2[%c0_27, %43, %c2_28, %c0_29] : memref<1x18x18x8xf32, #tpu.memory_space<vmem>>, vector<1x8x16x8xf32>
    %45 = vector.shape_cast %44 : vector<1x8x16x8xf32> to vector<8x16x8xf32>
    %46 = vector.shape_cast %45 : vector<8x16x8xf32> to vector<128x8xf32>
    %47 = tpu.concatenate %6, %11, %16, %21, %26, %31, %36, %41, %46 in 1 : vector<128x8xf32>, vector<128x8xf32>, vector<128x8xf32>, vector<128x8xf32>, vector<128x8xf32>, vector<128x8xf32>, vector<128x8xf32>, vector<128x8xf32>, vector<128x8xf32> -> vector<128x72xf32>
    %48 = arith.truncf %47 : vector<128x72xf32> to vector<128x72xbf16>
    %c0_30 = arith.constant 0 : index
    %c0_31 = arith.constant 0 : index
    %49 = vector.load %arg3[%c0_30, %c0_31] : memref<72x8xbf16, #tpu.memory_space<vmem>>, vector<72x8xbf16>
    %cst = arith.constant dense<0.000000e+00> : vector<128x8xf32>
    %50 = tpu.matmul %48, %49, %cst {dimension_numbers = #tpu.dot_dimension_numbers<[1], [0], [0], [1], [0, 0, 1, 1], [], []>} : vector<128x72xbf16>, vector<72x8xbf16>, vector<128x8xf32> -> vector<128x8xf32>
    %c0_32 = arith.constant 0 : index
    %c0_33 = arith.constant 0 : index
    %51 = vector.load %arg4[%c0_32, %c0_33] : memref<1x8xf32, #tpu.memory_space<vmem>>, vector<1x8xf32>
    %52 = vector.broadcast %51 : vector<1x8xf32> to vector<128x8xf32>
    %53 = arith.addf %50, %52 : vector<128x8xf32>
    %c0_34 = arith.constant 0 : index
    %c0_35 = arith.constant 0 : index
    %54 = vector.load %arg5[%c0_34, %c0_35] : memref<128x8xf32, #tpu.memory_space<vmem>>, vector<128x8xf32>
    tpu.vector_store %arg5[%c0_34, %c0_35], %53 {strides = array<i32>} : memref<128x8xf32, #tpu.memory_space<vmem>>, vector<128x8xf32>,
    %cst_36 = arith.constant 0.000000e+00 : f32
    %55 = vector.broadcast %cst_36 : f32 to vector<128x8xf32>
    %56 = arith.maximumf %53, %55 : vector<128x8xf32>
    %c0_37 = arith.constant 0 : index
    %c0_38 = arith.constant 0 : index
    %57 = vector.load %arg6[%c0_37, %c0_38] : memref<128x8xf32, #tpu.memory_space<vmem>>, vector<128x8xf32>
    tpu.vector_store %arg6[%c0_37, %c0_38], %56 {strides = array<i32>} : memref<128x8xf32, #tpu.memory_space<vmem>>, vector<128x8xf32>,
    return
  }
  func.func @transform_0(%arg0: i32, %arg1: i32) -> (i32, i32, i32, i32) {
    %c0_i32 = arith.constant 0 : i32
    %c0_i32_0 = arith.constant 0 : i32
    %c0_i32_1 = arith.constant 0 : i32
    %c0_i32_2 = arith.constant 0 : i32
    return %arg0, %c0_i32, %c0_i32_0, %c0_i32_1 : i32, i32, i32, i32
  }
  func.func @transform_1(%arg0: i32, %arg1: i32) -> (i32, i32) {
    %c0_i32 = arith.constant 0 : i32
    %c0_i32_0 = arith.constant 0 : i32
    %c0_i32_1 = arith.constant 0 : i32
    return %c0_i32, %c0_i32_0 : i32, i32
  }
  func.func @transform_2(%arg0: i32, %arg1: i32) -> (i32, i32) {
    %c0_i32 = arith.constant 0 : i32
    %c0_i32_0 = arith.constant 0 : i32
    %c0_i32_1 = arith.constant 0 : i32
    return %c0_i32, %c0_i32_0 : i32, i32
  }
  func.func @transform_3(%arg0: i32, %arg1: i32) -> (i32, i32) {
    %c2_i32 = arith.constant 2 : i32
    %0 = arith.muli %arg0, %c2_i32 : i32
    %1 = arith.addi %0, %arg1 : i32
    %c0_i32 = arith.constant 0 : i32
    %c0_i32_0 = arith.constant 0 : i32
    return %1, %c0_i32 : i32, i32
  }
  func.func @transform_4(%arg0: i32, %arg1: i32) -> (i32, i32) {
    %c2_i32 = arith.constant 2 : i32
    %0 = arith.muli %arg0, %c2_i32 : i32
    %1 = arith.addi %0, %arg1 : i32
    %c0_i32 = arith.constant 0 : i32
    %c0_i32_0 = arith.constant 0 : i32
    return %1, %c0_i32 : i32, i32
  }
}

module attributes {stable_mosaic.version = 11 : i64} {
  func.func @_maxpool2x2_kernel(%arg0: i32, %arg1: i32, %arg2: memref<1x4x2x8x16xf32, #tpu.memory_space<vmem>>, %arg3: memref<1x4x8x8xf32, #tpu.memory_space<vmem>>) attributes {dimension_semantics = [#tpu.dimension_semantics<parallel>, #tpu.dimension_semantics<parallel>], iteration_bounds = array<i64: 2, 2>, scalar_prefetch = 0 : i64, scratch_operands = 0 : i64, tpu.core_type = #tpu.core_type<tc>, window_params = [{transform_indices = @transform_0, window_bounds = array<i64: 1, 4, 2, 8, 16>}, {transform_indices = @transform_1, window_bounds = array<i64: 1, 4, 8, 8>}]} {
    %c0 = arith.constant 0 : index
    %c0_0 = arith.constant 0 : index
    %c0_1 = arith.constant 0 : index
    %c0_2 = arith.constant 0 : index
    %c0_3 = arith.constant 0 : index
    %0 = vector.load %arg2[%c0, %c0_0, %c0_1, %c0_2, %c0_3] : memref<1x4x2x8x16xf32, #tpu.memory_space<vmem>>, vector<1x4x1x8x16xf32>
    %1 = vector.shape_cast %0 : vector<1x4x1x8x16xf32> to vector<4x8x16xf32>
    %c0_4 = arith.constant 0 : index
    %c0_5 = arith.constant 0 : index
    %c1 = arith.constant 1 : index
    %c0_6 = arith.constant 0 : index
    %c0_7 = arith.constant 0 : index
    %2 = vector.load %arg2[%c0_4, %c0_5, %c1, %c0_6, %c0_7] : memref<1x4x2x8x16xf32, #tpu.memory_space<vmem>>, vector<1x4x1x8x16xf32>
    %3 = vector.shape_cast %2 : vector<1x4x1x8x16xf32> to vector<4x8x16xf32>
    %4 = arith.maximumf %1, %3 : vector<4x8x16xf32>
    %5 = vector.extract_strided_slice %4 {offsets = [0, 0, 0], sizes = [4, 8, 8], strides = [1, 1, 1]} : vector<4x8x16xf32> to vector<4x8x8xf32>
    %6 = vector.extract_strided_slice %4 {offsets = [0, 0, 8], sizes = [4, 8, 8], strides = [1, 1, 1]} : vector<4x8x16xf32> to vector<4x8x8xf32>
    %7 = arith.maximumf %5, %6 : vector<4x8x8xf32>
    %c0_8 = arith.constant 0 : index
    %c0_9 = arith.constant 0 : index
    %c0_10 = arith.constant 0 : index
    %c0_11 = arith.constant 0 : index
    %8 = vector.load %arg3[%c0_8, %c0_9, %c0_10, %c0_11] : memref<1x4x8x8xf32, #tpu.memory_space<vmem>>, vector<1x4x8x8xf32>
    %9 = vector.shape_cast %8 : vector<1x4x8x8xf32> to vector<4x8x8xf32>
    %10 = vector.shape_cast %7 : vector<4x8x8xf32> to vector<1x4x8x8xf32>
    tpu.vector_store %arg3[%c0_8, %c0_9, %c0_10, %c0_11], %10 {strides = array<i32>} : memref<1x4x8x8xf32, #tpu.memory_space<vmem>>, vector<1x4x8x8xf32>,
    return
  }
  func.func @transform_0(%arg0: i32, %arg1: i32) -> (i32, i32, i32, i32, i32) {
    %c0_i32 = arith.constant 0 : i32
    %c0_i32_0 = arith.constant 0 : i32
    %c0_i32_1 = arith.constant 0 : i32
    %c0_i32_2 = arith.constant 0 : i32
    return %arg0, %arg1, %c0_i32, %c0_i32_0, %c0_i32_1 : i32, i32, i32, i32, i32
  }
  func.func @transform_1(%arg0: i32, %arg1: i32) -> (i32, i32, i32, i32) {
    %c0_i32 = arith.constant 0 : i32
    %c0_i32_0 = arith.constant 0 : i32
    %c0_i32_1 = arith.constant 0 : i32
    return %arg0, %arg1, %c0_i32, %c0_i32_0 : i32, i32, i32, i32
  }
}

module attributes {stable_mosaic.version = 11 : i64} {
  func.func @_conv3x3_bias_relu_kernel(%arg0: i32, %arg1: i32, %arg2: memref<1x10x10x8xf32, #tpu.memory_space<vmem>>, %arg3: memref<72x16xbf16, #tpu.memory_space<vmem>>, %arg4: memref<1x16xf32, #tpu.memory_space<vmem>>, %arg5: memref<32x16xf32, #tpu.memory_space<vmem>>, %arg6: memref<32x16xf32, #tpu.memory_space<vmem>>) attributes {dimension_semantics = [#tpu.dimension_semantics<parallel>, #tpu.dimension_semantics<parallel>], iteration_bounds = array<i64: 2, 2>, scalar_prefetch = 0 : i64, scratch_operands = 0 : i64, tpu.core_type = #tpu.core_type<tc>, window_params = [{transform_indices = @transform_0, window_bounds = array<i64: 1, 10, 10, 8>}, {pipeline_mode = #tpu.pipeline_mode<synchronous>, transform_indices = @transform_1, window_bounds = array<i64: 72, 16>}, {pipeline_mode = #tpu.pipeline_mode<synchronous>, transform_indices = @transform_2, window_bounds = array<i64: 1, 16>}, {transform_indices = @transform_3, window_bounds = array<i64: 32, 16>}, {transform_indices = @transform_4, window_bounds = array<i64: 32, 16>}]} {
    %c4_i32 = arith.constant 4 : i32
    %0 = arith.muli %arg1, %c4_i32 : i32
    %1 = tpu.assume_multiple %0, 4 : i32
    %c0_i32 = arith.constant 0 : i32
    %2 = arith.addi %1, %c0_i32 : i32
    %c0 = arith.constant 0 : index
    %3 = arith.index_cast %2 : i32 to index
    %c0_0 = arith.constant 0 : index
    %c0_1 = arith.constant 0 : index
    %4 = vector.load %arg2[%c0, %3, %c0_0, %c0_1] : memref<1x10x10x8xf32, #tpu.memory_space<vmem>>, vector<1x4x8x8xf32>
    %5 = vector.shape_cast %4 : vector<1x4x8x8xf32> to vector<4x8x8xf32>
    %6 = vector.shape_cast %5 : vector<4x8x8xf32> to vector<32x8xf32>
    %c0_i32_2 = arith.constant 0 : i32
    %7 = arith.addi %1, %c0_i32_2 : i32
    %c0_3 = arith.constant 0 : index
    %8 = arith.index_cast %7 : i32 to index
    %c1 = arith.constant 1 : index
    %c0_4 = arith.constant 0 : index
    %9 = vector.load %arg2[%c0_3, %8, %c1, %c0_4] : memref<1x10x10x8xf32, #tpu.memory_space<vmem>>, vector<1x4x8x8xf32>
    %10 = vector.shape_cast %9 : vector<1x4x8x8xf32> to vector<4x8x8xf32>
    %11 = vector.shape_cast %10 : vector<4x8x8xf32> to vector<32x8xf32>
    %c0_i32_5 = arith.constant 0 : i32
    %12 = arith.addi %1, %c0_i32_5 : i32
    %c0_6 = arith.constant 0 : index
    %13 = arith.index_cast %12 : i32 to index
    %c2 = arith.constant 2 : index
    %c0_7 = arith.constant 0 : index
    %14 = vector.load %arg2[%c0_6, %13, %c2, %c0_7] : memref<1x10x10x8xf32, #tpu.memory_space<vmem>>, vector<1x4x8x8xf32>
    %15 = vector.shape_cast %14 : vector<1x4x8x8xf32> to vector<4x8x8xf32>
    %16 = vector.shape_cast %15 : vector<4x8x8xf32> to vector<32x8xf32>
    %c1_i32 = arith.constant 1 : i32
    %17 = arith.addi %1, %c1_i32 : i32
    %c0_8 = arith.constant 0 : index
    %18 = arith.index_cast %17 : i32 to index
    %c0_9 = arith.constant 0 : index
    %c0_10 = arith.constant 0 : index
    %19 = vector.load %arg2[%c0_8, %18, %c0_9, %c0_10] : memref<1x10x10x8xf32, #tpu.memory_space<vmem>>, vector<1x4x8x8xf32>
    %20 = vector.shape_cast %19 : vector<1x4x8x8xf32> to vector<4x8x8xf32>
    %21 = vector.shape_cast %20 : vector<4x8x8xf32> to vector<32x8xf32>
    %c1_i32_11 = arith.constant 1 : i32
    %22 = arith.addi %1, %c1_i32_11 : i32
    %c0_12 = arith.constant 0 : index
    %23 = arith.index_cast %22 : i32 to index
    %c1_13 = arith.constant 1 : index
    %c0_14 = arith.constant 0 : index
    %24 = vector.load %arg2[%c0_12, %23, %c1_13, %c0_14] : memref<1x10x10x8xf32, #tpu.memory_space<vmem>>, vector<1x4x8x8xf32>
    %25 = vector.shape_cast %24 : vector<1x4x8x8xf32> to vector<4x8x8xf32>
    %26 = vector.shape_cast %25 : vector<4x8x8xf32> to vector<32x8xf32>
    %c1_i32_15 = arith.constant 1 : i32
    %27 = arith.addi %1, %c1_i32_15 : i32
    %c0_16 = arith.constant 0 : index
    %28 = arith.index_cast %27 : i32 to index
    %c2_17 = arith.constant 2 : index
    %c0_18 = arith.constant 0 : index
    %29 = vector.load %arg2[%c0_16, %28, %c2_17, %c0_18] : memref<1x10x10x8xf32, #tpu.memory_space<vmem>>, vector<1x4x8x8xf32>
    %30 = vector.shape_cast %29 : vector<1x4x8x8xf32> to vector<4x8x8xf32>
    %31 = vector.shape_cast %30 : vector<4x8x8xf32> to vector<32x8xf32>
    %c2_i32 = arith.constant 2 : i32
    %32 = arith.addi %1, %c2_i32 : i32
    %c0_19 = arith.constant 0 : index
    %33 = arith.index_cast %32 : i32 to index
    %c0_20 = arith.constant 0 : index
    %c0_21 = arith.constant 0 : index
    %34 = vector.load %arg2[%c0_19, %33, %c0_20, %c0_21] : memref<1x10x10x8xf32, #tpu.memory_space<vmem>>, vector<1x4x8x8xf32>
    %35 = vector.shape_cast %34 : vector<1x4x8x8xf32> to vector<4x8x8xf32>
    %36 = vector.shape_cast %35 : vector<4x8x8xf32> to vector<32x8xf32>
    %c2_i32_22 = arith.constant 2 : i32
    %37 = arith.addi %1, %c2_i32_22 : i32
    %c0_23 = arith.constant 0 : index
    %38 = arith.index_cast %37 : i32 to index
    %c1_24 = arith.constant 1 : index
    %c0_25 = arith.constant 0 : index
    %39 = vector.load %arg2[%c0_23, %38, %c1_24, %c0_25] : memref<1x10x10x8xf32, #tpu.memory_space<vmem>>, vector<1x4x8x8xf32>
    %40 = vector.shape_cast %39 : vector<1x4x8x8xf32> to vector<4x8x8xf32>
    %41 = vector.shape_cast %40 : vector<4x8x8xf32> to vector<32x8xf32>
    %c2_i32_26 = arith.constant 2 : i32
    %42 = arith.addi %1, %c2_i32_26 : i32
    %c0_27 = arith.constant 0 : index
    %43 = arith.index_cast %42 : i32 to index
    %c2_28 = arith.constant 2 : index
    %c0_29 = arith.constant 0 : index
    %44 = vector.load %arg2[%c0_27, %43, %c2_28, %c0_29] : memref<1x10x10x8xf32, #tpu.memory_space<vmem>>, vector<1x4x8x8xf32>
    %45 = vector.shape_cast %44 : vector<1x4x8x8xf32> to vector<4x8x8xf32>
    %46 = vector.shape_cast %45 : vector<4x8x8xf32> to vector<32x8xf32>
    %47 = tpu.concatenate %6, %11, %16, %21, %26, %31, %36, %41, %46 in 1 : vector<32x8xf32>, vector<32x8xf32>, vector<32x8xf32>, vector<32x8xf32>, vector<32x8xf32>, vector<32x8xf32>, vector<32x8xf32>, vector<32x8xf32>, vector<32x8xf32> -> vector<32x72xf32>
    %48 = arith.truncf %47 : vector<32x72xf32> to vector<32x72xbf16>
    %c0_30 = arith.constant 0 : index
    %c0_31 = arith.constant 0 : index
    %49 = vector.load %arg3[%c0_30, %c0_31] : memref<72x16xbf16, #tpu.memory_space<vmem>>, vector<72x16xbf16>
    %cst = arith.constant dense<0.000000e+00> : vector<32x16xf32>
    %50 = tpu.matmul %48, %49, %cst {dimension_numbers = #tpu.dot_dimension_numbers<[1], [0], [0], [1], [0, 0, 1, 1], [], []>} : vector<32x72xbf16>, vector<72x16xbf16>, vector<32x16xf32> -> vector<32x16xf32>
    %c0_32 = arith.constant 0 : index
    %c0_33 = arith.constant 0 : index
    %51 = vector.load %arg4[%c0_32, %c0_33] : memref<1x16xf32, #tpu.memory_space<vmem>>, vector<1x16xf32>
    %52 = vector.broadcast %51 : vector<1x16xf32> to vector<32x16xf32>
    %53 = arith.addf %50, %52 : vector<32x16xf32>
    %c0_34 = arith.constant 0 : index
    %c0_35 = arith.constant 0 : index
    %54 = vector.load %arg5[%c0_34, %c0_35] : memref<32x16xf32, #tpu.memory_space<vmem>>, vector<32x16xf32>
    tpu.vector_store %arg5[%c0_34, %c0_35], %53 {strides = array<i32>} : memref<32x16xf32, #tpu.memory_space<vmem>>, vector<32x16xf32>,
    %cst_36 = arith.constant 0.000000e+00 : f32
    %55 = vector.broadcast %cst_36 : f32 to vector<32x16xf32>
    %56 = arith.maximumf %53, %55 : vector<32x16xf32>
    %c0_37 = arith.constant 0 : index
    %c0_38 = arith.constant 0 : index
    %57 = vector.load %arg6[%c0_37, %c0_38] : memref<32x16xf32, #tpu.memory_space<vmem>>, vector<32x16xf32>
    tpu.vector_store %arg6[%c0_37, %c0_38], %56 {strides = array<i32>} : memref<32x16xf32, #tpu.memory_space<vmem>>, vector<32x16xf32>,
    return
  }
  func.func @transform_0(%arg0: i32, %arg1: i32) -> (i32, i32, i32, i32) {
    %c0_i32 = arith.constant 0 : i32
    %c0_i32_0 = arith.constant 0 : i32
    %c0_i32_1 = arith.constant 0 : i32
    %c0_i32_2 = arith.constant 0 : i32
    return %arg0, %c0_i32, %c0_i32_0, %c0_i32_1 : i32, i32, i32, i32
  }
  func.func @transform_1(%arg0: i32, %arg1: i32) -> (i32, i32) {
    %c0_i32 = arith.constant 0 : i32
    %c0_i32_0 = arith.constant 0 : i32
    %c0_i32_1 = arith.constant 0 : i32
    return %c0_i32, %c0_i32_0 : i32, i32
  }
  func.func @transform_2(%arg0: i32, %arg1: i32) -> (i32, i32) {
    %c0_i32 = arith.constant 0 : i32
    %c0_i32_0 = arith.constant 0 : i32
    %c0_i32_1 = arith.constant 0 : i32
    return %c0_i32, %c0_i32_0 : i32, i32
  }
  func.func @transform_3(%arg0: i32, %arg1: i32) -> (i32, i32) {
    %c2_i32 = arith.constant 2 : i32
    %0 = arith.muli %arg0, %c2_i32 : i32
    %1 = arith.addi %0, %arg1 : i32
    %c0_i32 = arith.constant 0 : i32
    %c0_i32_0 = arith.constant 0 : i32
    return %1, %c0_i32 : i32, i32
  }
  func.func @transform_4(%arg0: i32, %arg1: i32) -> (i32, i32) {
    %c2_i32 = arith.constant 2 : i32
    %0 = arith.muli %arg0, %c2_i32 : i32
    %1 = arith.addi %0, %arg1 : i32
    %c0_i32 = arith.constant 0 : i32
    %c0_i32_0 = arith.constant 0 : i32
    return %1, %c0_i32 : i32, i32
  }
}

module attributes {stable_mosaic.version = 11 : i64} {
  func.func @_conv3x3_bias_relu_kernel(%arg0: i32, %arg1: i32, %arg2: memref<1x10x10x16xf32, #tpu.memory_space<vmem>>, %arg3: memref<144x16xbf16, #tpu.memory_space<vmem>>, %arg4: memref<1x16xf32, #tpu.memory_space<vmem>>, %arg5: memref<32x16xf32, #tpu.memory_space<vmem>>, %arg6: memref<32x16xf32, #tpu.memory_space<vmem>>) attributes {dimension_semantics = [#tpu.dimension_semantics<parallel>, #tpu.dimension_semantics<parallel>], iteration_bounds = array<i64: 2, 2>, scalar_prefetch = 0 : i64, scratch_operands = 0 : i64, tpu.core_type = #tpu.core_type<tc>, window_params = [{transform_indices = @transform_0, window_bounds = array<i64: 1, 10, 10, 16>}, {pipeline_mode = #tpu.pipeline_mode<synchronous>, transform_indices = @transform_1, window_bounds = array<i64: 144, 16>}, {pipeline_mode = #tpu.pipeline_mode<synchronous>, transform_indices = @transform_2, window_bounds = array<i64: 1, 16>}, {transform_indices = @transform_3, window_bounds = array<i64: 32, 16>}, {transform_indices = @transform_4, window_bounds = array<i64: 32, 16>}]} {
    %c4_i32 = arith.constant 4 : i32
    %0 = arith.muli %arg1, %c4_i32 : i32
    %1 = tpu.assume_multiple %0, 4 : i32
    %c0_i32 = arith.constant 0 : i32
    %2 = arith.addi %1, %c0_i32 : i32
    %c0 = arith.constant 0 : index
    %3 = arith.index_cast %2 : i32 to index
    %c0_0 = arith.constant 0 : index
    %c0_1 = arith.constant 0 : index
    %4 = vector.load %arg2[%c0, %3, %c0_0, %c0_1] : memref<1x10x10x16xf32, #tpu.memory_space<vmem>>, vector<1x4x8x16xf32>
    %5 = vector.shape_cast %4 : vector<1x4x8x16xf32> to vector<4x8x16xf32>
    %6 = vector.shape_cast %5 : vector<4x8x16xf32> to vector<32x16xf32>
    %c0_i32_2 = arith.constant 0 : i32
    %7 = arith.addi %1, %c0_i32_2 : i32
    %c0_3 = arith.constant 0 : index
    %8 = arith.index_cast %7 : i32 to index
    %c1 = arith.constant 1 : index
    %c0_4 = arith.constant 0 : index
    %9 = vector.load %arg2[%c0_3, %8, %c1, %c0_4] : memref<1x10x10x16xf32, #tpu.memory_space<vmem>>, vector<1x4x8x16xf32>
    %10 = vector.shape_cast %9 : vector<1x4x8x16xf32> to vector<4x8x16xf32>
    %11 = vector.shape_cast %10 : vector<4x8x16xf32> to vector<32x16xf32>
    %c0_i32_5 = arith.constant 0 : i32
    %12 = arith.addi %1, %c0_i32_5 : i32
    %c0_6 = arith.constant 0 : index
    %13 = arith.index_cast %12 : i32 to index
    %c2 = arith.constant 2 : index
    %c0_7 = arith.constant 0 : index
    %14 = vector.load %arg2[%c0_6, %13, %c2, %c0_7] : memref<1x10x10x16xf32, #tpu.memory_space<vmem>>, vector<1x4x8x16xf32>
    %15 = vector.shape_cast %14 : vector<1x4x8x16xf32> to vector<4x8x16xf32>
    %16 = vector.shape_cast %15 : vector<4x8x16xf32> to vector<32x16xf32>
    %c1_i32 = arith.constant 1 : i32
    %17 = arith.addi %1, %c1_i32 : i32
    %c0_8 = arith.constant 0 : index
    %18 = arith.index_cast %17 : i32 to index
    %c0_9 = arith.constant 0 : index
    %c0_10 = arith.constant 0 : index
    %19 = vector.load %arg2[%c0_8, %18, %c0_9, %c0_10] : memref<1x10x10x16xf32, #tpu.memory_space<vmem>>, vector<1x4x8x16xf32>
    %20 = vector.shape_cast %19 : vector<1x4x8x16xf32> to vector<4x8x16xf32>
    %21 = vector.shape_cast %20 : vector<4x8x16xf32> to vector<32x16xf32>
    %c1_i32_11 = arith.constant 1 : i32
    %22 = arith.addi %1, %c1_i32_11 : i32
    %c0_12 = arith.constant 0 : index
    %23 = arith.index_cast %22 : i32 to index
    %c1_13 = arith.constant 1 : index
    %c0_14 = arith.constant 0 : index
    %24 = vector.load %arg2[%c0_12, %23, %c1_13, %c0_14] : memref<1x10x10x16xf32, #tpu.memory_space<vmem>>, vector<1x4x8x16xf32>
    %25 = vector.shape_cast %24 : vector<1x4x8x16xf32> to vector<4x8x16xf32>
    %26 = vector.shape_cast %25 : vector<4x8x16xf32> to vector<32x16xf32>
    %c1_i32_15 = arith.constant 1 : i32
    %27 = arith.addi %1, %c1_i32_15 : i32
    %c0_16 = arith.constant 0 : index
    %28 = arith.index_cast %27 : i32 to index
    %c2_17 = arith.constant 2 : index
    %c0_18 = arith.constant 0 : index
    %29 = vector.load %arg2[%c0_16, %28, %c2_17, %c0_18] : memref<1x10x10x16xf32, #tpu.memory_space<vmem>>, vector<1x4x8x16xf32>
    %30 = vector.shape_cast %29 : vector<1x4x8x16xf32> to vector<4x8x16xf32>
    %31 = vector.shape_cast %30 : vector<4x8x16xf32> to vector<32x16xf32>
    %c2_i32 = arith.constant 2 : i32
    %32 = arith.addi %1, %c2_i32 : i32
    %c0_19 = arith.constant 0 : index
    %33 = arith.index_cast %32 : i32 to index
    %c0_20 = arith.constant 0 : index
    %c0_21 = arith.constant 0 : index
    %34 = vector.load %arg2[%c0_19, %33, %c0_20, %c0_21] : memref<1x10x10x16xf32, #tpu.memory_space<vmem>>, vector<1x4x8x16xf32>
    %35 = vector.shape_cast %34 : vector<1x4x8x16xf32> to vector<4x8x16xf32>
    %36 = vector.shape_cast %35 : vector<4x8x16xf32> to vector<32x16xf32>
    %c2_i32_22 = arith.constant 2 : i32
    %37 = arith.addi %1, %c2_i32_22 : i32
    %c0_23 = arith.constant 0 : index
    %38 = arith.index_cast %37 : i32 to index
    %c1_24 = arith.constant 1 : index
    %c0_25 = arith.constant 0 : index
    %39 = vector.load %arg2[%c0_23, %38, %c1_24, %c0_25] : memref<1x10x10x16xf32, #tpu.memory_space<vmem>>, vector<1x4x8x16xf32>
    %40 = vector.shape_cast %39 : vector<1x4x8x16xf32> to vector<4x8x16xf32>
    %41 = vector.shape_cast %40 : vector<4x8x16xf32> to vector<32x16xf32>
    %c2_i32_26 = arith.constant 2 : i32
    %42 = arith.addi %1, %c2_i32_26 : i32
    %c0_27 = arith.constant 0 : index
    %43 = arith.index_cast %42 : i32 to index
    %c2_28 = arith.constant 2 : index
    %c0_29 = arith.constant 0 : index
    %44 = vector.load %arg2[%c0_27, %43, %c2_28, %c0_29] : memref<1x10x10x16xf32, #tpu.memory_space<vmem>>, vector<1x4x8x16xf32>
    %45 = vector.shape_cast %44 : vector<1x4x8x16xf32> to vector<4x8x16xf32>
    %46 = vector.shape_cast %45 : vector<4x8x16xf32> to vector<32x16xf32>
    %47 = tpu.concatenate %6, %11, %16, %21, %26, %31, %36, %41, %46 in 1 : vector<32x16xf32>, vector<32x16xf32>, vector<32x16xf32>, vector<32x16xf32>, vector<32x16xf32>, vector<32x16xf32>, vector<32x16xf32>, vector<32x16xf32>, vector<32x16xf32> -> vector<32x144xf32>
    %48 = arith.truncf %47 : vector<32x144xf32> to vector<32x144xbf16>
    %c0_30 = arith.constant 0 : index
    %c0_31 = arith.constant 0 : index
    %49 = vector.load %arg3[%c0_30, %c0_31] : memref<144x16xbf16, #tpu.memory_space<vmem>>, vector<144x16xbf16>
    %cst = arith.constant dense<0.000000e+00> : vector<32x16xf32>
    %50 = tpu.matmul %48, %49, %cst {dimension_numbers = #tpu.dot_dimension_numbers<[1], [0], [0], [1], [0, 0, 1, 1], [], []>} : vector<32x144xbf16>, vector<144x16xbf16>, vector<32x16xf32> -> vector<32x16xf32>
    %c0_32 = arith.constant 0 : index
    %c0_33 = arith.constant 0 : index
    %51 = vector.load %arg4[%c0_32, %c0_33] : memref<1x16xf32, #tpu.memory_space<vmem>>, vector<1x16xf32>
    %52 = vector.broadcast %51 : vector<1x16xf32> to vector<32x16xf32>
    %53 = arith.addf %50, %52 : vector<32x16xf32>
    %c0_34 = arith.constant 0 : index
    %c0_35 = arith.constant 0 : index
    %54 = vector.load %arg5[%c0_34, %c0_35] : memref<32x16xf32, #tpu.memory_space<vmem>>, vector<32x16xf32>
    tpu.vector_store %arg5[%c0_34, %c0_35], %53 {strides = array<i32>} : memref<32x16xf32, #tpu.memory_space<vmem>>, vector<32x16xf32>,
    %cst_36 = arith.constant 0.000000e+00 : f32
    %55 = vector.broadcast %cst_36 : f32 to vector<32x16xf32>
    %56 = arith.maximumf %53, %55 : vector<32x16xf32>
    %c0_37 = arith.constant 0 : index
    %c0_38 = arith.constant 0 : index
    %57 = vector.load %arg6[%c0_37, %c0_38] : memref<32x16xf32, #tpu.memory_space<vmem>>, vector<32x16xf32>
    tpu.vector_store %arg6[%c0_37, %c0_38], %56 {strides = array<i32>} : memref<32x16xf32, #tpu.memory_space<vmem>>, vector<32x16xf32>,
    return
  }
  func.func @transform_0(%arg0: i32, %arg1: i32) -> (i32, i32, i32, i32) {
    %c0_i32 = arith.constant 0 : i32
    %c0_i32_0 = arith.constant 0 : i32
    %c0_i32_1 = arith.constant 0 : i32
    %c0_i32_2 = arith.constant 0 : i32
    return %arg0, %c0_i32, %c0_i32_0, %c0_i32_1 : i32, i32, i32, i32
  }
  func.func @transform_1(%arg0: i32, %arg1: i32) -> (i32, i32) {
    %c0_i32 = arith.constant 0 : i32
    %c0_i32_0 = arith.constant 0 : i32
    %c0_i32_1 = arith.constant 0 : i32
    return %c0_i32, %c0_i32_0 : i32, i32
  }
  func.func @transform_2(%arg0: i32, %arg1: i32) -> (i32, i32) {
    %c0_i32 = arith.constant 0 : i32
    %c0_i32_0 = arith.constant 0 : i32
    %c0_i32_1 = arith.constant 0 : i32
    return %c0_i32, %c0_i32_0 : i32, i32
  }
  func.func @transform_3(%arg0: i32, %arg1: i32) -> (i32, i32) {
    %c2_i32 = arith.constant 2 : i32
    %0 = arith.muli %arg0, %c2_i32 : i32
    %1 = arith.addi %0, %arg1 : i32
    %c0_i32 = arith.constant 0 : i32
    %c0_i32_0 = arith.constant 0 : i32
    return %1, %c0_i32 : i32, i32
  }
  func.func @transform_4(%arg0: i32, %arg1: i32) -> (i32, i32) {
    %c2_i32 = arith.constant 2 : i32
    %0 = arith.muli %arg0, %c2_i32 : i32
    %1 = arith.addi %0, %arg1 : i32
    %c0_i32 = arith.constant 0 : i32
    %c0_i32_0 = arith.constant 0 : i32
    return %1, %c0_i32 : i32, i32
  }
}

module attributes {stable_mosaic.version = 11 : i64} {
  func.func @_maxpool2x2_kernel(%arg0: i32, %arg1: i32, %arg2: memref<1x2x2x4x32xf32, #tpu.memory_space<vmem>>, %arg3: memref<1x2x4x16xf32, #tpu.memory_space<vmem>>) attributes {dimension_semantics = [#tpu.dimension_semantics<parallel>, #tpu.dimension_semantics<parallel>], iteration_bounds = array<i64: 2, 2>, scalar_prefetch = 0 : i64, scratch_operands = 0 : i64, tpu.core_type = #tpu.core_type<tc>, window_params = [{transform_indices = @transform_0, window_bounds = array<i64: 1, 2, 2, 4, 32>}, {transform_indices = @transform_1, window_bounds = array<i64: 1, 2, 4, 16>}]} {
    %c0 = arith.constant 0 : index
    %c0_0 = arith.constant 0 : index
    %c0_1 = arith.constant 0 : index
    %c0_2 = arith.constant 0 : index
    %c0_3 = arith.constant 0 : index
    %0 = vector.load %arg2[%c0, %c0_0, %c0_1, %c0_2, %c0_3] : memref<1x2x2x4x32xf32, #tpu.memory_space<vmem>>, vector<1x2x1x4x32xf32>
    %1 = vector.shape_cast %0 : vector<1x2x1x4x32xf32> to vector<2x4x32xf32>
    %c0_4 = arith.constant 0 : index
    %c0_5 = arith.constant 0 : index
    %c1 = arith.constant 1 : index
    %c0_6 = arith.constant 0 : index
    %c0_7 = arith.constant 0 : index
    %2 = vector.load %arg2[%c0_4, %c0_5, %c1, %c0_6, %c0_7] : memref<1x2x2x4x32xf32, #tpu.memory_space<vmem>>, vector<1x2x1x4x32xf32>
    %3 = vector.shape_cast %2 : vector<1x2x1x4x32xf32> to vector<2x4x32xf32>
    %4 = arith.maximumf %1, %3 : vector<2x4x32xf32>
    %5 = vector.extract_strided_slice %4 {offsets = [0, 0, 0], sizes = [2, 4, 16], strides = [1, 1, 1]} : vector<2x4x32xf32> to vector<2x4x16xf32>
    %6 = vector.extract_strided_slice %4 {offsets = [0, 0, 16], sizes = [2, 4, 16], strides = [1, 1, 1]} : vector<2x4x32xf32> to vector<2x4x16xf32>
    %7 = arith.maximumf %5, %6 : vector<2x4x16xf32>
    %c0_8 = arith.constant 0 : index
    %c0_9 = arith.constant 0 : index
    %c0_10 = arith.constant 0 : index
    %c0_11 = arith.constant 0 : index
    %8 = vector.load %arg3[%c0_8, %c0_9, %c0_10, %c0_11] : memref<1x2x4x16xf32, #tpu.memory_space<vmem>>, vector<1x2x4x16xf32>
    %9 = vector.shape_cast %8 : vector<1x2x4x16xf32> to vector<2x4x16xf32>
    %10 = vector.shape_cast %7 : vector<2x4x16xf32> to vector<1x2x4x16xf32>
    tpu.vector_store %arg3[%c0_8, %c0_9, %c0_10, %c0_11], %10 {strides = array<i32>} : memref<1x2x4x16xf32, #tpu.memory_space<vmem>>, vector<1x2x4x16xf32>,
    return
  }
  func.func @transform_0(%arg0: i32, %arg1: i32) -> (i32, i32, i32, i32, i32) {
    %c0_i32 = arith.constant 0 : i32
    %c0_i32_0 = arith.constant 0 : i32
    %c0_i32_1 = arith.constant 0 : i32
    %c0_i32_2 = arith.constant 0 : i32
    return %arg0, %arg1, %c0_i32, %c0_i32_0, %c0_i32_1 : i32, i32, i32, i32, i32
  }
  func.func @transform_1(%arg0: i32, %arg1: i32) -> (i32, i32, i32, i32) {
    %c0_i32 = arith.constant 0 : i32
    %c0_i32_0 = arith.constant 0 : i32
    %c0_i32_1 = arith.constant 0 : i32
    return %arg0, %arg1, %c0_i32, %c0_i32_0 : i32, i32, i32, i32
  }
}

</mosaic_0001>

<llo_original>
// kernel: _lambda_.8
$region0: #{_lambda_.8}
  #allocation0 [shape = 'u32[]', space=smem, size = 0x4, offset = 0x4, fixed_abs, tag = 'smem constant byte address 0x4 - core index']
  #allocation1 [shape = 'u32[144,128]{1,0:T(1,128)}', space=vmem, size = 0x12000, scoped, tag = 'internal scratch']
  %s0 = inlined_call_operand.vmem [shape: f32[2,8,2,8,16], index: 0, kind: input, shape index: {}]
  %s1 = inlined_call_operand.vmem [shape: f32[2,8,8,8], index: 1, kind: output, shape index: {}]
  %s2 = sld [smem:[#allocation0]]
  $region37: #{_lambda_.8} parent=0
    _
  %s4 = ssub.s32 1, %s2
  %s5 = scalar_select 0, %s4, %s2
  loop: start=0, step=1, limit=6
  $region2: #{_lambda_.8} parent=0 // loop_pre_header
    _
  $region3: #{_lambda_.8} parent=0 // loop_header
    %s7 = sphi 0, %s11
    %p8 = scmp.ge.s32.totalorder %s7, 6
    %s14 = sphi 0, %s26
    %s15 = sphi 0, %s22
    %s16 = sphi 0, %s14
    %s17 = sphi 0, %s15
    %s18 = sphi 0, %s16
    %s19 = sphi 0, %s17
    %s31 = sphi 0, %s33
    %s34 = sphi 0, %s31
    %s35 = sphi 0, %s34
    %s51 = sphi 0, %s35
    %s59 = sphi 0, %s61
    %s62 = sphi 0, %s59
    %s63 = sphi 0, %s62
    %s79 = sphi 0, %s63
  $region4: #{_lambda_.8} parent=0 // loop_header_branch
    %10 = sbr.rel (%p8) target = $region8
  $region5: #{_lambda_.8} parent=0 // loop_body
    %s12 = ssub.s32 %s7, 1
    %s13 = ssub.s32 %s7, 2
    %s20 = sadd.s32 1, %s15
    %p21 = scmp.ge.s32.totalorder %s20, 2
    %s22 = scalar_select %p21, 0, %s20
    %s23 = sadd.s32 1, %s14
    %s24 = scalar_select %p21, %s23, %s14
    %p25 = scmp.ge.s32.totalorder %s24, 2
    %s26 = scalar_select %p25, 0, %s24
    %s27 = ssub.s32 %s14, %s26
    %s28 = ssub.s32 %s15, %s22
    %s29 = sor.u32 %s27, %s28
    %p30 = scmp.eq.s32.totalorder %s29, 0
    %s32 = sadd.s32 %s31, 1
    %s33 = scalar_select %p30, %s31, %s32
    %p36 = pneg %p30
    %p37 = scmp.eq.s32.totalorder %s7, 3
    %p38 = por %p36, %p37
    %p39 = scmp.ne.s32.totalorder %s31, %s34
    %p40 = scmp.eq.s32.totalorder %s7, 0
    %p41 = por %p39, %p40
    %p42 = scmp.ne.s32.totalorder %s31, %s34
    %p43 = scmp.eq.s32.totalorder %s12, 3
    %p44 = por %p42, %p43
    %p45 = scmp.ne.s32.totalorder %s34, %s35
    %p46 = scmp.eq.s32.totalorder %s12, 0
    %p47 = por %p45, %p46
    %p48 = scmp.ne.s32.totalorder %s34, %s35
    %p49 = scmp.eq.s32.totalorder %s13, 3
    %p50 = por %p48, %p49
    %p52 = scmp.ne.s32.totalorder %s35, %s51
    %p53 = scmp.eq.s32.totalorder %s13, 0
    %p54 = por %p52, %p53
    %s55 = ssub.s32 %s14, %s26
    %s56 = ssub.s32 %s15, %s22
    %s57 = sor.u32 %s55, %s56
    %p58 = scmp.eq.s32.totalorder %s57, 0
    %s60 = sadd.s32 %s59, 1
    %s61 = scalar_select %p58, %s59, %s60
    %p64 = pneg %p58
    %p65 = scmp.eq.s32.totalorder %s7, 3
    %p66 = por %p64, %p65
    %p67 = scmp.ne.s32.totalorder %s59, %s62
    %p68 = scmp.eq.s32.totalorder %s7, 0
    %p69 = por %p67, %p68
    %p70 = scmp.ne.s32.totalorder %s59, %s62
    %p71 = scmp.eq.s32.totalorder %s12, 3
    %p72 = por %p70, %p71
    %p73 = scmp.ne.s32.totalorder %s62, %s63
    %p74 = scmp.eq.s32.totalorder %s12, 0
    %p75 = por %p73, %p74
    %p76 = scmp.ne.s32.totalorder %s62, %s63
    %p77 = scmp.eq.s32.totalorder %s13, 3
    %p78 = por %p76, %p77
    %p80 = scmp.ne.s32.totalorder %s63, %s79
    %p81 = scmp.eq.s32.totalorder %s13, 0
    %p82 = por %p80, %p81
    %p83 = scmp.le.s32.totalorder 1, %s7
    %p84 = scmp.lt.s32.totalorder %s7, 5
    %p85 = pnand %p83, %p84
    %p86 = pneg %p85
    // Predicated region
    $region9: #{_lambda_.8} parent=5 // pred_check
      _
    $region10: #{_lambda_.8} parent=5 // pred_check_branch
      %88 = sbr.rel (%p85) target = $region12
    $region11: #{_lambda_.8} parent=5 // pred_region
      %s89 = ssub.s32 %s7, 1
    $region12: #{_lambda_.8} parent=5 // pred_fallthru
      _
    %p90 = scmp.lt.s32.totalorder %s7, 4
    // Predicated region
    $region13: #{_lambda_.8} parent=5 // pred_check
      %p91 = pneg %p90
    $region14: #{_lambda_.8} parent=5 // pred_check_branch
      %93 = sbr.rel (%p91) target = $region16
    $region15: #{_lambda_.8} parent=5 // pred_region
      // Predicated region
      $region17: #{_lambda_.8} parent=15 // pred_check
        %p94 = pneg %p41
      $region18: #{_lambda_.8} parent=15 // pred_check_branch
        %96 = sbr.rel (%p94) target = $region20
      $region19: #{_lambda_.8} parent=15 // pred_region
        %s97 = smul.u32 4, %s15
        %p98 = scmp.lt.s32.totalorder %s14, 1
        %s99 = scalar_select %p98, %s14, 1
        %p100 = scmp.lt.s32.totalorder %s97, 7
        %s101 = scalar_select %p100, %s97, 7
        %s102 = smul.addr %s101, 2
        %s103 = smul.addr %s99, 16
        %s104 = sadd.s32 %s102, %s103
        %s105 = smul.addr %s104, 8
        %s106 = scalar_lea.vmem %s0, %s105
        %s107 = smul.u32 4, %s15
      $region20: #{_lambda_.8} parent=15 // pred_fallthru
        _
    $region16: #{_lambda_.8} parent=5 // pred_fallthru
      _
    %p108 = scmp.le.s32.totalorder 1, %s7
    %p109 = scmp.lt.s32.totalorder %s7, 5
    %p110 = pnand %p108, %p109
    %p111 = pneg %p110
    // Predicated region
    $region21: #{_lambda_.8} parent=5 // pred_check
      _
    $region22: #{_lambda_.8} parent=5 // pred_check_branch
      %113 = sbr.rel (%p110) target = $region24
    $region23: #{_lambda_.8} parent=5 // pred_region
      %s114 = ssub.s32 %s7, 1
      %s115 = smul.u32 4, %s17
      %p116 = scmp.lt.s32.totalorder %s16, 1
      %s117 = scalar_select %p116, %s16, 1
      %p118 = scmp.lt.s32.totalorder %s115, 7
      %s119 = scalar_select %p118, %s115, 7
      %s120 = smul.addr %s119, 2
      %s121 = smul.addr %s117, 16
      %s122 = sadd.s32 %s120, %s121
      %s123 = smul.addr %s122, 8
      %s124 = scalar_lea.vmem %s0, %s123
      %p125 = pneg %p47
      %p126 = pneg %p44
      %p127 = pneg %p75
      %p128 = pneg %p72
      %s129 = smul.u32 4, %s17
      %p130 = scmp.lt.s32.totalorder %s16, 1
      %s131 = scalar_select %p130, %s16, 1
      %p132 = scmp.lt.s32.totalorder %s129, 7
      %s133 = scalar_select %p132, %s129, 7
      %s134 = smul.addr %s131, 8
      %s135 = sadd.s32 %s133, %s134
      %s136 = smul.addr %s135, 8
      %s137 = scalar_lea.vmem %s1, %s136
      %s138 = smul.u32 4, %s17
      %p139 = scmp.lt.s32.totalorder %s16, 1
      %s140 = scalar_select %p139, %s16, 1
      %p141 = scmp.lt.s32.totalorder %s138, 7
      %s142 = scalar_select %p141, %s138, 7
      %s143 = smul.addr %s142, 2
      %s144 = smul.addr %s140, 16
      %s145 = sadd.s32 %s143, %s144
      %s146 = smul.addr %s145, 8
      %s147 = scalar_lea.vmem %s0, %s146
      %s148 = smul.u32 4, %s17
      %s149 = smul.u32 4, %s17
      %p150 = scmp.lt.s32.totalorder %s16, 1
      %s151 = scalar_select %p150, %s16, 1
      %p152 = scmp.lt.s32.totalorder %s149, 7
      %s153 = scalar_select %p152, %s149, 7
      %s154 = smul.addr %s151, 8
      %s155 = sadd.s32 %s153, %s154
      %s156 = smul.addr %s155, 8
      %s157 = scalar_lea.vmem %s1, %s156
      %s158 = smul.u32 4, %s17
      %v159 = vld [vmem:[%s147] sm:$0xff]
      %v160 = vld [vmem:[%s147 + $0x10] sm:$0xff]
      %v161 = vld [vmem:[%s147 + $0x20] sm:$0xff]
      %v162 = vld [vmem:[%s147 + $0x30] sm:$0xff]
      %s163 = scalar_lea.vmem %s147, 8
      %v164 = vld [vmem:[%s163] sm:$0xff]
      %v165 = vld [vmem:[%s163 + $0x10] sm:$0xff]
      %v166 = vld [vmem:[%s163 + $0x20] sm:$0xff]
      %v167 = vld [vmem:[%s163 + $0x30] sm:$0xff]
      %v168 = vmax.f32 %v159, %v164
      %v169 = vmax.f32 %v160, %v165
      %v170 = vmax.f32 %v161, %v166
      %v171 = vmax.f32 %v162, %v167
      %176 = vrot.lane.b32.xlu0 %v168, 120
      %v177 = vpop.permute.xlu0 %176
      %178 = vrot.lane.b32.xlu0 %v169, 120
      %v179 = vpop.permute.xlu0 %178
      %180 = vrot.lane.b32.xlu0 %v170, 120
      %v181 = vpop.permute.xlu0 %180
      %182 = vrot.lane.b32.xlu0 %v171, 120
      %v183 = vpop.permute.xlu0 %182
      %v188 = vmax.f32 %v168, %v177
      %v189 = vmax.f32 %v169, %v179
      %v190 = vmax.f32 %v170, %v181
      %v191 = vmax.f32 %v171, %v183
      %vm192 = vcmask 64512
      %193 = vst.msk [vmem:[%s157] sm:$0xff] %vm192, %v188
      %194 = vst.msk [vmem:[%s157 + $0x8] sm:$0xff] %vm192, %v189
      %195 = vst.msk [vmem:[%s157 + $0x10] sm:$0xff] %vm192, %v190
      %196 = vst.msk [vmem:[%s157 + $0x18] sm:$0xff] %vm192, %v191
      %s197 = smul.u32 4, %s17
      %p198 = scmp.lt.s32.totalorder %s16, 1
      %s199 = scalar_select %p198, %s16, 1
      %p200 = scmp.lt.s32.totalorder %s197, 7
      %s201 = scalar_select %p200, %s197, 7
      %s202 = smul.addr %s199, 8
      %s203 = sadd.s32 %s201, %s202
      %s204 = smul.addr %s203, 8
      %s205 = scalar_lea.vmem %s1, %s204
      // Predicated region
      $region25: #{_lambda_.8} parent=23 // pred_check
        %p206 = pneg %p72
      $region26: #{_lambda_.8} parent=23 // pred_check_branch
        %208 = sbr.rel (%p206) target = $region28
      $region27: #{_lambda_.8} parent=23 // pred_region
        %s209 = smul.u32 4, %s17
      $region28: #{_lambda_.8} parent=23 // pred_fallthru
        _
    $region24: #{_lambda_.8} parent=5 // pred_fallthru
      _
    %p210 = scmp.le.s32.totalorder 2, %s7
    // Predicated region
    $region29: #{_lambda_.8} parent=5 // pred_check
      %p211 = pneg %p210
    $region30: #{_lambda_.8} parent=5 // pred_check_branch
      %213 = sbr.rel (%p211) target = $region32
    $region31: #{_lambda_.8} parent=5 // pred_region
      %s214 = ssub.s32 %s7, 2
      // Predicated region
      $region33: #{_lambda_.8} parent=31 // pred_check
        %p215 = pneg %p78
      $region34: #{_lambda_.8} parent=31 // pred_check_branch
        %217 = sbr.rel (%p215) target = $region36
      $region35: #{_lambda_.8} parent=31 // pred_region
        %s218 = smul.u32 4, %s19
        %p219 = scmp.lt.s32.totalorder %s18, 1
        %s220 = scalar_select %p219, %s18, 1
        %p221 = scmp.lt.s32.totalorder %s218, 7
        %s222 = scalar_select %p221, %s218, 7
        %s223 = smul.addr %s220, 8
        %s224 = sadd.s32 %s222, %s223
        %s225 = smul.addr %s224, 8
        %s226 = scalar_lea.vmem %s1, %s225
      $region36: #{_lambda_.8} parent=31 // pred_fallthru
        _
    $region32: #{_lambda_.8} parent=5 // pred_fallthru
      _
  $region6: #{_lambda_.8} parent=0 // loop_footer
    %s11 = sadd.s32 1, %s7
  $region7: #{_lambda_.8} parent=0 // loop_footer_branch
    %6 = sbr.rel target = $region3
  $region8: #{_lambda_.8} parent=0 // loop_exit
    _

// kernel: _lambda_.6
$region0: #{_lambda_.6}
  #allocation0 [shape = 'u32[]', space=smem, size = 0x4, offset = 0x4, fixed_abs, tag = 'smem constant byte address 0x4 - core index']
  #allocation1 [shape = 'u32[144,128]{1,0:T(1,128)}', space=vmem, size = 0x12000, scoped, tag = 'internal scratch']
  %s0 = inlined_call_operand.vmem [shape: f32[2,18,18,4], index: 0, kind: input, shape index: {}]
  %s1 = inlined_call_operand.vmem [shape: bf16[36,8], index: 1, kind: input, shape index: {}]
  %s2 = inlined_call_operand.vmem [shape: f32[1,8], index: 2, kind: input, shape index: {}]
  %s3 = inlined_call_operand.vmem [shape: f32[512,8], index: 3, kind: output, shape index: {0}]
  %s4 = inlined_call_operand.vmem [shape: f32[512,8], index: 4, kind: output, shape index: {1}]
  %5 = xla_tuple %s3, %s4
  %s6 = sld [smem:[#allocation0]]
  $region53: #{_lambda_.6} parent=0
    _
  %s8 = ssub.s32 1, %s6
  %s9 = scalar_select 0, %s8, %s6
  loop: start=0, step=1, limit=6
  $region2: #{_lambda_.6} parent=0 // loop_pre_header
    _
  $region3: #{_lambda_.6} parent=0 // loop_header
    %s11 = sphi 0, %s15
    %p12 = scmp.ge.s32.totalorder %s11, 6
    %s18 = sphi 0, %s30
    %s19 = sphi 0, %s26
    %s20 = sphi 0, %s18
    %s21 = sphi 0, %s19
    %s22 = sphi 0, %s20
    %s23 = sphi 0, %s21
    %s33 = sphi 0, %s35
    %s36 = sphi 0, %s33
    %s37 = sphi 0, %s36
    %s53 = sphi 0, %s37
    %s57 = sphi 0, %s57
    %s59 = sphi 0, %s57
    %s60 = sphi 0, %s59
    %s74 = sphi 0, %s60
    %s78 = sphi 0, %s78
    %s80 = sphi 0, %s78
    %s81 = sphi 0, %s80
    %s95 = sphi 0, %s81
    %s105 = sphi 0, %s107
    %s108 = sphi 0, %s105
    %s109 = sphi 0, %s108
    %s125 = sphi 0, %s109
    %s135 = sphi 0, %s137
    %s138 = sphi 0, %s135
    %s139 = sphi 0, %s138
    %s155 = sphi 0, %s139
  $region4: #{_lambda_.6} parent=0 // loop_header_branch
    %14 = sbr.rel (%p12) target = $region8
  $region5: #{_lambda_.6} parent=0 // loop_body
    %s16 = ssub.s32 %s11, 1
    %s17 = ssub.s32 %s11, 2
    %s24 = sadd.s32 1, %s19
    %p25 = scmp.ge.s32.totalorder %s24, 2
    %s26 = scalar_select %p25, 0, %s24
    %s27 = sadd.s32 1, %s18
    %s28 = scalar_select %p25, %s27, %s18
    %p29 = scmp.ge.s32.totalorder %s28, 2
    %s30 = scalar_select %p29, 0, %s28
    %s31 = ssub.s32 %s18, %s30
    %p32 = scmp.eq.s32.totalorder %s31, 0
    %s34 = sadd.s32 %s33, 1
    %s35 = scalar_select %p32, %s33, %s34
    %p38 = pneg %p32
    %p39 = scmp.eq.s32.totalorder %s11, 3
    %p40 = por %p38, %p39
    %p41 = scmp.ne.s32.totalorder %s33, %s36
    %p42 = scmp.eq.s32.totalorder %s11, 0
    %p43 = por %p41, %p42
    %p44 = scmp.ne.s32.totalorder %s33, %s36
    %p45 = scmp.eq.s32.totalorder %s16, 3
    %p46 = por %p44, %p45
    %p47 = scmp.ne.s32.totalorder %s36, %s37
    %p48 = scmp.eq.s32.totalorder %s16, 0
    %p49 = por %p47, %p48
    %p50 = scmp.ne.s32.totalorder %s36, %s37
    %p51 = scmp.eq.s32.totalorder %s17, 3
    %p52 = por %p50, %p51
    %p54 = scmp.ne.s32.totalorder %s37, %s53
    %p55 = scmp.eq.s32.totalorder %s17, 0
    %p56 = por %p54, %p55
    %s58 = sadd.s32 %s57, 1
    %p61 = scmp.eq.s32.totalorder %s11, 3
    %p62 = scmp.ne.s32.totalorder %s57, %s59
    %p63 = scmp.eq.s32.totalorder %s11, 0
    %p64 = por %p62, %p63
    %p65 = scmp.ne.s32.totalorder %s57, %s59
    %p66 = scmp.eq.s32.totalorder %s16, 3
    %p67 = por %p65, %p66
    %p68 = scmp.ne.s32.totalorder %s59, %s60
    %p69 = scmp.eq.s32.totalorder %s16, 0
    %p70 = por %p68, %p69
    %p71 = scmp.ne.s32.totalorder %s59, %s60
    %p72 = scmp.eq.s32.totalorder %s17, 3
    %p73 = por %p71, %p72
    %p75 = scmp.ne.s32.totalorder %s60, %s74
    %p76 = scmp.eq.s32.totalorder %s17, 0
    %p77 = por %p75, %p76
    %s79 = sadd.s32 %s78, 1
    %p82 = scmp.eq.s32.totalorder %s11, 3
    %p83 = scmp.ne.s32.totalorder %s78, %s80
    %p84 = scmp.eq.s32.totalorder %s11, 0
    %p85 = por %p83, %p84
    %p86 = scmp.ne.s32.totalorder %s78, %s80
    %p87 = scmp.eq.s32.totalorder %s16, 3
    %p88 = por %p86, %p87
    %p89 = scmp.ne.s32.totalorder %s80, %s81
    %p90 = scmp.eq.s32.totalorder %s16, 0
    %p91 = por %p89, %p90
    %p92 = scmp.ne.s32.totalorder %s80, %s81
    %p93 = scmp.eq.s32.totalorder %s17, 3
    %p94 = por %p92, %p93
    %p96 = scmp.ne.s32.totalorder %s81, %s95
    %p97 = scmp.eq.s32.totalorder %s17, 0
    %p98 = por %p96, %p97
    %s99 = smul.u32 %s18, 2
    %s100 = sadd.s32 %s99, %s19
    %s101 = smul.u32 %s30, 2
    %s102 = sadd.s32 %s101, %s26
    %s103 = ssub.s32 %s100, %s102
    %p104 = scmp.eq.s32.totalorder %s103, 0
    %s106 = sadd.s32 %s105, 1
    %s107 = scalar_select %p104, %s105, %s106
    %p110 = pneg %p104
    %p111 = scmp.eq.s32.totalorder %s11, 3
    %p112 = por %p110, %p111
    %p113 = scmp.ne.s32.totalorder %s105, %s108
    %p114 = scmp.eq.s32.totalorder %s11, 0
    %p115 = por %p113, %p114
    %p116 = scmp.ne.s32.totalorder %s105, %s108
    %p117 = scmp.eq.s32.totalorder %s16, 3
    %p118 = por %p116, %p117
    %p119 = scmp.ne.s32.totalorder %s108, %s109
    %p120 = scmp.eq.s32.totalorder %s16, 0
    %p121 = por %p119, %p120
    %p122 = scmp.ne.s32.totalorder %s108, %s109
    %p123 = scmp.eq.s32.totalorder %s17, 3
    %p124 = por %p122, %p123
    %p126 = scmp.ne.s32.totalorder %s109, %s125
    %p127 = scmp.eq.s32.totalorder %s17, 0
    %p128 = por %p126, %p127
    %s129 = smul.u32 %s18, 2
    %s130 = sadd.s32 %s129, %s19
    %s131 = smul.u32 %s30, 2
    %s132 = sadd.s32 %s131, %s26
    %s133 = ssub.s32 %s130, %s132
    %p134 = scmp.eq.s32.totalorder %s133, 0
    %s136 = sadd.s32 %s135, 1
    %s137 = scalar_select %p134, %s135, %s136
    %p140 = pneg %p134
    %p141 = scmp.eq.s32.totalorder %s11, 3
    %p142 = por %p140, %p141
    %p143 = scmp.ne.s32.totalorder %s135, %s138
    %p144 = scmp.eq.s32.totalorder %s11, 0
    %p145 = por %p143, %p144
    %p146 = scmp.ne.s32.totalorder %s135, %s138
    %p147 = scmp.eq.s32.totalorder %s16, 3
    %p148 = por %p146, %p147
    %p149 = scmp.ne.s32.totalorder %s138, %s139
    %p150 = scmp.eq.s32.totalorder %s16, 0
    %p151 = por %p149, %p150
    %p152 = scmp.ne.s32.totalorder %s138, %s139
    %p153 = scmp.eq.s32.totalorder %s17, 3
    %p154 = por %p152, %p153
    %p156 = scmp.ne.s32.totalorder %s139, %s155
    %p157 = scmp.eq.s32.totalorder %s17, 0
    %p158 = por %p156, %p157
    %p159 = scmp.le.s32.totalorder 1, %s11
    %p160 = scmp.lt.s32.totalorder %s11, 5
    %p161 = pnand %p159, %p160
    %p162 = pneg %p161
    // Predicated region
    $region9: #{_lambda_.6} parent=5 // pred_check
      _
    $region10: #{_lambda_.6} parent=5 // pred_check_branch
      %164 = sbr.rel (%p161) target = $region12
    $region11: #{_lambda_.6} parent=5 // pred_region
      %s165 = ssub.s32 %s11, 1
      // Predicated region
      $region13: #{_lambda_.6} parent=11 // pred_check
        %p166 = pneg %p70
      $region14: #{_lambda_.6} parent=11 // pred_check_branch
        %168 = sbr.rel (%p166) target = $region16
      $region15: #{_lambda_.6} parent=11 // pred_region
        _
      $region16: #{_lambda_.6} parent=11 // pred_fallthru
        _
      // Predicated region
      $region17: #{_lambda_.6} parent=11 // pred_check
        %p169 = pneg %p91
      $region18: #{_lambda_.6} parent=11 // pred_check_branch
        %171 = sbr.rel (%p169) target = $region20
      $region19: #{_lambda_.6} parent=11 // pred_region
        _
      $region20: #{_lambda_.6} parent=11 // pred_fallthru
        _
    $region12: #{_lambda_.6} parent=5 // pred_fallthru
      _
    %p172 = scmp.lt.s32.totalorder %s11, 4
    // Predicated region
    $region21: #{_lambda_.6} parent=5 // pred_check
      %p173 = pneg %p172
    $region22: #{_lambda_.6} parent=5 // pred_check_branch
      %175 = sbr.rel (%p173) target = $region24
    $region23: #{_lambda_.6} parent=5 // pred_region
      // Predicated region
      $region25: #{_lambda_.6} parent=23 // pred_check
        %p176 = pneg %p43
      $region26: #{_lambda_.6} parent=23 // pred_check_branch
        %178 = sbr.rel (%p176) target = $region28
      $region27: #{_lambda_.6} parent=23 // pred_region
        %p179 = scmp.lt.s32.totalorder %s18, 1
        %s180 = scalar_select %p179, %s18, 1
        %s181 = smul.addr %s180, 54
        %s182 = smul.addr %s181, 8
        %s183 = scalar_lea.vmem %s0, %s182
      $region28: #{_lambda_.6} parent=23 // pred_fallthru
        _
    $region24: #{_lambda_.6} parent=5 // pred_fallthru
      _
    %p184 = scmp.le.s32.totalorder 1, %s11
    %p185 = scmp.lt.s32.totalorder %s11, 5
    %p186 = pnand %p184, %p185
    %p187 = pneg %p186
    // Predicated region
    $region29: #{_lambda_.6} parent=5 // pred_check
      _
    $region30: #{_lambda_.6} parent=5 // pred_check_branch
      %189 = sbr.rel (%p186) target = $region32
    $region31: #{_lambda_.6} parent=5 // pred_region
      %s190 = ssub.s32 %s11, 1
      %p191 = scmp.lt.s32.totalorder %s20, 1
      %s192 = scalar_select %p191, %s20, 1
      %s193 = smul.addr %s192, 54
      %s194 = smul.addr %s193, 8
      %s195 = scalar_lea.vmem %s0, %s194
      %p196 = pneg %p49
      %p197 = pneg %p46
      %p198 = pneg %p70
      %p199 = pneg %p67
      %p200 = pneg %p91
      %p201 = pneg %p88
      %p202 = pneg %p121
      %p203 = pneg %p118
      %s204 = smul.u32 %s20, 2
      %s205 = sadd.s32 %s204, %s21
      %s206 = smul.u32 16, %s205
      %p207 = scmp.lt.s32.totalorder %s206, 63
      %s208 = scalar_select %p207, %s206, 63
      %s209 = smul.addr %s208, 8
      %s210 = scalar_lea.vmem %s3, %s209
      %p211 = pneg %p151
      %p212 = pneg %p148
      %s213 = smul.u32 %s20, 2
      %s214 = sadd.s32 %s213, %s21
      %s215 = smul.u32 16, %s214
      %p216 = scmp.lt.s32.totalorder %s215, 63
      %s217 = scalar_select %p216, %s215, 63
      %s218 = smul.addr %s217, 8
      %s219 = scalar_lea.vmem %s4, %s218
      %p220 = scmp.lt.s32.totalorder %s20, 1
      %s221 = scalar_select %p220, %s20, 1
      %s222 = smul.addr %s221, 54
      %s223 = smul.addr %s222, 8
      %s224 = scalar_lea.vmem %s0, %s223
      %s225 = smul.u32 %s20, 2
      %s226 = sadd.s32 %s225, %s21
      %s227 = smul.u32 16, %s226
      %p228 = scmp.lt.s32.totalorder %s227, 63
      %s229 = scalar_select %p228, %s227, 63
      %s230 = smul.addr %s229, 8
      %s231 = scalar_lea.vmem %s3, %s230
      %s232 = smul.u32 %s20, 2
      %s233 = sadd.s32 %s232, %s21
      %s234 = smul.u32 16, %s233
      %s235 = smul.u32 %s20, 2
      %s236 = sadd.s32 %s235, %s21
      %s237 = smul.u32 16, %s236
      %p238 = scmp.lt.s32.totalorder %s237, 63
      %s239 = scalar_select %p238, %s237, 63
      %s240 = smul.addr %s239, 8
      %s241 = scalar_lea.vmem %s4, %s240
      %s242 = smul.u32 %s20, 2
      %s243 = sadd.s32 %s242, %s21
      %s244 = smul.u32 16, %s243
      %s246 = smul.u32 %s21, 8
      %s247 = smul.u32 %s246, 24
      %s248 = scalar_lea.vmem %s224, %s247
      %v249 = vld [vmem:[%s248] sm:$0xff]
      %v250 = vld [vmem:[%s248 + $0x8] sm:$0xff]
      %v251 = vld [vmem:[%s248 + $0x18] sm:$0xff]
      %v252 = vld [vmem:[%s248 + $0x20] sm:$0xff]
      %v253 = vld [vmem:[%s248 + $0x30] sm:$0xff]
      %v254 = vld [vmem:[%s248 + $0x38] sm:$0xff]
      %v255 = vld [vmem:[%s248 + $0x48] sm:$0xff]
      %v256 = vld [vmem:[%s248 + $0x50] sm:$0xff]
      %v257 = vld [vmem:[%s248 + $0x60] sm:$0xff]
      %v258 = vld [vmem:[%s248 + $0x68] sm:$0xff]
      %v259 = vld [vmem:[%s248 + $0x78] sm:$0xff]
      %v260 = vld [vmem:[%s248 + $0x80] sm:$0xff]
      %v261 = vld [vmem:[%s248 + $0x90] sm:$0xff]
      %v262 = vld [vmem:[%s248 + $0x98] sm:$0xff]
      %v263 = vld [vmem:[%s248 + $0xa8] sm:$0xff]
      %v264 = vld [vmem:[%s248 + $0xb0] sm:$0xff]
      %v265 = vld [vmem:[%s248 + $0x1] sm:$0xff]
      %v266 = vld [vmem:[%s248 + $0x9] sm:$0xff]
      %v267 = vld [vmem:[%s248 + $0x19] sm:$0xff]
      %v268 = vld [vmem:[%s248 + $0x21] sm:$0xff]
      %v269 = vld [vmem:[%s248 + $0x31] sm:$0xff]
      %v270 = vld [vmem:[%s248 + $0x39] sm:$0xff]
      %v271 = vld [vmem:[%s248 + $0x49] sm:$0xff]
      %v272 = vld [vmem:[%s248 + $0x51] sm:$0xff]
      %v273 = vld [vmem:[%s248 + $0x61] sm:$0xff]
      %v274 = vld [vmem:[%s248 + $0x69] sm:$0xff]
      %v275 = vld [vmem:[%s248 + $0x79] sm:$0xff]
      %v276 = vld [vmem:[%s248 + $0x81] sm:$0xff]
      %v277 = vld [vmem:[%s248 + $0x91] sm:$0xff]
      %v278 = vld [vmem:[%s248 + $0x99] sm:$0xff]
      %v279 = vld [vmem:[%s248 + $0xa9] sm:$0xff]
      %v280 = vld [vmem:[%s248 + $0xb1] sm:$0xff]
      %v281 = vld [vmem:[%s248 + $0x2] sm:$0xff]
      %v282 = vld [vmem:[%s248 + $0xa] sm:$0xff]
      %v283 = vld [vmem:[%s248 + $0x1a] sm:$0xff]
      %v284 = vld [vmem:[%s248 + $0x22] sm:$0xff]
      %v285 = vld [vmem:[%s248 + $0x32] sm:$0xff]
      %v286 = vld [vmem:[%s248 + $0x3a] sm:$0xff]
      %v287 = vld [vmem:[%s248 + $0x4a] sm:$0xff]
      %v288 = vld [vmem:[%s248 + $0x52] sm:$0xff]
      %v289 = vld [vmem:[%s248 + $0x62] sm:$0xff]
      %v290 = vld [vmem:[%s248 + $0x6a] sm:$0xff]
      %v291 = vld [vmem:[%s248 + $0x7a] sm:$0xff]
      %v292 = vld [vmem:[%s248 + $0x82] sm:$0xff]
      %v293 = vld [vmem:[%s248 + $0x92] sm:$0xff]
      %v294 = vld [vmem:[%s248 + $0x9a] sm:$0xff]
      %v295 = vld [vmem:[%s248 + $0xaa] sm:$0xff]
      %v296 = vld [vmem:[%s248 + $0xb2] sm:$0xff]
      %s297 = sadd.s32 %s246, 1
      %s298 = smul.u32 %s297, 24
      %s299 = scalar_lea.vmem %s224, %s298
      %v300 = vld [vmem:[%s299] sm:$0xff]
      %v301 = vld [vmem:[%s299 + $0x8] sm:$0xff]
      %v302 = vld [vmem:[%s299 + $0x18] sm:$0xff]
      %v303 = vld [vmem:[%s299 + $0x20] sm:$0xff]
      %v304 = vld [vmem:[%s299 + $0x30] sm:$0xff]
      %v305 = vld [vmem:[%s299 + $0x38] sm:$0xff]
      %v306 = vld [vmem:[%s299 + $0x48] sm:$0xff]
      %v307 = vld [vmem:[%s299 + $0x50] sm:$0xff]
      %v308 = vld [vmem:[%s299 + $0x60] sm:$0xff]
      %v309 = vld [vmem:[%s299 + $0x68] sm:$0xff]
      %v310 = vld [vmem:[%s299 + $0x78] sm:$0xff]
      %v311 = vld [vmem:[%s299 + $0x80] sm:$0xff]
      %v312 = vld [vmem:[%s299 + $0x90] sm:$0xff]
      %v313 = vld [vmem:[%s299 + $0x98] sm:$0xff]
      %v314 = vld [vmem:[%s299 + $0xa8] sm:$0xff]
      %v315 = vld [vmem:[%s299 + $0xb0] sm:$0xff]
      %v316 = vld [vmem:[%s299 + $0x1] sm:$0xff]
      %v317 = vld [vmem:[%s299 + $0x9] sm:$0xff]
      %v318 = vld [vmem:[%s299 + $0x19] sm:$0xff]
      %v319 = vld [vmem:[%s299 + $0x21] sm:$0xff]
      %v320 = vld [vmem:[%s299 + $0x31] sm:$0xff]
      %v321 = vld [vmem:[%s299 + $0x39] sm:$0xff]
      %v322 = vld [vmem:[%s299 + $0x49] sm:$0xff]
      %v323 = vld [vmem:[%s299 + $0x51] sm:$0xff]
      %v324 = vld [vmem:[%s299 + $0x61] sm:$0xff]
      %v325 = vld [vmem:[%s299 + $0x69] sm:$0xff]
      %v326 = vld [vmem:[%s299 + $0x79] sm:$0xff]
      %v327 = vld [vmem:[%s299 + $0x81] sm:$0xff]
      %v328 = vld [vmem:[%s299 + $0x91] sm:$0xff]
      %v329 = vld [vmem:[%s299 + $0x99] sm:$0xff]
      %v330 = vld [vmem:[%s299 + $0xa9] sm:$0xff]
      %v331 = vld [vmem:[%s299 + $0xb1] sm:$0xff]
      %v332 = vld [vmem:[%s299 + $0x2] sm:$0xff]
      %v333 = vld [vmem:[%s299 + $0xa] sm:$0xff]
      %v334 = vld [vmem:[%s299 + $0x1a] sm:$0xff]
      %v335 = vld [vmem:[%s299 + $0x22] sm:$0xff]
      %v336 = vld [vmem:[%s299 + $0x32] sm:$0xff]
      %v337 = vld [vmem:[%s299 + $0x3a] sm:$0xff]
      %v338 = vld [vmem:[%s299 + $0x4a] sm:$0xff]
      %v339 = vld [vmem:[%s299 + $0x52] sm:$0xff]
      %v340 = vld [vmem:[%s299 + $0x62] sm:$0xff]
      %v341 = vld [vmem:[%s299 + $0x6a] sm:$0xff]
      %v342 = vld [vmem:[%s299 + $0x7a] sm:$0xff]
      %v343 = vld [vmem:[%s299 + $0x82] sm:$0xff]
      %v344 = vld [vmem:[%s299 + $0x92] sm:$0xff]
      %v345 = vld [vmem:[%s299 + $0x9a] sm:$0xff]
      %v346 = vld [vmem:[%s299 + $0xaa] sm:$0xff]
      %v347 = vld [vmem:[%s299 + $0xb2] sm:$0xff]
      %s348 = sadd.s32 %s246, 2
      %s349 = smul.u32 %s348, 24
      %s350 = scalar_lea.vmem %s224, %s349
      %v351 = vld [vmem:[%s350] sm:$0xff]
      %v352 = vld [vmem:[%s350 + $0x8] sm:$0xff]
      %v353 = vld [vmem:[%s350 + $0x18] sm:$0xff]
      %v354 = vld [vmem:[%s350 + $0x20] sm:$0xff]
      %v355 = vld [vmem:[%s350 + $0x30] sm:$0xff]
      %v356 = vld [vmem:[%s350 + $0x38] sm:$0xff]
      %v357 = vld [vmem:[%s350 + $0x48] sm:$0xff]
      %v358 = vld [vmem:[%s350 + $0x50] sm:$0xff]
      %v359 = vld [vmem:[%s350 + $0x60] sm:$0xff]
      %v360 = vld [vmem:[%s350 + $0x68] sm:$0xff]
      %v361 = vld [vmem:[%s350 + $0x78] sm:$0xff]
      %v362 = vld [vmem:[%s350 + $0x80] sm:$0xff]
      %v363 = vld [vmem:[%s350 + $0x90] sm:$0xff]
      %v364 = vld [vmem:[%s350 + $0x98] sm:$0xff]
      %v365 = vld [vmem:[%s350 + $0xa8] sm:$0xff]
      %v366 = vld [vmem:[%s350 + $0xb0] sm:$0xff]
      %v367 = vld [vmem:[%s350 + $0x1] sm:$0xff]
      %v368 = vld [vmem:[%s350 + $0x9] sm:$0xff]
      %v369 = vld [vmem:[%s350 + $0x19] sm:$0xff]
      %v370 = vld [vmem:[%s350 + $0x21] sm:$0xff]
      %v371 = vld [vmem:[%s350 + $0x31] sm:$0xff]
      %v372 = vld [vmem:[%s350 + $0x39] sm:$0xff]
      %v373 = vld [vmem:[%s350 + $0x49] sm:$0xff]
      %v374 = vld [vmem:[%s350 + $0x51] sm:$0xff]
      %v375 = vld [vmem:[%s350 + $0x61] sm:$0xff]
      %v376 = vld [vmem:[%s350 + $0x69] sm:$0xff]
      %v377 = vld [vmem:[%s350 + $0x79] sm:$0xff]
      %v378 = vld [vmem:[%s350 + $0x81] sm:$0xff]
      %v379 = vld [vmem:[%s350 + $0x91] sm:$0xff]
      %v380 = vld [vmem:[%s350 + $0x99] sm:$0xff]
      %v381 = vld [vmem:[%s350 + $0xa9] sm:$0xff]
      %v382 = vld [vmem:[%s350 + $0xb1] sm:$0xff]
      %v383 = vld [vmem:[%s350 + $0x2] sm:$0xff]
      %v384 = vld [vmem:[%s350 + $0xa] sm:$0xff]
      %v385 = vld [vmem:[%s350 + $0x1a] sm:$0xff]
      %v386 = vld [vmem:[%s350 + $0x22] sm:$0xff]
      %v387 = vld [vmem:[%s350 + $0x32] sm:$0xff]
      %v388 = vld [vmem:[%s350 + $0x3a] sm:$0xff]
      %v389 = vld [vmem:[%s350 + $0x4a] sm:$0xff]
      %v390 = vld [vmem:[%s350 + $0x52] sm:$0xff]
      %v391 = vld [vmem:[%s350 + $0x62] sm:$0xff]
      %v392 = vld [vmem:[%s350 + $0x6a] sm:$0xff]
      %v393 = vld [vmem:[%s350 + $0x7a] sm:$0xff]
      %v394 = vld [vmem:[%s350 + $0x82] sm:$0xff]
      %v395 = vld [vmem:[%s350 + $0x92] sm:$0xff]
      %v396 = vld [vmem:[%s350 + $0x9a] sm:$0xff]
      %v397 = vld [vmem:[%s350 + $0xaa] sm:$0xff]
      %v398 = vld [vmem:[%s350 + $0xb2] sm:$0xff]
      %415 = vrot.lane.b32.xlu0 %v265, 4
      %v416 = vpop.permute.xlu0 %415
      %417 = vrot.lane.b32.xlu0 %v266, 4
      %v418 = vpop.permute.xlu0 %417
      %419 = vrot.lane.b32.xlu0 %v267, 4
      %v420 = vpop.permute.xlu0 %419
      %421 = vrot.lane.b32.xlu0 %v268, 4
      %v422 = vpop.permute.xlu0 %421
      %423 = vrot.lane.b32.xlu0 %v269, 4
      %v424 = vpop.permute.xlu0 %423
      %425 = vrot.lane.b32.xlu0 %v270, 4
      %v426 = vpop.permute.xlu0 %425
      %427 = vrot.lane.b32.xlu0 %v271, 4
      %v428 = vpop.permute.xlu0 %427
      %429 = vrot.lane.b32.xlu0 %v272, 4
      %v430 = vpop.permute.xlu0 %429
      %431 = vrot.lane.b32.xlu0 %v273, 4
      %v432 = vpop.permute.xlu0 %431
      %433 = vrot.lane.b32.xlu0 %v274, 4
      %v434 = vpop.permute.xlu0 %433
      %435 = vrot.lane.b32.xlu0 %v275, 4
      %v436 = vpop.permute.xlu0 %435
      %437 = vrot.lane.b32.xlu0 %v276, 4
      %v438 = vpop.permute.xlu0 %437
      %439 = vrot.lane.b32.xlu0 %v277, 4
      %v440 = vpop.permute.xlu0 %439
      %441 = vrot.lane.b32.xlu0 %v278, 4
      %v442 = vpop.permute.xlu0 %441
      %443 = vrot.lane.b32.xlu0 %v279, 4
      %v444 = vpop.permute.xlu0 %443
      %445 = vrot.lane.b32.xlu0 %v280, 4
      %v446 = vpop.permute.xlu0 %445
      %479 = vrot.lane.b32.xlu0 %v281, 8
      %v480 = vpop.permute.xlu0 %479
      %481 = vrot.lane.b32.xlu0 %v282, 8
      %v482 = vpop.permute.xlu0 %481
      %483 = vrot.lane.b32.xlu0 %v283, 8
      %v484 = vpop.permute.xlu0 %483
      %485 = vrot.lane.b32.xlu0 %v284, 8
      %v486 = vpop.permute.xlu0 %485
      %487 = vrot.lane.b32.xlu0 %v285, 8
      %v488 = vpop.permute.xlu0 %487
      %489 = vrot.lane.b32.xlu0 %v286, 8
      %v490 = vpop.permute.xlu0 %489
      %491 = vrot.lane.b32.xlu0 %v287, 8
      %v492 = vpop.permute.xlu0 %491
      %493 = vrot.lane.b32.xlu0 %v288, 8
      %v494 = vpop.permute.xlu0 %493
      %495 = vrot.lane.b32.xlu0 %v289, 8
      %v496 = vpop.permute.xlu0 %495
      %497 = vrot.lane.b32.xlu0 %v290, 8
      %v498 = vpop.permute.xlu0 %497
      %499 = vrot.lane.b32.xlu0 %v291, 8
      %v500 = vpop.permute.xlu0 %499
      %501 = vrot.lane.b32.xlu0 %v292, 8
      %v502 = vpop.permute.xlu0 %501
      %503 = vrot.lane.b32.xlu0 %v293, 8
      %v504 = vpop.permute.xlu0 %503
      %505 = vrot.lane.b32.xlu0 %v294, 8
      %v506 = vpop.permute.xlu0 %505
      %507 = vrot.lane.b32.xlu0 %v295, 8
      %v508 = vpop.permute.xlu0 %507
      %509 = vrot.lane.b32.xlu0 %v296, 8
      %v510 = vpop.permute.xlu0 %509
      %543 = vrot.lane.b32.xlu0 %v300, 12
      %v544 = vpop.permute.xlu0 %543
      %545 = vrot.lane.b32.xlu0 %v301, 12
      %v546 = vpop.permute.xlu0 %545
      %547 = vrot.lane.b32.xlu0 %v302, 12
      %v548 = vpop.permute.xlu0 %547
      %549 = vrot.lane.b32.xlu0 %v303, 12
      %v550 = vpop.permute.xlu0 %549
      %551 = vrot.lane.b32.xlu0 %v304, 12
      %v552 = vpop.permute.xlu0 %551
      %553 = vrot.lane.b32.xlu0 %v305, 12
      %v554 = vpop.permute.xlu0 %553
      %555 = vrot.lane.b32.xlu0 %v306, 12
      %v556 = vpop.permute.xlu0 %555
      %557 = vrot.lane.b32.xlu0 %v307, 12
      %v558 = vpop.permute.xlu0 %557
      %559 = vrot.lane.b32.xlu0 %v308, 12
      %v560 = vpop.permute.xlu0 %559
      %561 = vrot.lane.b32.xlu0 %v309, 12
      %v562 = vpop.permute.xlu0 %561
      %563 = vrot.lane.b32.xlu0 %v310, 12
      %v564 = vpop.permute.xlu0 %563
      %565 = vrot.lane.b32.xlu0 %v311, 12
      %v566 = vpop.permute.xlu0 %565
      %567 = vrot.lane.b32.xlu0 %v312, 12
      %v568 = vpop.permute.xlu0 %567
      %569 = vrot.lane.b32.xlu0 %v313, 12
      %v570 = vpop.permute.xlu0 %569
      %571 = vrot.lane.b32.xlu0 %v314, 12
      %v572 = vpop.permute.xlu0 %571
      %573 = vrot.lane.b32.xlu0 %v315, 12
      %v574 = vpop.permute.xlu0 %573
      %607 = vrot.lane.b32.xlu0 %v316, 16
      %v608 = vpop.permute.xlu0 %607
      %609 = vrot.lane.b32.xlu0 %v317, 16
      %v610 = vpop.permute.xlu0 %609
      %611 = vrot.lane.b32.xlu0 %v318, 16
      %v612 = vpop.permute.xlu0 %611
      %613 = vrot.lane.b32.xlu0 %v319, 16
      %v614 = vpop.permute.xlu0 %613
      %615 = vrot.lane.b32.xlu0 %v320, 16
      %v616 = vpop.permute.xlu0 %615
      %617 = vrot.lane.b32.xlu0 %v321, 16
      %v618 = vpop.permute.xlu0 %617
      %619 = vrot.lane.b32.xlu0 %v322, 16
      %v620 = vpop.permute.xlu0 %619
      %621 = vrot.lane.b32.xlu0 %v323, 16
      %v622 = vpop.permute.xlu0 %621
      %623 = vrot.lane.b32.xlu0 %v324, 16
      %v624 = vpop.permute.xlu0 %623
      %625 = vrot.lane.b32.xlu0 %v325, 16
      %v626 = vpop.permute.xlu0 %625
      %627 = vrot.lane.b32.xlu0 %v326, 16
      %v628 = vpop.permute.xlu0 %627
      %629 = vrot.lane.b32.xlu0 %v327, 16
      %v630 = vpop.permute.xlu0 %629
      %631 = vrot.lane.b32.xlu0 %v328, 16
      %v632 = vpop.permute.xlu0 %631
      %633 = vrot.lane.b32.xlu0 %v329, 16
      %v634 = vpop.permute.xlu0 %633
      %635 = vrot.lane.b32.xlu0 %v330, 16
      %v636 = vpop.permute.xlu0 %635
      %637 = vrot.lane.b32.xlu0 %v331, 16
      %v638 = vpop.permute.xlu0 %637
      %671 = vrot.lane.b32.xlu0 %v332, 20
      %v672 = vpop.permute.xlu0 %671
      %673 = vrot.lane.b32.xlu0 %v333, 20
      %v674 = vpop.permute.xlu0 %673
      %675 = vrot.lane.b32.xlu0 %v334, 20
      %v676 = vpop.permute.xlu0 %675
      %677 = vrot.lane.b32.xlu0 %v335, 20
      %v678 = vpop.permute.xlu0 %677
      %679 = vrot.lane.b32.xlu0 %v336, 20
      %v680 = vpop.permute.xlu0 %679
      %681 = vrot.lane.b32.xlu0 %v337, 20
      %v682 = vpop.permute.xlu0 %681
      %683 = vrot.lane.b32.xlu0 %v338, 20
      %v684 = vpop.permute.xlu0 %683
      %685 = vrot.lane.b32.xlu0 %v339, 20
      %v686 = vpop.permute.xlu0 %685
      %687 = vrot.lane.b32.xlu0 %v340, 20
      %v688 = vpop.permute.xlu0 %687
      %689 = vrot.lane.b32.xlu0 %v341, 20
      %v690 = vpop.permute.xlu0 %689
      %691 = vrot.lane.b32.xlu0 %v342, 20
      %v692 = vpop.permute.xlu0 %691
      %693 = vrot.lane.b32.xlu0 %v343, 20
      %v694 = vpop.permute.xlu0 %693
      %695 = vrot.lane.b32.xlu0 %v344, 20
      %v696 = vpop.permute.xlu0 %695
      %697 = vrot.lane.b32.xlu0 %v345, 20
      %v698 = vpop.permute.xlu0 %697
      %699 = vrot.lane.b32.xlu0 %v346, 20
      %v700 = vpop.permute.xlu0 %699
      %701 = vrot.lane.b32.xlu0 %v347, 20
      %v702 = vpop.permute.xlu0 %701
      %735 = vrot.lane.b32.xlu0 %v351, 24
      %v736 = vpop.permute.xlu0 %735
      %737 = vrot.lane.b32.xlu0 %v352, 24
      %v738 = vpop.permute.xlu0 %737
      %739 = vrot.lane.b32.xlu0 %v353, 24
      %v740 = vpop.permute.xlu0 %739
      %741 = vrot.lane.b32.xlu0 %v354, 24
      %v742 = vpop.permute.xlu0 %741
      %743 = vrot.lane.b32.xlu0 %v355, 24
      %v744 = vpop.permute.xlu0 %743
      %745 = vrot.lane.b32.xlu0 %v356, 24
      %v746 = vpop.permute.xlu0 %745
      %747 = vrot.lane.b32.xlu0 %v357, 24
      %v748 = vpop.permute.xlu0 %747
      %749 = vrot.lane.b32.xlu0 %v358, 24
      %v750 = vpop.permute.xlu0 %749
      %751 = vrot.lane.b32.xlu0 %v359, 24
      %v752 = vpop.permute.xlu0 %751
      %753 = vrot.lane.b32.xlu0 %v360, 24
      %v754 = vpop.permute.xlu0 %753
      %755 = vrot.lane.b32.xlu0 %v361, 24
      %v756 = vpop.permute.xlu0 %755
      %757 = vrot.lane.b32.xlu0 %v362, 24
      %v758 = vpop.permute.xlu0 %757
      %759 = vrot.lane.b32.xlu0 %v363, 24
      %v760 = vpop.permute.xlu0 %759
      %761 = vrot.lane.b32.xlu0 %v364, 24
      %v762 = vpop.permute.xlu0 %761
      %763 = vrot.lane.b32.xlu0 %v365, 24
      %v764 = vpop.permute.xlu0 %763
      %765 = vrot.lane.b32.xlu0 %v366, 24
      %v766 = vpop.permute.xlu0 %765
      %799 = vrot.lane.b32.xlu0 %v367, 28
      %v800 = vpop.permute.xlu0 %799
      %801 = vrot.lane.b32.xlu0 %v368, 28
      %v802 = vpop.permute.xlu0 %801
      %803 = vrot.lane.b32.xlu0 %v369, 28
      %v804 = vpop.permute.xlu0 %803
      %805 = vrot.lane.b32.xlu0 %v370, 28
      %v806 = vpop.permute.xlu0 %805
      %807 = vrot.lane.b32.xlu0 %v371, 28
      %v808 = vpop.permute.xlu0 %807
      %809 = vrot.lane.b32.xlu0 %v372, 28
      %v810 = vpop.permute.xlu0 %809
      %811 = vrot.lane.b32.xlu0 %v373, 28
      %v812 = vpop.permute.xlu0 %811
      %813 = vrot.lane.b32.xlu0 %v374, 28
      %v814 = vpop.permute.xlu0 %813
      %815 = vrot.lane.b32.xlu0 %v375, 28
      %v816 = vpop.permute.xlu0 %815
      %817 = vrot.lane.b32.xlu0 %v376, 28
      %v818 = vpop.permute.xlu0 %817
      %819 = vrot.lane.b32.xlu0 %v377, 28
      %v820 = vpop.permute.xlu0 %819
      %821 = vrot.lane.b32.xlu0 %v378, 28
      %v822 = vpop.permute.xlu0 %821
      %823 = vrot.lane.b32.xlu0 %v379, 28
      %v824 = vpop.permute.xlu0 %823
      %825 = vrot.lane.b32.xlu0 %v380, 28
      %v826 = vpop.permute.xlu0 %825
      %827 = vrot.lane.b32.xlu0 %v381, 28
      %v828 = vpop.permute.xlu0 %827
      %829 = vrot.lane.b32.xlu0 %v382, 28
      %v830 = vpop.permute.xlu0 %829
      %863 = vrot.lane.b32.xlu0 %v383, 32
      %v864 = vpop.permute.xlu0 %863
      %865 = vrot.lane.b32.xlu0 %v384, 32
      %v866 = vpop.permute.xlu0 %865
      %867 = vrot.lane.b32.xlu0 %v385, 32
      %v868 = vpop.permute.xlu0 %867
      %869 = vrot.lane.b32.xlu0 %v386, 32
      %v870 = vpop.permute.xlu0 %869
      %871 = vrot.lane.b32.xlu0 %v387, 32
      %v872 = vpop.permute.xlu0 %871
      %873 = vrot.lane.b32.xlu0 %v388, 32
      %v874 = vpop.permute.xlu0 %873
      %875 = vrot.lane.b32.xlu0 %v389, 32
      %v876 = vpop.permute.xlu0 %875
      %877 = vrot.lane.b32.xlu0 %v390, 32
      %v878 = vpop.permute.xlu0 %877
      %879 = vrot.lane.b32.xlu0 %v391, 32
      %v880 = vpop.permute.xlu0 %879
      %881 = vrot.lane.b32.xlu0 %v392, 32
      %v882 = vpop.permute.xlu0 %881
      %883 = vrot.lane.b32.xlu0 %v393, 32
      %v884 = vpop.permute.xlu0 %883
      %885 = vrot.lane.b32.xlu0 %v394, 32
      %v886 = vpop.permute.xlu0 %885
      %887 = vrot.lane.b32.xlu0 %v395, 32
      %v888 = vpop.permute.xlu0 %887
      %889 = vrot.lane.b32.xlu0 %v396, 32
      %v890 = vpop.permute.xlu0 %889
      %891 = vrot.lane.b32.xlu0 %v397, 32
      %v892 = vpop.permute.xlu0 %891
      %893 = vrot.lane.b32.xlu0 %v398, 32
      %v894 = vpop.permute.xlu0 %893
      %vm911 = vcmask 31744
      %v912 = vsel %vm911, %v249, %v416
      %v913 = vsel %vm911, %v250, %v418
      %v914 = vsel %vm911, %v251, %v420
      %v915 = vsel %vm911, %v252, %v422
      %v916 = vsel %vm911, %v253, %v424
      %v917 = vsel %vm911, %v254, %v426
      %v918 = vsel %vm911, %v255, %v428
      %v919 = vsel %vm911, %v256, %v430
      %v920 = vsel %vm911, %v257, %v432
      %v921 = vsel %vm911, %v258, %v434
      %v922 = vsel %vm911, %v259, %v436
      %v923 = vsel %vm911, %v260, %v438
      %v924 = vsel %vm911, %v261, %v440
      %v925 = vsel %vm911, %v262, %v442
      %v926 = vsel %vm911, %v263, %v444
      %v927 = vsel %vm911, %v264, %v446
      %vm928 = vcmask 64512
      %v929 = vsel %vm928, %v912, %v480
      %v930 = vsel %vm928, %v913, %v482
      %v931 = vsel %vm928, %v914, %v484
      %v932 = vsel %vm928, %v915, %v486
      %v933 = vsel %vm928, %v916, %v488
      %v934 = vsel %vm928, %v917, %v490
      %v935 = vsel %vm928, %v918, %v492
      %v936 = vsel %vm928, %v919, %v494
      %v937 = vsel %vm928, %v920, %v496
      %v938 = vsel %vm928, %v921, %v498
      %v939 = vsel %vm928, %v922, %v500
      %v940 = vsel %vm928, %v923, %v502
      %v941 = vsel %vm928, %v924, %v504
      %v942 = vsel %vm928, %v925, %v506
      %v943 = vsel %vm928, %v926, %v508
      %v944 = vsel %vm928, %v927, %v510
      %vm945 = vcmask 97280
      %v946 = vsel %vm945, %v929, %v544
      %v947 = vsel %vm945, %v930, %v546
      %v948 = vsel %vm945, %v931, %v548
      %v949 = vsel %vm945, %v932, %v550
      %v950 = vsel %vm945, %v933, %v552
      %v951 = vsel %vm945, %v934, %v554
      %v952 = vsel %vm945, %v935, %v556
      %v953 = vsel %vm945, %v936, %v558
      %v954 = vsel %vm945, %v937, %v560
      %v955 = vsel %vm945, %v938, %v562
      %v956 = vsel %vm945, %v939, %v564
      %v957 = vsel %vm945, %v940, %v566
      %v958 = vsel %vm945, %v941, %v568
      %v959 = vsel %vm945, %v942, %v570
      %v960 = vsel %vm945, %v943, %v572
      %v961 = vsel %vm945, %v944, %v574
      %vm962 = vcmask 130048
      %v963 = vsel %vm962, %v946, %v608
      %v964 = vsel %vm962, %v947, %v610
      %v965 = vsel %vm962, %v948, %v612
      %v966 = vsel %vm962, %v949, %v614
      %v967 = vsel %vm962, %v950, %v616
      %v968 = vsel %vm962, %v951, %v618
      %v969 = vsel %vm962, %v952, %v620
      %v970 = vsel %vm962, %v953, %v622
      %v971 = vsel %vm962, %v954, %v624
      %v972 = vsel %vm962, %v955, %v626
      %v973 = vsel %vm962, %v956, %v628
      %v974 = vsel %vm962, %v957, %v630
      %v975 = vsel %vm962, %v958, %v632
      %v976 = vsel %vm962, %v959, %v634
      %v977 = vsel %vm962, %v960, %v636
      %v978 = vsel %vm962, %v961, %v638
      %vm979 = vcmask 162816
      %v980 = vsel %vm979, %v963, %v672
      %v981 = vsel %vm979, %v964, %v674
      %v982 = vsel %vm979, %v965, %v676
      %v983 = vsel %vm979, %v966, %v678
      %v984 = vsel %vm979, %v967, %v680
      %v985 = vsel %vm979, %v968, %v682
      %v986 = vsel %vm979, %v969, %v684
      %v987 = vsel %vm979, %v970, %v686
      %v988 = vsel %vm979, %v971, %v688
      %v989 = vsel %vm979, %v972, %v690
      %v990 = vsel %vm979, %v973, %v692
      %v991 = vsel %vm979, %v974, %v694
      %v992 = vsel %vm979, %v975, %v696
      %v993 = vsel %vm979, %v976, %v698
      %v994 = vsel %vm979, %v977, %v700
      %v995 = vsel %vm979, %v978, %v702
      %vm996 = vcmask 195584
      %v997 = vsel %vm996, %v980, %v736
      %v998 = vsel %vm996, %v981, %v738
      %v999 = vsel %vm996, %v982, %v740
      %v1000 = vsel %vm996, %v983, %v742
      %v1001 = vsel %vm996, %v984, %v744
      %v1002 = vsel %vm996, %v985, %v746
      %v1003 = vsel %vm996, %v986, %v748
      %v1004 = vsel %vm996, %v987, %v750
      %v1005 = vsel %vm996, %v988, %v752
      %v1006 = vsel %vm996, %v989, %v754
      %v1007 = vsel %vm996, %v990, %v756
      %v1008 = vsel %vm996, %v991, %v758
      %v1009 = vsel %vm996, %v992, %v760
      %v1010 = vsel %vm996, %v993, %v762
      %v1011 = vsel %vm996, %v994, %v764
      %v1012 = vsel %vm996, %v995, %v766
      %vm1013 = vcmask 228352
      %v1014 = vsel %vm1013, %v997, %v800
      %v1015 = vsel %vm1013, %v998, %v802
      %v1016 = vsel %vm1013, %v999, %v804
      %v1017 = vsel %vm1013, %v1000, %v806
      %v1018 = vsel %vm1013, %v1001, %v808
      %v1019 = vsel %vm1013, %v1002, %v810
      %v1020 = vsel %vm1013, %v1003, %v812
      %v1021 = vsel %vm1013, %v1004, %v814
      %v1022 = vsel %vm1013, %v1005, %v816
      %v1023 = vsel %vm1013, %v1006, %v818
      %v1024 = vsel %vm1013, %v1007, %v820
      %v1025 = vsel %vm1013, %v1008, %v822
      %v1026 = vsel %vm1013, %v1009, %v824
      %v1027 = vsel %vm1013, %v1010, %v826
      %v1028 = vsel %vm1013, %v1011, %v828
      %v1029 = vsel %vm1013, %v1012, %v830
      %vm1030 = vcmask 261120
      %v1031 = vsel %vm1030, %v1014, %v864
      %v1032 = vsel %vm1030, %v1015, %v866
      %v1033 = vsel %vm1030, %v1016, %v868
      %v1034 = vsel %vm1030, %v1017, %v870
      %v1035 = vsel %vm1030, %v1018, %v872
      %v1036 = vsel %vm1030, %v1019, %v874
      %v1037 = vsel %vm1030, %v1020, %v876
      %v1038 = vsel %vm1030, %v1021, %v878
      %v1039 = vsel %vm1030, %v1022, %v880
      %v1040 = vsel %vm1030, %v1023, %v882
      %v1041 = vsel %vm1030, %v1024, %v884
      %v1042 = vsel %vm1030, %v1025, %v886
      %v1043 = vsel %vm1030, %v1026, %v888
      %v1044 = vsel %vm1030, %v1027, %v890
      %v1045 = vsel %vm1030, %v1028, %v892
      %v1046 = vsel %vm1030, %v1029, %v894
      %v1047 = vpack.c.bf16 %v1032, %v1031
      %v1048 = vpack.c.bf16 %v1034, %v1033
      %v1049 = vpack.c.bf16 %v1036, %v1035
      %v1050 = vpack.c.bf16 %v1038, %v1037
      %v1051 = vpack.c.bf16 %v1040, %v1039
      %v1052 = vpack.c.bf16 %v1042, %v1041
      %v1053 = vpack.c.bf16 %v1044, %v1043
      %v1054 = vpack.c.bf16 %v1046, %v1045
      %v1055 = vld [vmem:[%s1] sm:$0xf]
      %v1056 = vld [vmem:[%s1 + $0x4] sm:$0xf]
      %v1057 = vld [vmem:[%s1 + $0x8] sm:$0xf]
      %v1058 = vld [vmem:[%s1 + $0xc] sm:$0xf]
      %v1059 = vld [vmem:[%s1 + $0x10] sm:$0x3]
      %v1060 = vld [vmem:[%s2] sm:$0x1]
      %v1062 = vlaneseq
      %v1063 = vshrl.u32 %v1062, 7
      %v1064 = vsub.s32 0, %v1063
      %v1065 = vrot.slane %v1060, %v1064
      %v1072 = vunpack.c.l.b16 %v1055
      %v1073 = vunpack.c.l.b16 %v1056
      %v1074 = vunpack.c.l.b16 %v1057
      %v1075 = vunpack.c.l.b16 %v1058
      %v1076 = vunpack.c.l.b16 %v1059
      %v1077 = vpack.c.b16 %v1073, %v1072
      %v1078 = vpack.c.b16 %v1075, %v1074
      %v1079 = vpack.c.b16 %v1076, %v1076
      %vm1082 = vcmask 293888
      %v1084 = vsel %vm1082, %v1047, 0
      %v1087 = vsel %vm1082, %v1048, 0
      %v1090 = vsel %vm1082, %v1049, 0
      %v1093 = vsel %vm1082, %v1050, 0
      %v1096 = vsel %vm1082, %v1051, 0
      %v1099 = vsel %vm1082, %v1052, 0
      %v1102 = vsel %vm1082, %v1053, 0
      %v1105 = vsel %vm1082, %v1054, 0
      %vm1107 = vcmask 1041408
      %v1109 = vsel %vm1107, %v1079, 0
      %1111 = vmatprep.subr.bf16.mxu0 0
      %1112 = vmatpush1.bf16.msra.mxu0 %v1077
      %1113 = vmatprep.subr.bf16.mxu0 0
      %1114 = vmatpush1.bf16.msra.mxu0 %v1078
      %1115 = vmatprep.subr.bf16.mxu0 0
      %1116 = vmatpush1.bf16.msra.mxu0 %v1109
      %1117 = vmatprep.subr.bf16.mxu0 0
      %1118 = vmatpush1.bf16.msra.mxu0 0
      %1119 = vmatprep.subr.bf16.mxu0 0
      %1120 = vmatpush1.bf16.msra.mxu0 0
      %1121 = vmatprep.subr.bf16.mxu0 0
      %1122 = vmatpush1.bf16.msra.mxu0 0
      %1123 = vmatprep.subr.bf16.mxu0 0
      %1124 = vmatpush1.bf16.msra.mxu0 0
      %1125 = vmatprep.subr.bf16.mxu0 0
      %1126 = vmatpush1.bf16.msra.mxu0 0
      %1127 = vmatprep.subr.bf16.mxu0 0
      %1128 = vmatpush1.bf16.msra.mxu0 0
      %1129 = vmatprep.subr.bf16.mxu0 0
      %1130 = vmatpush1.bf16.msra.mxu0 0
      %1131 = vmatprep.subr.bf16.mxu0 0
      %1132 = vmatpush1.bf16.msra.mxu0 0
      %1133 = vmatprep.subr.bf16.mxu0 0
      %1134 = vmatpush1.bf16.msra.mxu0 0
      %1135 = vmatprep.subr.bf16.mxu0 0
      %1136 = vmatpush1.bf16.msra.mxu0 0
      %1137 = vmatprep.subr.bf16.mxu0 0
      %1138 = vmatpush1.bf16.msra.mxu0 0
      %1139 = vmatprep.subr.bf16.mxu0 0
      %1140 = vmatpush1.bf16.msra.mxu0 0
      %1141 = vmatprep.subr.bf16.mxu0 0
      %1142 = vmatpush1.bf16.msra.mxu0 0
      %1143 = vmatprep.mubr.bf16.mxu0 0
      %1144 = vmatmul.mubr.bf16.gmra.mrb[0].mxu0 %v1084
      %v1145 = vpop.f32.mrb[0].mxu0
      %v1146 = vadd.f32 %v1065, %v1145
      %v1147 = vpop.f32.mrb[0].mxu0
      %v1148 = vpop.f32.mrb[0].mxu0
      %v1149 = vadd.f32 %v1065, %v1148
      %v1150 = vpop.f32.mrb[0].mxu0
      %1151 = vmatprep.mubr.bf16.mxu0 0
      %1152 = vmatmul.mubr.bf16.gmra.mrb[0].mxu0 %v1087
      %v1153 = vpop.f32.mrb[0].mxu0
      %v1154 = vadd.f32 %v1065, %v1153
      %v1155 = vpop.f32.mrb[0].mxu0
      %v1156 = vpop.f32.mrb[0].mxu0
      %v1157 = vadd.f32 %v1065, %v1156
      %v1158 = vpop.f32.mrb[0].mxu0
      %1159 = vmatprep.mubr.bf16.mxu0 0
      %1160 = vmatmul.mubr.bf16.gmra.mrb[0].mxu0 %v1090
      %v1161 = vpop.f32.mrb[0].mxu0
      %v1162 = vadd.f32 %v1065, %v1161
      %v1163 = vpop.f32.mrb[0].mxu0
      %v1164 = vpop.f32.mrb[0].mxu0
      %v1165 = vadd.f32 %v1065, %v1164
      %v1166 = vpop.f32.mrb[0].mxu0
      %1167 = vmatprep.mubr.bf16.mxu0 0
      %1168 = vmatmul.mubr.bf16.gmra.mrb[0].mxu0 %v1093
      %v1169 = vpop.f32.mrb[0].mxu0
      %v1170 = vadd.f32 %v1065, %v1169
      %v1171 = vpop.f32.mrb[0].mxu0
      %v1172 = vpop.f32.mrb[0].mxu0
      %v1173 = vadd.f32 %v1065, %v1172
      %v1174 = vpop.f32.mrb[0].mxu0
      %1175 = vmatprep.mubr.bf16.mxu0 0
      %1176 = vmatmul.mubr.bf16.gmra.mrb[0].mxu0 %v1096
      %v1177 = vpop.f32.mrb[0].mxu0
      %v1178 = vadd.f32 %v1065, %v1177
      %v1179 = vpop.f32.mrb[0].mxu0
      %v1180 = vpop.f32.mrb[0].mxu0
      %v1181 = vadd.f32 %v1065, %v1180
      %v1182 = vpop.f32.mrb[0].mxu0
      %1183 = vmatprep.mubr.bf16.mxu0 0
      %1184 = vmatmul.mubr.bf16.gmra.mrb[0].mxu0 %v1099
      %v1185 = vpop.f32.mrb[0].mxu0
      %v1186 = vadd.f32 %v1065, %v1185
      %v1187 = vpop.f32.mrb[0].mxu0
      %v1188 = vpop.f32.mrb[0].mxu0
      %v1189 = vadd.f32 %v1065, %v1188
      %v1190 = vpop.f32.mrb[0].mxu0
      %1191 = vmatprep.mubr.bf16.mxu0 0
      %1192 = vmatmul.mubr.bf16.gmra.mrb[0].mxu0 %v1102
      %v1193 = vpop.f32.mrb[0].mxu0
      %v1194 = vadd.f32 %v1065, %v1193
      %v1195 = vpop.f32.mrb[0].mxu0
      %v1196 = vpop.f32.mrb[0].mxu0
      %v1197 = vadd.f32 %v1065, %v1196
      %v1198 = vpop.f32.mrb[0].mxu0
      %1199 = vmatprep.mubr.bf16.mxu0 0
      %1200 = vmatmul.mubr.bf16.gmra.mrb[0].mxu0 %v1105
      %v1201 = vpop.f32.mrb[0].mxu0
      %v1202 = vadd.f32 %v1065, %v1201
      %v1203 = vpop.f32.mrb[0].mxu0
      %v1204 = vpop.f32.mrb[0].mxu0
      %v1205 = vadd.f32 %v1065, %v1204
      %v1206 = vpop.f32.mrb[0].mxu0
      %1207 = vdwg.mxu0
      %1208 = vst.msk [vmem:[%s231] sm:$0xff] %vm928, %v1146
      %1209 = vst.msk [vmem:[%s231 + $0x8] sm:$0xff] %vm928, %v1149
      %1210 = vst.msk [vmem:[%s231 + $0x10] sm:$0xff] %vm928, %v1154
      %1211 = vst.msk [vmem:[%s231 + $0x18] sm:$0xff] %vm928, %v1157
      %1212 = vst.msk [vmem:[%s231 + $0x20] sm:$0xff] %vm928, %v1162
      %1213 = vst.msk [vmem:[%s231 + $0x28] sm:$0xff] %vm928, %v1165
      %1214 = vst.msk [vmem:[%s231 + $0x30] sm:$0xff] %vm928, %v1170
      %1215 = vst.msk [vmem:[%s231 + $0x38] sm:$0xff] %vm928, %v1173
      %1216 = vst.msk [vmem:[%s231 + $0x40] sm:$0xff] %vm928, %v1178
      %1217 = vst.msk [vmem:[%s231 + $0x48] sm:$0xff] %vm928, %v1181
      %1218 = vst.msk [vmem:[%s231 + $0x50] sm:$0xff] %vm928, %v1186
      %1219 = vst.msk [vmem:[%s231 + $0x58] sm:$0xff] %vm928, %v1189
      %1220 = vst.msk [vmem:[%s231 + $0x60] sm:$0xff] %vm928, %v1194
      %1221 = vst.msk [vmem:[%s231 + $0x68] sm:$0xff] %vm928, %v1197
      %1222 = vst.msk [vmem:[%s231 + $0x70] sm:$0xff] %vm928, %v1202
      %1223 = vst.msk [vmem:[%s231 + $0x78] sm:$0xff] %vm928, %v1205
      %v1224 = vmax.f32 %v1146, 0.0
      %v1225 = vmax.f32 %v1149, 0.0
      %v1226 = vmax.f32 %v1154, 0.0
      %v1227 = vmax.f32 %v1157, 0.0
      %v1228 = vmax.f32 %v1162, 0.0
      %v1229 = vmax.f32 %v1165, 0.0
      %v1230 = vmax.f32 %v1170, 0.0
      %v1231 = vmax.f32 %v1173, 0.0
      %v1232 = vmax.f32 %v1178, 0.0
      %v1233 = vmax.f32 %v1181, 0.0
      %v1234 = vmax.f32 %v1186, 0.0
      %v1235 = vmax.f32 %v1189, 0.0
      %v1236 = vmax.f32 %v1194, 0.0
      %v1237 = vmax.f32 %v1197, 0.0
      %v1238 = vmax.f32 %v1202, 0.0
      %v1239 = vmax.f32 %v1205, 0.0
      %1240 = vst.msk [vmem:[%s241] sm:$0xff] %vm928, %v1224
      %1241 = vst.msk [vmem:[%s241 + $0x8] sm:$0xff] %vm928, %v1225
      %1242 = vst.msk [vmem:[%s241 + $0x10] sm:$0xff] %vm928, %v1226
      %1243 = vst.msk [vmem:[%s241 + $0x18] sm:$0xff] %vm928, %v1227
      %1244 = vst.msk [vmem:[%s241 + $0x20] sm:$0xff] %vm928, %v1228
      %1245 = vst.msk [vmem:[%s241 + $0x28] sm:$0xff] %vm928, %v1229
      %1246 = vst.msk [vmem:[%s241 + $0x30] sm:$0xff] %vm928, %v1230
      %1247 = vst.msk [vmem:[%s241 + $0x38] sm:$0xff] %vm928, %v1231
      %1248 = vst.msk [vmem:[%s241 + $0x40] sm:$0xff] %vm928, %v1232
      %1249 = vst.msk [vmem:[%s241 + $0x48] sm:$0xff] %vm928, %v1233
      %1250 = vst.msk [vmem:[%s241 + $0x50] sm:$0xff] %vm928, %v1234
      %1251 = vst.msk [vmem:[%s241 + $0x58] sm:$0xff] %vm928, %v1235
      %1252 = vst.msk [vmem:[%s241 + $0x60] sm:$0xff] %vm928, %v1236
      %1253 = vst.msk [vmem:[%s241 + $0x68] sm:$0xff] %vm928, %v1237
      %1254 = vst.msk [vmem:[%s241 + $0x70] sm:$0xff] %vm928, %v1238
      %1255 = vst.msk [vmem:[%s241 + $0x78] sm:$0xff] %vm928, %v1239
      %s1256 = smul.u32 %s20, 2
      %s1257 = sadd.s32 %s1256, %s21
      %s1258 = smul.u32 16, %s1257
      %p1259 = scmp.lt.s32.totalorder %s1258, 63
      %s1260 = scalar_select %p1259, %s1258, 63
      %s1261 = smul.addr %s1260, 8
      %s1262 = scalar_lea.vmem %s3, %s1261
      %s1263 = smul.u32 %s20, 2
      %s1264 = sadd.s32 %s1263, %s21
      %s1265 = smul.u32 16, %s1264
      %p1266 = scmp.lt.s32.totalorder %s1265, 63
      %s1267 = scalar_select %p1266, %s1265, 63
      %s1268 = smul.addr %s1267, 8
      %s1269 = scalar_lea.vmem %s4, %s1268
      // Predicated region
      $region33: #{_lambda_.6} parent=31 // pred_check
        %p1270 = pneg %p118
      $region34: #{_lambda_.6} parent=31 // pred_check_branch
        %1272 = sbr.rel (%p1270) target = $region36
      $region35: #{_lambda_.6} parent=31 // pred_region
        %s1273 = smul.u32 %s20, 2
        %s1274 = sadd.s32 %s1273, %s21
        %s1275 = smul.u32 16, %s1274
      $region36: #{_lambda_.6} parent=31 // pred_fallthru
        _
      // Predicated region
      $region37: #{_lambda_.6} parent=31 // pred_check
        %p1276 = pneg %p148
      $region38: #{_lambda_.6} parent=31 // pred_check_branch
        %1278 = sbr.rel (%p1276) target = $region40
      $region39: #{_lambda_.6} parent=31 // pred_region
        %s1279 = smul.u32 %s20, 2
        %s1280 = sadd.s32 %s1279, %s21
        %s1281 = smul.u32 16, %s1280
      $region40: #{_lambda_.6} parent=31 // pred_fallthru
        _
    $region32: #{_lambda_.6} parent=5 // pred_fallthru
      _
    %p1282 = scmp.le.s32.totalorder 2, %s11
    // Predicated region
    $region41: #{_lambda_.6} parent=5 // pred_check
      %p1283 = pneg %p1282
    $region42: #{_lambda_.6} parent=5 // pred_check_branch
      %1285 = sbr.rel (%p1283) target = $region44
    $region43: #{_lambda_.6} parent=5 // pred_region
      %s1286 = ssub.s32 %s11, 2
      // Predicated region
      $region45: #{_lambda_.6} parent=43 // pred_check
        %p1287 = pneg %p124
      $region46: #{_lambda_.6} parent=43 // pred_check_branch
        %1289 = sbr.rel (%p1287) target = $region48
      $region47: #{_lambda_.6} parent=43 // pred_region
        %s1290 = smul.u32 %s22, 2
        %s1291 = sadd.s32 %s1290, %s23
        %s1292 = smul.u32 16, %s1291
        %p1293 = scmp.lt.s32.totalorder %s1292, 63
        %s1294 = scalar_select %p1293, %s1292, 63
        %s1295 = smul.addr %s1294, 8
        %s1296 = scalar_lea.vmem %s3, %s1295
      $region48: #{_lambda_.6} parent=43 // pred_fallthru
        _
      // Predicated region
      $region49: #{_lambda_.6} parent=43 // pred_check
        %p1297 = pneg %p154
      $region50: #{_lambda_.6} parent=43 // pred_check_branch
        %1299 = sbr.rel (%p1297) target = $region52
      $region51: #{_lambda_.6} parent=43 // pred_region
        %s1300 = smul.u32 %s22, 2
        %s1301 = sadd.s32 %s1300, %s23
        %s1302 = smul.u32 16, %s1301
        %p1303 = scmp.lt.s32.totalorder %s1302, 63
        %s1304 = scalar_select %p1303, %s1302, 63
        %s1305 = smul.addr %s1304, 8
        %s1306 = scalar_lea.vmem %s4, %s1305
      $region52: #{_lambda_.6} parent=43 // pred_fallthru
        _
    $region44: #{_lambda_.6} parent=5 // pred_fallthru
      _
  $region6: #{_lambda_.6} parent=0 // loop_footer
    %s15 = sadd.s32 1, %s11
  $region7: #{_lambda_.6} parent=0 // loop_footer_branch
    %10 = sbr.rel target = $region3
  $region8: #{_lambda_.6} parent=0 // loop_exit
    _

// kernel: _lambda_.7
$region0: #{_lambda_.7}
  #allocation0 [shape = 'u32[]', space=smem, size = 0x4, offset = 0x4, fixed_abs, tag = 'smem constant byte address 0x4 - core index']
  #allocation1 [shape = 'u32[144,128]{1,0:T(1,128)}', space=vmem, size = 0x12000, scoped, tag = 'internal scratch']
  %s0 = inlined_call_operand.vmem [shape: f32[2,18,18,8], index: 0, kind: input, shape index: {}]
  %s1 = inlined_call_operand.vmem [shape: bf16[72,8], index: 1, kind: input, shape index: {}]
  %s2 = inlined_call_operand.vmem [shape: f32[1,8], index: 2, kind: input, shape index: {}]
  %s3 = inlined_call_operand.vmem [shape: f32[512,8], index: 3, kind: output, shape index: {0}]
  %s4 = inlined_call_operand.vmem [shape: f32[512,8], index: 4, kind: output, shape index: {1}]
  %5 = xla_tuple %s3, %s4
  %s6 = sld [smem:[#allocation0]]
  $region53: #{_lambda_.7} parent=0
    _
  %s8 = ssub.s32 1, %s6
  %s9 = scalar_select 0, %s8, %s6
  loop: start=0, step=1, limit=6
  $region2: #{_lambda_.7} parent=0 // loop_pre_header
    _
  $region3: #{_lambda_.7} parent=0 // loop_header
    %s11 = sphi 0, %s15
    %p12 = scmp.ge.s32.totalorder %s11, 6
    %s18 = sphi 0, %s30
    %s19 = sphi 0, %s26
    %s20 = sphi 0, %s18
    %s21 = sphi 0, %s19
    %s22 = sphi 0, %s20
    %s23 = sphi 0, %s21
    %s33 = sphi 0, %s35
    %s36 = sphi 0, %s33
    %s37 = sphi 0, %s36
    %s53 = sphi 0, %s37
    %s57 = sphi 0, %s57
    %s59 = sphi 0, %s57
    %s60 = sphi 0, %s59
    %s74 = sphi 0, %s60
    %s78 = sphi 0, %s78
    %s80 = sphi 0, %s78
    %s81 = sphi 0, %s80
    %s95 = sphi 0, %s81
    %s105 = sphi 0, %s107
    %s108 = sphi 0, %s105
    %s109 = sphi 0, %s108
    %s125 = sphi 0, %s109
    %s135 = sphi 0, %s137
    %s138 = sphi 0, %s135
    %s139 = sphi 0, %s138
    %s155 = sphi 0, %s139
  $region4: #{_lambda_.7} parent=0 // loop_header_branch
    %14 = sbr.rel (%p12) target = $region8
  $region5: #{_lambda_.7} parent=0 // loop_body
    %s16 = ssub.s32 %s11, 1
    %s17 = ssub.s32 %s11, 2
    %s24 = sadd.s32 1, %s19
    %p25 = scmp.ge.s32.totalorder %s24, 2
    %s26 = scalar_select %p25, 0, %s24
    %s27 = sadd.s32 1, %s18
    %s28 = scalar_select %p25, %s27, %s18
    %p29 = scmp.ge.s32.totalorder %s28, 2
    %s30 = scalar_select %p29, 0, %s28
    %s31 = ssub.s32 %s18, %s30
    %p32 = scmp.eq.s32.totalorder %s31, 0
    %s34 = sadd.s32 %s33, 1
    %s35 = scalar_select %p32, %s33, %s34
    %p38 = pneg %p32
    %p39 = scmp.eq.s32.totalorder %s11, 3
    %p40 = por %p38, %p39
    %p41 = scmp.ne.s32.totalorder %s33, %s36
    %p42 = scmp.eq.s32.totalorder %s11, 0
    %p43 = por %p41, %p42
    %p44 = scmp.ne.s32.totalorder %s33, %s36
    %p45 = scmp.eq.s32.totalorder %s16, 3
    %p46 = por %p44, %p45
    %p47 = scmp.ne.s32.totalorder %s36, %s37
    %p48 = scmp.eq.s32.totalorder %s16, 0
    %p49 = por %p47, %p48
    %p50 = scmp.ne.s32.totalorder %s36, %s37
    %p51 = scmp.eq.s32.totalorder %s17, 3
    %p52 = por %p50, %p51
    %p54 = scmp.ne.s32.totalorder %s37, %s53
    %p55 = scmp.eq.s32.totalorder %s17, 0
    %p56 = por %p54, %p55
    %s58 = sadd.s32 %s57, 1
    %p61 = scmp.eq.s32.totalorder %s11, 3
    %p62 = scmp.ne.s32.totalorder %s57, %s59
    %p63 = scmp.eq.s32.totalorder %s11, 0
    %p64 = por %p62, %p63
    %p65 = scmp.ne.s32.totalorder %s57, %s59
    %p66 = scmp.eq.s32.totalorder %s16, 3
    %p67 = por %p65, %p66
    %p68 = scmp.ne.s32.totalorder %s59, %s60
    %p69 = scmp.eq.s32.totalorder %s16, 0
    %p70 = por %p68, %p69
    %p71 = scmp.ne.s32.totalorder %s59, %s60
    %p72 = scmp.eq.s32.totalorder %s17, 3
    %p73 = por %p71, %p72
    %p75 = scmp.ne.s32.totalorder %s60, %s74
    %p76 = scmp.eq.s32.totalorder %s17, 0
    %p77 = por %p75, %p76
    %s79 = sadd.s32 %s78, 1
    %p82 = scmp.eq.s32.totalorder %s11, 3
    %p83 = scmp.ne.s32.totalorder %s78, %s80
    %p84 = scmp.eq.s32.totalorder %s11, 0
    %p85 = por %p83, %p84
    %p86 = scmp.ne.s32.totalorder %s78, %s80
    %p87 = scmp.eq.s32.totalorder %s16, 3
    %p88 = por %p86, %p87
    %p89 = scmp.ne.s32.totalorder %s80, %s81
    %p90 = scmp.eq.s32.totalorder %s16, 0
    %p91 = por %p89, %p90
    %p92 = scmp.ne.s32.totalorder %s80, %s81
    %p93 = scmp.eq.s32.totalorder %s17, 3
    %p94 = por %p92, %p93
    %p96 = scmp.ne.s32.totalorder %s81, %s95
    %p97 = scmp.eq.s32.totalorder %s17, 0
    %p98 = por %p96, %p97
    %s99 = smul.u32 %s18, 2
    %s100 = sadd.s32 %s99, %s19
    %s101 = smul.u32 %s30, 2
    %s102 = sadd.s32 %s101, %s26
    %s103 = ssub.s32 %s100, %s102
    %p104 = scmp.eq.s32.totalorder %s103, 0
    %s106 = sadd.s32 %s105, 1
    %s107 = scalar_select %p104, %s105, %s106
    %p110 = pneg %p104
    %p111 = scmp.eq.s32.totalorder %s11, 3
    %p112 = por %p110, %p111
    %p113 = scmp.ne.s32.totalorder %s105, %s108
    %p114 = scmp.eq.s32.totalorder %s11, 0
    %p115 = por %p113, %p114
    %p116 = scmp.ne.s32.totalorder %s105, %s108
    %p117 = scmp.eq.s32.totalorder %s16, 3
    %p118 = por %p116, %p117
    %p119 = scmp.ne.s32.totalorder %s108, %s109
    %p120 = scmp.eq.s32.totalorder %s16, 0
    %p121 = por %p119, %p120
    %p122 = scmp.ne.s32.totalorder %s108, %s109
    %p123 = scmp.eq.s32.totalorder %s17, 3
    %p124 = por %p122, %p123
    %p126 = scmp.ne.s32.totalorder %s109, %s125
    %p127 = scmp.eq.s32.totalorder %s17, 0
    %p128 = por %p126, %p127
    %s129 = smul.u32 %s18, 2
    %s130 = sadd.s32 %s129, %s19
    %s131 = smul.u32 %s30, 2
    %s132 = sadd.s32 %s131, %s26
    %s133 = ssub.s32 %s130, %s132
    %p134 = scmp.eq.s32.totalorder %s133, 0
    %s136 = sadd.s32 %s135, 1
    %s137 = scalar_select %p134, %s135, %s136
    %p140 = pneg %p134
    %p141 = scmp.eq.s32.totalorder %s11, 3
    %p142 = por %p140, %p141
    %p143 = scmp.ne.s32.totalorder %s135, %s138
    %p144 = scmp.eq.s32.totalorder %s11, 0
    %p145 = por %p143, %p144
    %p146 = scmp.ne.s32.totalorder %s135, %s138
    %p147 = scmp.eq.s32.totalorder %s16, 3
    %p148 = por %p146, %p147
    %p149 = scmp.ne.s32.totalorder %s138, %s139
    %p150 = scmp.eq.s32.totalorder %s16, 0
    %p151 = por %p149, %p150
    %p152 = scmp.ne.s32.totalorder %s138, %s139
    %p153 = scmp.eq.s32.totalorder %s17, 3
    %p154 = por %p152, %p153
    %p156 = scmp.ne.s32.totalorder %s139, %s155
    %p157 = scmp.eq.s32.totalorder %s17, 0
    %p158 = por %p156, %p157
    %p159 = scmp.le.s32.totalorder 1, %s11
    %p160 = scmp.lt.s32.totalorder %s11, 5
    %p161 = pnand %p159, %p160
    %p162 = pneg %p161
    // Predicated region
    $region9: #{_lambda_.7} parent=5 // pred_check
      _
    $region10: #{_lambda_.7} parent=5 // pred_check_branch
      %164 = sbr.rel (%p161) target = $region12
    $region11: #{_lambda_.7} parent=5 // pred_region
      %s165 = ssub.s32 %s11, 1
      // Predicated region
      $region13: #{_lambda_.7} parent=11 // pred_check
        %p166 = pneg %p70
      $region14: #{_lambda_.7} parent=11 // pred_check_branch
        %168 = sbr.rel (%p166) target = $region16
      $region15: #{_lambda_.7} parent=11 // pred_region
        _
      $region16: #{_lambda_.7} parent=11 // pred_fallthru
        _
      // Predicated region
      $region17: #{_lambda_.7} parent=11 // pred_check
        %p169 = pneg %p91
      $region18: #{_lambda_.7} parent=11 // pred_check_branch
        %171 = sbr.rel (%p169) target = $region20
      $region19: #{_lambda_.7} parent=11 // pred_region
        _
      $region20: #{_lambda_.7} parent=11 // pred_fallthru
        _
    $region12: #{_lambda_.7} parent=5 // pred_fallthru
      _
    %p172 = scmp.lt.s32.totalorder %s11, 4
    // Predicated region
    $region21: #{_lambda_.7} parent=5 // pred_check
      %p173 = pneg %p172
    $region22: #{_lambda_.7} parent=5 // pred_check_branch
      %175 = sbr.rel (%p173) target = $region24
    $region23: #{_lambda_.7} parent=5 // pred_region
      // Predicated region
      $region25: #{_lambda_.7} parent=23 // pred_check
        %p176 = pneg %p43
      $region26: #{_lambda_.7} parent=23 // pred_check_branch
        %178 = sbr.rel (%p176) target = $region28
      $region27: #{_lambda_.7} parent=23 // pred_region
        %p179 = scmp.lt.s32.totalorder %s18, 1
        %s180 = scalar_select %p179, %s18, 1
        %s181 = smul.addr %s180, 54
        %s182 = smul.addr %s181, 8
        %s183 = scalar_lea.vmem %s0, %s182
      $region28: #{_lambda_.7} parent=23 // pred_fallthru
        _
    $region24: #{_lambda_.7} parent=5 // pred_fallthru
      _
    %p184 = scmp.le.s32.totalorder 1, %s11
    %p185 = scmp.lt.s32.totalorder %s11, 5
    %p186 = pnand %p184, %p185
    %p187 = pneg %p186
    // Predicated region
    $region29: #{_lambda_.7} parent=5 // pred_check
      _
    $region30: #{_lambda_.7} parent=5 // pred_check_branch
      %189 = sbr.rel (%p186) target = $region32
    $region31: #{_lambda_.7} parent=5 // pred_region
      %s190 = ssub.s32 %s11, 1
      %p191 = scmp.lt.s32.totalorder %s20, 1
      %s192 = scalar_select %p191, %s20, 1
      %s193 = smul.addr %s192, 54
      %s194 = smul.addr %s193, 8
      %s195 = scalar_lea.vmem %s0, %s194
      %p196 = pneg %p49
      %p197 = pneg %p46
      %p198 = pneg %p70
      %p199 = pneg %p67
      %p200 = pneg %p91
      %p201 = pneg %p88
      %p202 = pneg %p121
      %p203 = pneg %p118
      %s204 = smul.u32 %s20, 2
      %s205 = sadd.s32 %s204, %s21
      %s206 = smul.u32 16, %s205
      %p207 = scmp.lt.s32.totalorder %s206, 63
      %s208 = scalar_select %p207, %s206, 63
      %s209 = smul.addr %s208, 8
      %s210 = scalar_lea.vmem %s3, %s209
      %p211 = pneg %p151
      %p212 = pneg %p148
      %s213 = smul.u32 %s20, 2
      %s214 = sadd.s32 %s213, %s21
      %s215 = smul.u32 16, %s214
      %p216 = scmp.lt.s32.totalorder %s215, 63
      %s217 = scalar_select %p216, %s215, 63
      %s218 = smul.addr %s217, 8
      %s219 = scalar_lea.vmem %s4, %s218
      %p220 = scmp.lt.s32.totalorder %s20, 1
      %s221 = scalar_select %p220, %s20, 1
      %s222 = smul.addr %s221, 54
      %s223 = smul.addr %s222, 8
      %s224 = scalar_lea.vmem %s0, %s223
      %s225 = smul.u32 %s20, 2
      %s226 = sadd.s32 %s225, %s21
      %s227 = smul.u32 16, %s226
      %p228 = scmp.lt.s32.totalorder %s227, 63
      %s229 = scalar_select %p228, %s227, 63
      %s230 = smul.addr %s229, 8
      %s231 = scalar_lea.vmem %s3, %s230
      %s232 = smul.u32 %s20, 2
      %s233 = sadd.s32 %s232, %s21
      %s234 = smul.u32 16, %s233
      %s235 = smul.u32 %s20, 2
      %s236 = sadd.s32 %s235, %s21
      %s237 = smul.u32 16, %s236
      %p238 = scmp.lt.s32.totalorder %s237, 63
      %s239 = scalar_select %p238, %s237, 63
      %s240 = smul.addr %s239, 8
      %s241 = scalar_lea.vmem %s4, %s240
      %s242 = smul.u32 %s20, 2
      %s243 = sadd.s32 %s242, %s21
      %s244 = smul.u32 16, %s243
      %s246 = smul.u32 %s21, 8
      %s247 = smul.u32 %s246, 24
      %s248 = scalar_lea.vmem %s224, %s247
      %v249 = vld [vmem:[%s248] sm:$0xff]
      %v250 = vld [vmem:[%s248 + $0x8] sm:$0xff]
      %v251 = vld [vmem:[%s248 + $0x18] sm:$0xff]
      %v252 = vld [vmem:[%s248 + $0x20] sm:$0xff]
      %v253 = vld [vmem:[%s248 + $0x30] sm:$0xff]
      %v254 = vld [vmem:[%s248 + $0x38] sm:$0xff]
      %v255 = vld [vmem:[%s248 + $0x48] sm:$0xff]
      %v256 = vld [vmem:[%s248 + $0x50] sm:$0xff]
      %v257 = vld [vmem:[%s248 + $0x60] sm:$0xff]
      %v258 = vld [vmem:[%s248 + $0x68] sm:$0xff]
      %v259 = vld [vmem:[%s248 + $0x78] sm:$0xff]
      %v260 = vld [vmem:[%s248 + $0x80] sm:$0xff]
      %v261 = vld [vmem:[%s248 + $0x90] sm:$0xff]
      %v262 = vld [vmem:[%s248 + $0x98] sm:$0xff]
      %v263 = vld [vmem:[%s248 + $0xa8] sm:$0xff]
      %v264 = vld [vmem:[%s248 + $0xb0] sm:$0xff]
      %v265 = vld [vmem:[%s248 + $0x1] sm:$0xff]
      %v266 = vld [vmem:[%s248 + $0x9] sm:$0xff]
      %v267 = vld [vmem:[%s248 + $0x19] sm:$0xff]
      %v268 = vld [vmem:[%s248 + $0x21] sm:$0xff]
      %v269 = vld [vmem:[%s248 + $0x31] sm:$0xff]
      %v270 = vld [vmem:[%s248 + $0x39] sm:$0xff]
      %v271 = vld [vmem:[%s248 + $0x49] sm:$0xff]
      %v272 = vld [vmem:[%s248 + $0x51] sm:$0xff]
      %v273 = vld [vmem:[%s248 + $0x61] sm:$0xff]
      %v274 = vld [vmem:[%s248 + $0x69] sm:$0xff]
      %v275 = vld [vmem:[%s248 + $0x79] sm:$0xff]
      %v276 = vld [vmem:[%s248 + $0x81] sm:$0xff]
      %v277 = vld [vmem:[%s248 + $0x91] sm:$0xff]
      %v278 = vld [vmem:[%s248 + $0x99] sm:$0xff]
      %v279 = vld [vmem:[%s248 + $0xa9] sm:$0xff]
      %v280 = vld [vmem:[%s248 + $0xb1] sm:$0xff]
      %v281 = vld [vmem:[%s248 + $0x2] sm:$0xff]
      %v282 = vld [vmem:[%s248 + $0xa] sm:$0xff]
      %v283 = vld [vmem:[%s248 + $0x1a] sm:$0xff]
      %v284 = vld [vmem:[%s248 + $0x22] sm:$0xff]
      %v285 = vld [vmem:[%s248 + $0x32] sm:$0xff]
      %v286 = vld [vmem:[%s248 + $0x3a] sm:$0xff]
      %v287 = vld [vmem:[%s248 + $0x4a] sm:$0xff]
      %v288 = vld [vmem:[%s248 + $0x52] sm:$0xff]
      %v289 = vld [vmem:[%s248 + $0x62] sm:$0xff]
      %v290 = vld [vmem:[%s248 + $0x6a] sm:$0xff]
      %v291 = vld [vmem:[%s248 + $0x7a] sm:$0xff]
      %v292 = vld [vmem:[%s248 + $0x82] sm:$0xff]
      %v293 = vld [vmem:[%s248 + $0x92] sm:$0xff]
      %v294 = vld [vmem:[%s248 + $0x9a] sm:$0xff]
      %v295 = vld [vmem:[%s248 + $0xaa] sm:$0xff]
      %v296 = vld [vmem:[%s248 + $0xb2] sm:$0xff]
      %s297 = sadd.s32 %s246, 1
      %s298 = smul.u32 %s297, 24
      %s299 = scalar_lea.vmem %s224, %s298
      %v300 = vld [vmem:[%s299] sm:$0xff]
      %v301 = vld [vmem:[%s299 + $0x8] sm:$0xff]
      %v302 = vld [vmem:[%s299 + $0x18] sm:$0xff]
      %v303 = vld [vmem:[%s299 + $0x20] sm:$0xff]
      %v304 = vld [vmem:[%s299 + $0x30] sm:$0xff]
      %v305 = vld [vmem:[%s299 + $0x38] sm:$0xff]
      %v306 = vld [vmem:[%s299 + $0x48] sm:$0xff]
      %v307 = vld [vmem:[%s299 + $0x50] sm:$0xff]
      %v308 = vld [vmem:[%s299 + $0x60] sm:$0xff]
      %v309 = vld [vmem:[%s299 + $0x68] sm:$0xff]
      %v310 = vld [vmem:[%s299 + $0x78] sm:$0xff]
      %v311 = vld [vmem:[%s299 + $0x80] sm:$0xff]
      %v312 = vld [vmem:[%s299 + $0x90] sm:$0xff]
      %v313 = vld [vmem:[%s299 + $0x98] sm:$0xff]
      %v314 = vld [vmem:[%s299 + $0xa8] sm:$0xff]
      %v315 = vld [vmem:[%s299 + $0xb0] sm:$0xff]
      %v316 = vld [vmem:[%s299 + $0x1] sm:$0xff]
      %v317 = vld [vmem:[%s299 + $0x9] sm:$0xff]
      %v318 = vld [vmem:[%s299 + $0x19] sm:$0xff]
      %v319 = vld [vmem:[%s299 + $0x21] sm:$0xff]
      %v320 = vld [vmem:[%s299 + $0x31] sm:$0xff]
      %v321 = vld [vmem:[%s299 + $0x39] sm:$0xff]
      %v322 = vld [vmem:[%s299 + $0x49] sm:$0xff]
      %v323 = vld [vmem:[%s299 + $0x51] sm:$0xff]
      %v324 = vld [vmem:[%s299 + $0x61] sm:$0xff]
      %v325 = vld [vmem:[%s299 + $0x69] sm:$0xff]
      %v326 = vld [vmem:[%s299 + $0x79] sm:$0xff]
      %v327 = vld [vmem:[%s299 + $0x81] sm:$0xff]
      %v328 = vld [vmem:[%s299 + $0x91] sm:$0xff]
      %v329 = vld [vmem:[%s299 + $0x99] sm:$0xff]
      %v330 = vld [vmem:[%s299 + $0xa9] sm:$0xff]
      %v331 = vld [vmem:[%s299 + $0xb1] sm:$0xff]
      %v332 = vld [vmem:[%s299 + $0x2] sm:$0xff]
      %v333 = vld [vmem:[%s299 + $0xa] sm:$0xff]
      %v334 = vld [vmem:[%s299 + $0x1a] sm:$0xff]
      %v335 = vld [vmem:[%s299 + $0x22] sm:$0xff]
      %v336 = vld [vmem:[%s299 + $0x32] sm:$0xff]
      %v337 = vld [vmem:[%s299 + $0x3a] sm:$0xff]
      %v338 = vld [vmem:[%s299 + $0x4a] sm:$0xff]
      %v339 = vld [vmem:[%s299 + $0x52] sm:$0xff]
      %v340 = vld [vmem:[%s299 + $0x62] sm:$0xff]
      %v341 = vld [vmem:[%s299 + $0x6a] sm:$0xff]
      %v342 = vld [vmem:[%s299 + $0x7a] sm:$0xff]
      %v343 = vld [vmem:[%s299 + $0x82] sm:$0xff]
      %v344 = vld [vmem:[%s299 + $0x92] sm:$0xff]
      %v345 = vld [vmem:[%s299 + $0x9a] sm:$0xff]
      %v346 = vld [vmem:[%s299 + $0xaa] sm:$0xff]
      %v347 = vld [vmem:[%s299 + $0xb2] sm:$0xff]
      %s348 = sadd.s32 %s246, 2
      %s349 = smul.u32 %s348, 24
      %s350 = scalar_lea.vmem %s224, %s349
      %v351 = vld [vmem:[%s350] sm:$0xff]
      %v352 = vld [vmem:[%s350 + $0x8] sm:$0xff]
      %v353 = vld [vmem:[%s350 + $0x18] sm:$0xff]
      %v354 = vld [vmem:[%s350 + $0x20] sm:$0xff]
      %v355 = vld [vmem:[%s350 + $0x30] sm:$0xff]
      %v356 = vld [vmem:[%s350 + $0x38] sm:$0xff]
      %v357 = vld [vmem:[%s350 + $0x48] sm:$0xff]
      %v358 = vld [vmem:[%s350 + $0x50] sm:$0xff]
      %v359 = vld [vmem:[%s350 + $0x60] sm:$0xff]
      %v360 = vld [vmem:[%s350 + $0x68] sm:$0xff]
      %v361 = vld [vmem:[%s350 + $0x78] sm:$0xff]
      %v362 = vld [vmem:[%s350 + $0x80] sm:$0xff]
      %v363 = vld [vmem:[%s350 + $0x90] sm:$0xff]
      %v364 = vld [vmem:[%s350 + $0x98] sm:$0xff]
      %v365 = vld [vmem:[%s350 + $0xa8] sm:$0xff]
      %v366 = vld [vmem:[%s350 + $0xb0] sm:$0xff]
      %v367 = vld [vmem:[%s350 + $0x1] sm:$0xff]
      %v368 = vld [vmem:[%s350 + $0x9] sm:$0xff]
      %v369 = vld [vmem:[%s350 + $0x19] sm:$0xff]
      %v370 = vld [vmem:[%s350 + $0x21] sm:$0xff]
      %v371 = vld [vmem:[%s350 + $0x31] sm:$0xff]
      %v372 = vld [vmem:[%s350 + $0x39] sm:$0xff]
      %v373 = vld [vmem:[%s350 + $0x49] sm:$0xff]
      %v374 = vld [vmem:[%s350 + $0x51] sm:$0xff]
      %v375 = vld [vmem:[%s350 + $0x61] sm:$0xff]
      %v376 = vld [vmem:[%s350 + $0x69] sm:$0xff]
      %v377 = vld [vmem:[%s350 + $0x79] sm:$0xff]
      %v378 = vld [vmem:[%s350 + $0x81] sm:$0xff]
      %v379 = vld [vmem:[%s350 + $0x91] sm:$0xff]
      %v380 = vld [vmem:[%s350 + $0x99] sm:$0xff]
      %v381 = vld [vmem:[%s350 + $0xa9] sm:$0xff]
      %v382 = vld [vmem:[%s350 + $0xb1] sm:$0xff]
      %v383 = vld [vmem:[%s350 + $0x2] sm:$0xff]
      %v384 = vld [vmem:[%s350 + $0xa] sm:$0xff]
      %v385 = vld [vmem:[%s350 + $0x1a] sm:$0xff]
      %v386 = vld [vmem:[%s350 + $0x22] sm:$0xff]
      %v387 = vld [vmem:[%s350 + $0x32] sm:$0xff]
      %v388 = vld [vmem:[%s350 + $0x3a] sm:$0xff]
      %v389 = vld [vmem:[%s350 + $0x4a] sm:$0xff]
      %v390 = vld [vmem:[%s350 + $0x52] sm:$0xff]
      %v391 = vld [vmem:[%s350 + $0x62] sm:$0xff]
      %v392 = vld [vmem:[%s350 + $0x6a] sm:$0xff]
      %v393 = vld [vmem:[%s350 + $0x7a] sm:$0xff]
      %v394 = vld [vmem:[%s350 + $0x82] sm:$0xff]
      %v395 = vld [vmem:[%s350 + $0x92] sm:$0xff]
      %v396 = vld [vmem:[%s350 + $0x9a] sm:$0xff]
      %v397 = vld [vmem:[%s350 + $0xaa] sm:$0xff]
      %v398 = vld [vmem:[%s350 + $0xb2] sm:$0xff]
      %415 = vrot.lane.b32.xlu0 %v265, 8
      %v416 = vpop.permute.xlu0 %415
      %417 = vrot.lane.b32.xlu0 %v266, 8
      %v418 = vpop.permute.xlu0 %417
      %419 = vrot.lane.b32.xlu0 %v267, 8
      %v420 = vpop.permute.xlu0 %419
      %421 = vrot.lane.b32.xlu0 %v268, 8
      %v422 = vpop.permute.xlu0 %421
      %423 = vrot.lane.b32.xlu0 %v269, 8
      %v424 = vpop.permute.xlu0 %423
      %425 = vrot.lane.b32.xlu0 %v270, 8
      %v426 = vpop.permute.xlu0 %425
      %427 = vrot.lane.b32.xlu0 %v271, 8
      %v428 = vpop.permute.xlu0 %427
      %429 = vrot.lane.b32.xlu0 %v272, 8
      %v430 = vpop.permute.xlu0 %429
      %431 = vrot.lane.b32.xlu0 %v273, 8
      %v432 = vpop.permute.xlu0 %431
      %433 = vrot.lane.b32.xlu0 %v274, 8
      %v434 = vpop.permute.xlu0 %433
      %435 = vrot.lane.b32.xlu0 %v275, 8
      %v436 = vpop.permute.xlu0 %435
      %437 = vrot.lane.b32.xlu0 %v276, 8
      %v438 = vpop.permute.xlu0 %437
      %439 = vrot.lane.b32.xlu0 %v277, 8
      %v440 = vpop.permute.xlu0 %439
      %441 = vrot.lane.b32.xlu0 %v278, 8
      %v442 = vpop.permute.xlu0 %441
      %443 = vrot.lane.b32.xlu0 %v279, 8
      %v444 = vpop.permute.xlu0 %443
      %445 = vrot.lane.b32.xlu0 %v280, 8
      %v446 = vpop.permute.xlu0 %445
      %479 = vrot.lane.b32.xlu0 %v281, 16
      %v480 = vpop.permute.xlu0 %479
      %481 = vrot.lane.b32.xlu0 %v282, 16
      %v482 = vpop.permute.xlu0 %481
      %483 = vrot.lane.b32.xlu0 %v283, 16
      %v484 = vpop.permute.xlu0 %483
      %485 = vrot.lane.b32.xlu0 %v284, 16
      %v486 = vpop.permute.xlu0 %485
      %487 = vrot.lane.b32.xlu0 %v285, 16
      %v488 = vpop.permute.xlu0 %487
      %489 = vrot.lane.b32.xlu0 %v286, 16
      %v490 = vpop.permute.xlu0 %489
      %491 = vrot.lane.b32.xlu0 %v287, 16
      %v492 = vpop.permute.xlu0 %491
      %493 = vrot.lane.b32.xlu0 %v288, 16
      %v494 = vpop.permute.xlu0 %493
      %495 = vrot.lane.b32.xlu0 %v289, 16
      %v496 = vpop.permute.xlu0 %495
      %497 = vrot.lane.b32.xlu0 %v290, 16
      %v498 = vpop.permute.xlu0 %497
      %499 = vrot.lane.b32.xlu0 %v291, 16
      %v500 = vpop.permute.xlu0 %499
      %501 = vrot.lane.b32.xlu0 %v292, 16
      %v502 = vpop.permute.xlu0 %501
      %503 = vrot.lane.b32.xlu0 %v293, 16
      %v504 = vpop.permute.xlu0 %503
      %505 = vrot.lane.b32.xlu0 %v294, 16
      %v506 = vpop.permute.xlu0 %505
      %507 = vrot.lane.b32.xlu0 %v295, 16
      %v508 = vpop.permute.xlu0 %507
      %509 = vrot.lane.b32.xlu0 %v296, 16
      %v510 = vpop.permute.xlu0 %509
      %543 = vrot.lane.b32.xlu0 %v300, 24
      %v544 = vpop.permute.xlu0 %543
      %545 = vrot.lane.b32.xlu0 %v301, 24
      %v546 = vpop.permute.xlu0 %545
      %547 = vrot.lane.b32.xlu0 %v302, 24
      %v548 = vpop.permute.xlu0 %547
      %549 = vrot.lane.b32.xlu0 %v303, 24
      %v550 = vpop.permute.xlu0 %549
      %551 = vrot.lane.b32.xlu0 %v304, 24
      %v552 = vpop.permute.xlu0 %551
      %553 = vrot.lane.b32.xlu0 %v305, 24
      %v554 = vpop.permute.xlu0 %553
      %555 = vrot.lane.b32.xlu0 %v306, 24
      %v556 = vpop.permute.xlu0 %555
      %557 = vrot.lane.b32.xlu0 %v307, 24
      %v558 = vpop.permute.xlu0 %557
      %559 = vrot.lane.b32.xlu0 %v308, 24
      %v560 = vpop.permute.xlu0 %559
      %561 = vrot.lane.b32.xlu0 %v309, 24
      %v562 = vpop.permute.xlu0 %561
      %563 = vrot.lane.b32.xlu0 %v310, 24
      %v564 = vpop.permute.xlu0 %563
      %565 = vrot.lane.b32.xlu0 %v311, 24
      %v566 = vpop.permute.xlu0 %565
      %567 = vrot.lane.b32.xlu0 %v312, 24
      %v568 = vpop.permute.xlu0 %567
      %569 = vrot.lane.b32.xlu0 %v313, 24
      %v570 = vpop.permute.xlu0 %569
      %571 = vrot.lane.b32.xlu0 %v314, 24
      %v572 = vpop.permute.xlu0 %571
      %573 = vrot.lane.b32.xlu0 %v315, 24
      %v574 = vpop.permute.xlu0 %573
      %607 = vrot.lane.b32.xlu0 %v316, 32
      %v608 = vpop.permute.xlu0 %607
      %609 = vrot.lane.b32.xlu0 %v317, 32
      %v610 = vpop.permute.xlu0 %609
      %611 = vrot.lane.b32.xlu0 %v318, 32
      %v612 = vpop.permute.xlu0 %611
      %613 = vrot.lane.b32.xlu0 %v319, 32
      %v614 = vpop.permute.xlu0 %613
      %615 = vrot.lane.b32.xlu0 %v320, 32
      %v616 = vpop.permute.xlu0 %615
      %617 = vrot.lane.b32.xlu0 %v321, 32
      %v618 = vpop.permute.xlu0 %617
      %619 = vrot.lane.b32.xlu0 %v322, 32
      %v620 = vpop.permute.xlu0 %619
      %621 = vrot.lane.b32.xlu0 %v323, 32
      %v622 = vpop.permute.xlu0 %621
      %623 = vrot.lane.b32.xlu0 %v324, 32
      %v624 = vpop.permute.xlu0 %623
      %625 = vrot.lane.b32.xlu0 %v325, 32
      %v626 = vpop.permute.xlu0 %625
      %627 = vrot.lane.b32.xlu0 %v326, 32
      %v628 = vpop.permute.xlu0 %627
      %629 = vrot.lane.b32.xlu0 %v327, 32
      %v630 = vpop.permute.xlu0 %629
      %631 = vrot.lane.b32.xlu0 %v328, 32
      %v632 = vpop.permute.xlu0 %631
      %633 = vrot.lane.b32.xlu0 %v329, 32
      %v634 = vpop.permute.xlu0 %633
      %635 = vrot.lane.b32.xlu0 %v330, 32
      %v636 = vpop.permute.xlu0 %635
      %637 = vrot.lane.b32.xlu0 %v331, 32
      %v638 = vpop.permute.xlu0 %637
      %671 = vrot.lane.b32.xlu0 %v332, 40
      %v672 = vpop.permute.xlu0 %671
      %673 = vrot.lane.b32.xlu0 %v333, 40
      %v674 = vpop.permute.xlu0 %673
      %675 = vrot.lane.b32.xlu0 %v334, 40
      %v676 = vpop.permute.xlu0 %675
      %677 = vrot.lane.b32.xlu0 %v335, 40
      %v678 = vpop.permute.xlu0 %677
      %679 = vrot.lane.b32.xlu0 %v336, 40
      %v680 = vpop.permute.xlu0 %679
      %681 = vrot.lane.b32.xlu0 %v337, 40
      %v682 = vpop.permute.xlu0 %681
      %683 = vrot.lane.b32.xlu0 %v338, 40
      %v684 = vpop.permute.xlu0 %683
      %685 = vrot.lane.b32.xlu0 %v339, 40
      %v686 = vpop.permute.xlu0 %685
      %687 = vrot.lane.b32.xlu0 %v340, 40
      %v688 = vpop.permute.xlu0 %687
      %689 = vrot.lane.b32.xlu0 %v341, 40
      %v690 = vpop.permute.xlu0 %689
      %691 = vrot.lane.b32.xlu0 %v342, 40
      %v692 = vpop.permute.xlu0 %691
      %693 = vrot.lane.b32.xlu0 %v343, 40
      %v694 = vpop.permute.xlu0 %693
      %695 = vrot.lane.b32.xlu0 %v344, 40
      %v696 = vpop.permute.xlu0 %695
      %697 = vrot.lane.b32.xlu0 %v345, 40
      %v698 = vpop.permute.xlu0 %697
      %699 = vrot.lane.b32.xlu0 %v346, 40
      %v700 = vpop.permute.xlu0 %699
      %701 = vrot.lane.b32.xlu0 %v347, 40
      %v702 = vpop.permute.xlu0 %701
      %735 = vrot.lane.b32.xlu0 %v351, 48
      %v736 = vpop.permute.xlu0 %735
      %737 = vrot.lane.b32.xlu0 %v352, 48
      %v738 = vpop.permute.xlu0 %737
      %739 = vrot.lane.b32.xlu0 %v353, 48
      %v740 = vpop.permute.xlu0 %739
      %741 = vrot.lane.b32.xlu0 %v354, 48
      %v742 = vpop.permute.xlu0 %741
      %743 = vrot.lane.b32.xlu0 %v355, 48
      %v744 = vpop.permute.xlu0 %743
      %745 = vrot.lane.b32.xlu0 %v356, 48
      %v746 = vpop.permute.xlu0 %745
      %747 = vrot.lane.b32.xlu0 %v357, 48
      %v748 = vpop.permute.xlu0 %747
      %749 = vrot.lane.b32.xlu0 %v358, 48
      %v750 = vpop.permute.xlu0 %749
      %751 = vrot.lane.b32.xlu0 %v359, 48
      %v752 = vpop.permute.xlu0 %751
      %753 = vrot.lane.b32.xlu0 %v360, 48
      %v754 = vpop.permute.xlu0 %753
      %755 = vrot.lane.b32.xlu0 %v361, 48
      %v756 = vpop.permute.xlu0 %755
      %757 = vrot.lane.b32.xlu0 %v362, 48
      %v758 = vpop.permute.xlu0 %757
      %759 = vrot.lane.b32.xlu0 %v363, 48
      %v760 = vpop.permute.xlu0 %759
      %761 = vrot.lane.b32.xlu0 %v364, 48
      %v762 = vpop.permute.xlu0 %761
      %763 = vrot.lane.b32.xlu0 %v365, 48
      %v764 = vpop.permute.xlu0 %763
      %765 = vrot.lane.b32.xlu0 %v366, 48
      %v766 = vpop.permute.xlu0 %765
      %799 = vrot.lane.b32.xlu0 %v367, 56
      %v800 = vpop.permute.xlu0 %799
      %801 = vrot.lane.b32.xlu0 %v368, 56
      %v802 = vpop.permute.xlu0 %801
      %803 = vrot.lane.b32.xlu0 %v369, 56
      %v804 = vpop.permute.xlu0 %803
      %805 = vrot.lane.b32.xlu0 %v370, 56
      %v806 = vpop.permute.xlu0 %805
      %807 = vrot.lane.b32.xlu0 %v371, 56
      %v808 = vpop.permute.xlu0 %807
      %809 = vrot.lane.b32.xlu0 %v372, 56
      %v810 = vpop.permute.xlu0 %809
      %811 = vrot.lane.b32.xlu0 %v373, 56
      %v812 = vpop.permute.xlu0 %811
      %813 = vrot.lane.b32.xlu0 %v374, 56
      %v814 = vpop.permute.xlu0 %813
      %815 = vrot.lane.b32.xlu0 %v375, 56
      %v816 = vpop.permute.xlu0 %815
      %817 = vrot.lane.b32.xlu0 %v376, 56
      %v818 = vpop.permute.xlu0 %817
      %819 = vrot.lane.b32.xlu0 %v377, 56
      %v820 = vpop.permute.xlu0 %819
      %821 = vrot.lane.b32.xlu0 %v378, 56
      %v822 = vpop.permute.xlu0 %821
      %823 = vrot.lane.b32.xlu0 %v379, 56
      %v824 = vpop.permute.xlu0 %823
      %825 = vrot.lane.b32.xlu0 %v380, 56
      %v826 = vpop.permute.xlu0 %825
      %827 = vrot.lane.b32.xlu0 %v381, 56
      %v828 = vpop.permute.xlu0 %827
      %829 = vrot.lane.b32.xlu0 %v382, 56
      %v830 = vpop.permute.xlu0 %829
      %863 = vrot.lane.b32.xlu0 %v383, 64
      %v864 = vpop.permute.xlu0 %863
      %865 = vrot.lane.b32.xlu0 %v384, 64
      %v866 = vpop.permute.xlu0 %865
      %867 = vrot.lane.b32.xlu0 %v385, 64
      %v868 = vpop.permute.xlu0 %867
      %869 = vrot.lane.b32.xlu0 %v386, 64
      %v870 = vpop.permute.xlu0 %869
      %871 = vrot.lane.b32.xlu0 %v387, 64
      %v872 = vpop.permute.xlu0 %871
      %873 = vrot.lane.b32.xlu0 %v388, 64
      %v874 = vpop.permute.xlu0 %873
      %875 = vrot.lane.b32.xlu0 %v389, 64
      %v876 = vpop.permute.xlu0 %875
      %877 = vrot.lane.b32.xlu0 %v390, 64
      %v878 = vpop.permute.xlu0 %877
      %879 = vrot.lane.b32.xlu0 %v391, 64
      %v880 = vpop.permute.xlu0 %879
      %881 = vrot.lane.b32.xlu0 %v392, 64
      %v882 = vpop.permute.xlu0 %881
      %883 = vrot.lane.b32.xlu0 %v393, 64
      %v884 = vpop.permute.xlu0 %883
      %885 = vrot.lane.b32.xlu0 %v394, 64
      %v886 = vpop.permute.xlu0 %885
      %887 = vrot.lane.b32.xlu0 %v395, 64
      %v888 = vpop.permute.xlu0 %887
      %889 = vrot.lane.b32.xlu0 %v396, 64
      %v890 = vpop.permute.xlu0 %889
      %891 = vrot.lane.b32.xlu0 %v397, 64
      %v892 = vpop.permute.xlu0 %891
      %893 = vrot.lane.b32.xlu0 %v398, 64
      %v894 = vpop.permute.xlu0 %893
      %vm911 = vcmask 64512
      %v912 = vsel %vm911, %v249, %v416
      %v913 = vsel %vm911, %v250, %v418
      %v914 = vsel %vm911, %v251, %v420
      %v915 = vsel %vm911, %v252, %v422
      %v916 = vsel %vm911, %v253, %v424
      %v917 = vsel %vm911, %v254, %v426
      %v918 = vsel %vm911, %v255, %v428
      %v919 = vsel %vm911, %v256, %v430
      %v920 = vsel %vm911, %v257, %v432
      %v921 = vsel %vm911, %v258, %v434
      %v922 = vsel %vm911, %v259, %v436
      %v923 = vsel %vm911, %v260, %v438
      %v924 = vsel %vm911, %v261, %v440
      %v925 = vsel %vm911, %v262, %v442
      %v926 = vsel %vm911, %v263, %v444
      %v927 = vsel %vm911, %v264, %v446
      %vm928 = vcmask 130048
      %v929 = vsel %vm928, %v912, %v480
      %v930 = vsel %vm928, %v913, %v482
      %v931 = vsel %vm928, %v914, %v484
      %v932 = vsel %vm928, %v915, %v486
      %v933 = vsel %vm928, %v916, %v488
      %v934 = vsel %vm928, %v917, %v490
      %v935 = vsel %vm928, %v918, %v492
      %v936 = vsel %vm928, %v919, %v494
      %v937 = vsel %vm928, %v920, %v496
      %v938 = vsel %vm928, %v921, %v498
      %v939 = vsel %vm928, %v922, %v500
      %v940 = vsel %vm928, %v923, %v502
      %v941 = vsel %vm928, %v924, %v504
      %v942 = vsel %vm928, %v925, %v506
      %v943 = vsel %vm928, %v926, %v508
      %v944 = vsel %vm928, %v927, %v510
      %vm945 = vcmask 195584
      %v946 = vsel %vm945, %v929, %v544
      %v947 = vsel %vm945, %v930, %v546
      %v948 = vsel %vm945, %v931, %v548
      %v949 = vsel %vm945, %v932, %v550
      %v950 = vsel %vm945, %v933, %v552
      %v951 = vsel %vm945, %v934, %v554
      %v952 = vsel %vm945, %v935, %v556
      %v953 = vsel %vm945, %v936, %v558
      %v954 = vsel %vm945, %v937, %v560
      %v955 = vsel %vm945, %v938, %v562
      %v956 = vsel %vm945, %v939, %v564
      %v957 = vsel %vm945, %v940, %v566
      %v958 = vsel %vm945, %v941, %v568
      %v959 = vsel %vm945, %v942, %v570
      %v960 = vsel %vm945, %v943, %v572
      %v961 = vsel %vm945, %v944, %v574
      %vm962 = vcmask 261120
      %v963 = vsel %vm962, %v946, %v608
      %v964 = vsel %vm962, %v947, %v610
      %v965 = vsel %vm962, %v948, %v612
      %v966 = vsel %vm962, %v949, %v614
      %v967 = vsel %vm962, %v950, %v616
      %v968 = vsel %vm962, %v951, %v618
      %v969 = vsel %vm962, %v952, %v620
      %v970 = vsel %vm962, %v953, %v622
      %v971 = vsel %vm962, %v954, %v624
      %v972 = vsel %vm962, %v955, %v626
      %v973 = vsel %vm962, %v956, %v628
      %v974 = vsel %vm962, %v957, %v630
      %v975 = vsel %vm962, %v958, %v632
      %v976 = vsel %vm962, %v959, %v634
      %v977 = vsel %vm962, %v960, %v636
      %v978 = vsel %vm962, %v961, %v638
      %vm979 = vcmask 326656
      %v980 = vsel %vm979, %v963, %v672
      %v981 = vsel %vm979, %v964, %v674
      %v982 = vsel %vm979, %v965, %v676
      %v983 = vsel %vm979, %v966, %v678
      %v984 = vsel %vm979, %v967, %v680
      %v985 = vsel %vm979, %v968, %v682
      %v986 = vsel %vm979, %v969, %v684
      %v987 = vsel %vm979, %v970, %v686
      %v988 = vsel %vm979, %v971, %v688
      %v989 = vsel %vm979, %v972, %v690
      %v990 = vsel %vm979, %v973, %v692
      %v991 = vsel %vm979, %v974, %v694
      %v992 = vsel %vm979, %v975, %v696
      %v993 = vsel %vm979, %v976, %v698
      %v994 = vsel %vm979, %v977, %v700
      %v995 = vsel %vm979, %v978, %v702
      %vm996 = vcmask 392192
      %v997 = vsel %vm996, %v980, %v736
      %v998 = vsel %vm996, %v981, %v738
      %v999 = vsel %vm996, %v982, %v740
      %v1000 = vsel %vm996, %v983, %v742
      %v1001 = vsel %vm996, %v984, %v744
      %v1002 = vsel %vm996, %v985, %v746
      %v1003 = vsel %vm996, %v986, %v748
      %v1004 = vsel %vm996, %v987, %v750
      %v1005 = vsel %vm996, %v988, %v752
      %v1006 = vsel %vm996, %v989, %v754
      %v1007 = vsel %vm996, %v990, %v756
      %v1008 = vsel %vm996, %v991, %v758
      %v1009 = vsel %vm996, %v992, %v760
      %v1010 = vsel %vm996, %v993, %v762
      %v1011 = vsel %vm996, %v994, %v764
      %v1012 = vsel %vm996, %v995, %v766
      %vm1013 = vcmask 457728
      %v1014 = vsel %vm1013, %v997, %v800
      %v1015 = vsel %vm1013, %v998, %v802
      %v1016 = vsel %vm1013, %v999, %v804
      %v1017 = vsel %vm1013, %v1000, %v806
      %v1018 = vsel %vm1013, %v1001, %v808
      %v1019 = vsel %vm1013, %v1002, %v810
      %v1020 = vsel %vm1013, %v1003, %v812
      %v1021 = vsel %vm1013, %v1004, %v814
      %v1022 = vsel %vm1013, %v1005, %v816
      %v1023 = vsel %vm1013, %v1006, %v818
      %v1024 = vsel %vm1013, %v1007, %v820
      %v1025 = vsel %vm1013, %v1008, %v822
      %v1026 = vsel %vm1013, %v1009, %v824
      %v1027 = vsel %vm1013, %v1010, %v826
      %v1028 = vsel %vm1013, %v1011, %v828
      %v1029 = vsel %vm1013, %v1012, %v830
      %vm1030 = vcmask 523264
      %v1031 = vsel %vm1030, %v1014, %v864
      %v1032 = vsel %vm1030, %v1015, %v866
      %v1033 = vsel %vm1030, %v1016, %v868
      %v1034 = vsel %vm1030, %v1017, %v870
      %v1035 = vsel %vm1030, %v1018, %v872
      %v1036 = vsel %vm1030, %v1019, %v874
      %v1037 = vsel %vm1030, %v1020, %v876
      %v1038 = vsel %vm1030, %v1021, %v878
      %v1039 = vsel %vm1030, %v1022, %v880
      %v1040 = vsel %vm1030, %v1023, %v882
      %v1041 = vsel %vm1030, %v1024, %v884
      %v1042 = vsel %vm1030, %v1025, %v886
      %v1043 = vsel %vm1030, %v1026, %v888
      %v1044 = vsel %vm1030, %v1027, %v890
      %v1045 = vsel %vm1030, %v1028, %v892
      %v1046 = vsel %vm1030, %v1029, %v894
      %v1047 = vpack.c.bf16 %v1032, %v1031
      %v1048 = vpack.c.bf16 %v1034, %v1033
      %v1049 = vpack.c.bf16 %v1036, %v1035
      %v1050 = vpack.c.bf16 %v1038, %v1037
      %v1051 = vpack.c.bf16 %v1040, %v1039
      %v1052 = vpack.c.bf16 %v1042, %v1041
      %v1053 = vpack.c.bf16 %v1044, %v1043
      %v1054 = vpack.c.bf16 %v1046, %v1045
      %v1055 = vld [vmem:[%s1] sm:$0xf]
      %v1056 = vld [vmem:[%s1 + $0x4] sm:$0xf]
      %v1057 = vld [vmem:[%s1 + $0x8] sm:$0xf]
      %v1058 = vld [vmem:[%s1 + $0xc] sm:$0xf]
      %v1059 = vld [vmem:[%s1 + $0x10] sm:$0xf]
      %v1060 = vld [vmem:[%s1 + $0x14] sm:$0xf]
      %v1061 = vld [vmem:[%s1 + $0x18] sm:$0xf]
      %v1062 = vld [vmem:[%s1 + $0x1c] sm:$0xf]
      %v1063 = vld [vmem:[%s1 + $0x20] sm:$0xf]
      %v1064 = vld [vmem:[%s2] sm:$0x1]
      %v1066 = vlaneseq
      %v1067 = vshrl.u32 %v1066, 7
      %v1068 = vsub.s32 0, %v1067
      %v1069 = vrot.slane %v1064, %v1068
      %v1080 = vunpack.c.l.b16 %v1055
      %v1081 = vunpack.c.l.b16 %v1056
      %v1082 = vunpack.c.l.b16 %v1057
      %v1083 = vunpack.c.l.b16 %v1058
      %v1084 = vunpack.c.l.b16 %v1059
      %v1085 = vunpack.c.l.b16 %v1060
      %v1086 = vunpack.c.l.b16 %v1061
      %v1087 = vunpack.c.l.b16 %v1062
      %v1088 = vunpack.c.l.b16 %v1063
      %v1089 = vpack.c.b16 %v1081, %v1080
      %v1090 = vpack.c.b16 %v1083, %v1082
      %v1091 = vpack.c.b16 %v1085, %v1084
      %v1092 = vpack.c.b16 %v1087, %v1086
      %v1093 = vpack.c.b16 %v1088, %v1088
      %vm1098 = vcmask 588800
      %v1100 = vsel %vm1098, %v1047, 0
      %v1103 = vsel %vm1098, %v1048, 0
      %v1106 = vsel %vm1098, %v1049, 0
      %v1109 = vsel %vm1098, %v1050, 0
      %v1112 = vsel %vm1098, %v1051, 0
      %v1115 = vsel %vm1098, %v1052, 0
      %v1118 = vsel %vm1098, %v1053, 0
      %v1121 = vsel %vm1098, %v1054, 0
      %vm1123 = vcmask 1043456
      %v1125 = vsel %vm1123, %v1093, 0
      %1127 = vmatprep.subr.bf16.mxu0 0
      %1128 = vmatpush1.bf16.msra.mxu0 %v1089
      %1129 = vmatprep.subr.bf16.mxu0 0
      %1130 = vmatpush1.bf16.msra.mxu0 %v1090
      %1131 = vmatprep.subr.bf16.mxu0 0
      %1132 = vmatpush1.bf16.msra.mxu0 %v1091
      %1133 = vmatprep.subr.bf16.mxu0 0
      %1134 = vmatpush1.bf16.msra.mxu0 %v1092
      %1135 = vmatprep.subr.bf16.mxu0 0
      %1136 = vmatpush1.bf16.msra.mxu0 %v1125
      %1137 = vmatprep.subr.bf16.mxu0 0
      %1138 = vmatpush1.bf16.msra.mxu0 0
      %1139 = vmatprep.subr.bf16.mxu0 0
      %1140 = vmatpush1.bf16.msra.mxu0 0
      %1141 = vmatprep.subr.bf16.mxu0 0
      %1142 = vmatpush1.bf16.msra.mxu0 0
      %1143 = vmatprep.subr.bf16.mxu0 0
      %1144 = vmatpush1.bf16.msra.mxu0 0
      %1145 = vmatprep.subr.bf16.mxu0 0
      %1146 = vmatpush1.bf16.msra.mxu0 0
      %1147 = vmatprep.subr.bf16.mxu0 0
      %1148 = vmatpush1.bf16.msra.mxu0 0
      %1149 = vmatprep.subr.bf16.mxu0 0
      %1150 = vmatpush1.bf16.msra.mxu0 0
      %1151 = vmatprep.subr.bf16.mxu0 0
      %1152 = vmatpush1.bf16.msra.mxu0 0
      %1153 = vmatprep.subr.bf16.mxu0 0
      %1154 = vmatpush1.bf16.msra.mxu0 0
      %1155 = vmatprep.subr.bf16.mxu0 0
      %1156 = vmatpush1.bf16.msra.mxu0 0
      %1157 = vmatprep.subr.bf16.mxu0 0
      %1158 = vmatpush1.bf16.msra.mxu0 0
      %1159 = vmatprep.mubr.bf16.mxu0 0
      %1160 = vmatmul.mubr.bf16.gmra.mrb[0].mxu0 %v1100
      %v1161 = vpop.f32.mrb[0].mxu0
      %v1162 = vadd.f32 %v1069, %v1161
      %v1163 = vpop.f32.mrb[0].mxu0
      %v1164 = vpop.f32.mrb[0].mxu0
      %v1165 = vadd.f32 %v1069, %v1164
      %v1166 = vpop.f32.mrb[0].mxu0
      %1167 = vmatprep.mubr.bf16.mxu0 0
      %1168 = vmatmul.mubr.bf16.gmra.mrb[0].mxu0 %v1103
      %v1169 = vpop.f32.mrb[0].mxu0
      %v1170 = vadd.f32 %v1069, %v1169
      %v1171 = vpop.f32.mrb[0].mxu0
      %v1172 = vpop.f32.mrb[0].mxu0
      %v1173 = vadd.f32 %v1069, %v1172
      %v1174 = vpop.f32.mrb[0].mxu0
      %1175 = vmatprep.mubr.bf16.mxu0 0
      %1176 = vmatmul.mubr.bf16.gmra.mrb[0].mxu0 %v1106
      %v1177 = vpop.f32.mrb[0].mxu0
      %v1178 = vadd.f32 %v1069, %v1177
      %v1179 = vpop.f32.mrb[0].mxu0
      %v1180 = vpop.f32.mrb[0].mxu0
      %v1181 = vadd.f32 %v1069, %v1180
      %v1182 = vpop.f32.mrb[0].mxu0
      %1183 = vmatprep.mubr.bf16.mxu0 0
      %1184 = vmatmul.mubr.bf16.gmra.mrb[0].mxu0 %v1109
      %v1185 = vpop.f32.mrb[0].mxu0
      %v1186 = vadd.f32 %v1069, %v1185
      %v1187 = vpop.f32.mrb[0].mxu0
      %v1188 = vpop.f32.mrb[0].mxu0
      %v1189 = vadd.f32 %v1069, %v1188
      %v1190 = vpop.f32.mrb[0].mxu0
      %1191 = vmatprep.mubr.bf16.mxu0 0
      %1192 = vmatmul.mubr.bf16.gmra.mrb[0].mxu0 %v1112
      %v1193 = vpop.f32.mrb[0].mxu0
      %v1194 = vadd.f32 %v1069, %v1193
      %v1195 = vpop.f32.mrb[0].mxu0
      %v1196 = vpop.f32.mrb[0].mxu0
      %v1197 = vadd.f32 %v1069, %v1196
      %v1198 = vpop.f32.mrb[0].mxu0
      %1199 = vmatprep.mubr.bf16.mxu0 0
      %1200 = vmatmul.mubr.bf16.gmra.mrb[0].mxu0 %v1115
      %v1201 = vpop.f32.mrb[0].mxu0
      %v1202 = vadd.f32 %v1069, %v1201
      %v1203 = vpop.f32.mrb[0].mxu0
      %v1204 = vpop.f32.mrb[0].mxu0
      %v1205 = vadd.f32 %v1069, %v1204
      %v1206 = vpop.f32.mrb[0].mxu0
      %1207 = vmatprep.mubr.bf16.mxu0 0
      %1208 = vmatmul.mubr.bf16.gmra.mrb[0].mxu0 %v1118
      %v1209 = vpop.f32.mrb[0].mxu0
      %v1210 = vadd.f32 %v1069, %v1209
      %v1211 = vpop.f32.mrb[0].mxu0
      %v1212 = vpop.f32.mrb[0].mxu0
      %v1213 = vadd.f32 %v1069, %v1212
      %v1214 = vpop.f32.mrb[0].mxu0
      %1215 = vmatprep.mubr.bf16.mxu0 0
      %1216 = vmatmul.mubr.bf16.gmra.mrb[0].mxu0 %v1121
      %v1217 = vpop.f32.mrb[0].mxu0
      %v1218 = vadd.f32 %v1069, %v1217
      %v1219 = vpop.f32.mrb[0].mxu0
      %v1220 = vpop.f32.mrb[0].mxu0
      %v1221 = vadd.f32 %v1069, %v1220
      %v1222 = vpop.f32.mrb[0].mxu0
      %1223 = vdwg.mxu0
      %1224 = vst.msk [vmem:[%s231] sm:$0xff] %vm911, %v1162
      %1225 = vst.msk [vmem:[%s231 + $0x8] sm:$0xff] %vm911, %v1165
      %1226 = vst.msk [vmem:[%s231 + $0x10] sm:$0xff] %vm911, %v1170
      %1227 = vst.msk [vmem:[%s231 + $0x18] sm:$0xff] %vm911, %v1173
      %1228 = vst.msk [vmem:[%s231 + $0x20] sm:$0xff] %vm911, %v1178
      %1229 = vst.msk [vmem:[%s231 + $0x28] sm:$0xff] %vm911, %v1181
      %1230 = vst.msk [vmem:[%s231 + $0x30] sm:$0xff] %vm911, %v1186
      %1231 = vst.msk [vmem:[%s231 + $0x38] sm:$0xff] %vm911, %v1189
      %1232 = vst.msk [vmem:[%s231 + $0x40] sm:$0xff] %vm911, %v1194
      %1233 = vst.msk [vmem:[%s231 + $0x48] sm:$0xff] %vm911, %v1197
      %1234 = vst.msk [vmem:[%s231 + $0x50] sm:$0xff] %vm911, %v1202
      %1235 = vst.msk [vmem:[%s231 + $0x58] sm:$0xff] %vm911, %v1205
      %1236 = vst.msk [vmem:[%s231 + $0x60] sm:$0xff] %vm911, %v1210
      %1237 = vst.msk [vmem:[%s231 + $0x68] sm:$0xff] %vm911, %v1213
      %1238 = vst.msk [vmem:[%s231 + $0x70] sm:$0xff] %vm911, %v1218
      %1239 = vst.msk [vmem:[%s231 + $0x78] sm:$0xff] %vm911, %v1221
      %v1240 = vmax.f32 %v1162, 0.0
      %v1241 = vmax.f32 %v1165, 0.0
      %v1242 = vmax.f32 %v1170, 0.0
      %v1243 = vmax.f32 %v1173, 0.0
      %v1244 = vmax.f32 %v1178, 0.0
      %v1245 = vmax.f32 %v1181, 0.0
      %v1246 = vmax.f32 %v1186, 0.0
      %v1247 = vmax.f32 %v1189, 0.0
      %v1248 = vmax.f32 %v1194, 0.0
      %v1249 = vmax.f32 %v1197, 0.0
      %v1250 = vmax.f32 %v1202, 0.0
      %v1251 = vmax.f32 %v1205, 0.0
      %v1252 = vmax.f32 %v1210, 0.0
      %v1253 = vmax.f32 %v1213, 0.0
      %v1254 = vmax.f32 %v1218, 0.0
      %v1255 = vmax.f32 %v1221, 0.0
      %1256 = vst.msk [vmem:[%s241] sm:$0xff] %vm911, %v1240
      %1257 = vst.msk [vmem:[%s241 + $0x8] sm:$0xff] %vm911, %v1241
      %1258 = vst.msk [vmem:[%s241 + $0x10] sm:$0xff] %vm911, %v1242
      %1259 = vst.msk [vmem:[%s241 + $0x18] sm:$0xff] %vm911, %v1243
      %1260 = vst.msk [vmem:[%s241 + $0x20] sm:$0xff] %vm911, %v1244
      %1261 = vst.msk [vmem:[%s241 + $0x28] sm:$0xff] %vm911, %v1245
      %1262 = vst.msk [vmem:[%s241 + $0x30] sm:$0xff] %vm911, %v1246
      %1263 = vst.msk [vmem:[%s241 + $0x38] sm:$0xff] %vm911, %v1247
      %1264 = vst.msk [vmem:[%s241 + $0x40] sm:$0xff] %vm911, %v1248
      %1265 = vst.msk [vmem:[%s241 + $0x48] sm:$0xff] %vm911, %v1249
      %1266 = vst.msk [vmem:[%s241 + $0x50] sm:$0xff] %vm911, %v1250
      %1267 = vst.msk [vmem:[%s241 + $0x58] sm:$0xff] %vm911, %v1251
      %1268 = vst.msk [vmem:[%s241 + $0x60] sm:$0xff] %vm911, %v1252
      %1269 = vst.msk [vmem:[%s241 + $0x68] sm:$0xff] %vm911, %v1253
      %1270 = vst.msk [vmem:[%s241 + $0x70] sm:$0xff] %vm911, %v1254
      %1271 = vst.msk [vmem:[%s241 + $0x78] sm:$0xff] %vm911, %v1255
      %s1272 = smul.u32 %s20, 2
      %s1273 = sadd.s32 %s1272, %s21
      %s1274 = smul.u32 16, %s1273
      %p1275 = scmp.lt.s32.totalorder %s1274, 63
      %s1276 = scalar_select %p1275, %s1274, 63
      %s1277 = smul.addr %s1276, 8
      %s1278 = scalar_lea.vmem %s3, %s1277
      %s1279 = smul.u32 %s20, 2
      %s1280 = sadd.s32 %s1279, %s21
      %s1281 = smul.u32 16, %s1280
      %p1282 = scmp.lt.s32.totalorder %s1281, 63
      %s1283 = scalar_select %p1282, %s1281, 63
      %s1284 = smul.addr %s1283, 8
      %s1285 = scalar_lea.vmem %s4, %s1284
      // Predicated region
      $region33: #{_lambda_.7} parent=31 // pred_check
        %p1286 = pneg %p118
      $region34: #{_lambda_.7} parent=31 // pred_check_branch
        %1288 = sbr.rel (%p1286) target = $region36
      $region35: #{_lambda_.7} parent=31 // pred_region
        %s1289 = smul.u32 %s20, 2
        %s1290 = sadd.s32 %s1289, %s21
        %s1291 = smul.u32 16, %s1290
      $region36: #{_lambda_.7} parent=31 // pred_fallthru
        _
      // Predicated region
      $region37: #{_lambda_.7} parent=31 // pred_check
        %p1292 = pneg %p148
      $region38: #{_lambda_.7} parent=31 // pred_check_branch
        %1294 = sbr.rel (%p1292) target = $region40
      $region39: #{_lambda_.7} parent=31 // pred_region
        %s1295 = smul.u32 %s20, 2
        %s1296 = sadd.s32 %s1295, %s21
        %s1297 = smul.u32 16, %s1296
      $region40: #{_lambda_.7} parent=31 // pred_fallthru
        _
    $region32: #{_lambda_.7} parent=5 // pred_fallthru
      _
    %p1298 = scmp.le.s32.totalorder 2, %s11
    // Predicated region
    $region41: #{_lambda_.7} parent=5 // pred_check
      %p1299 = pneg %p1298
    $region42: #{_lambda_.7} parent=5 // pred_check_branch
      %1301 = sbr.rel (%p1299) target = $region44
    $region43: #{_lambda_.7} parent=5 // pred_region
      %s1302 = ssub.s32 %s11, 2
      // Predicated region
      $region45: #{_lambda_.7} parent=43 // pred_check
        %p1303 = pneg %p124
      $region46: #{_lambda_.7} parent=43 // pred_check_branch
        %1305 = sbr.rel (%p1303) target = $region48
      $region47: #{_lambda_.7} parent=43 // pred_region
        %s1306 = smul.u32 %s22, 2
        %s1307 = sadd.s32 %s1306, %s23
        %s1308 = smul.u32 16, %s1307
        %p1309 = scmp.lt.s32.totalorder %s1308, 63
        %s1310 = scalar_select %p1309, %s1308, 63
        %s1311 = smul.addr %s1310, 8
        %s1312 = scalar_lea.vmem %s3, %s1311
      $region48: #{_lambda_.7} parent=43 // pred_fallthru
        _
      // Predicated region
      $region49: #{_lambda_.7} parent=43 // pred_check
        %p1313 = pneg %p154
      $region50: #{_lambda_.7} parent=43 // pred_check_branch
        %1315 = sbr.rel (%p1313) target = $region52
      $region51: #{_lambda_.7} parent=43 // pred_region
        %s1316 = smul.u32 %s22, 2
        %s1317 = sadd.s32 %s1316, %s23
        %s1318 = smul.u32 16, %s1317
        %p1319 = scmp.lt.s32.totalorder %s1318, 63
        %s1320 = scalar_select %p1319, %s1318, 63
        %s1321 = smul.addr %s1320, 8
        %s1322 = scalar_lea.vmem %s4, %s1321
      $region52: #{_lambda_.7} parent=43 // pred_fallthru
        _
    $region44: #{_lambda_.7} parent=5 // pred_fallthru
      _
  $region6: #{_lambda_.7} parent=0 // loop_footer
    %s15 = sadd.s32 1, %s11
  $region7: #{_lambda_.7} parent=0 // loop_footer_branch
    %10 = sbr.rel target = $region3
  $region8: #{_lambda_.7} parent=0 // loop_exit
    _

// kernel: _lambda_.9
$region0: #{_lambda_.9}
  #allocation0 [shape = 'u32[]', space=smem, size = 0x4, offset = 0x4, fixed_abs, tag = 'smem constant byte address 0x4 - core index']
  #allocation1 [shape = 'u32[144,128]{1,0:T(1,128)}', space=vmem, size = 0x12000, scoped, tag = 'internal scratch']
  %s0 = inlined_call_operand.vmem [shape: f32[2,10,10,8], index: 0, kind: input, shape index: {}]
  %s1 = inlined_call_operand.vmem [shape: bf16[72,16], index: 1, kind: input, shape index: {}]
  %s2 = inlined_call_operand.vmem [shape: f32[1,16], index: 2, kind: input, shape index: {}]
  %s3 = inlined_call_operand.hbm [shape: f32[128,16], index: 3, kind: output, shape index: {0}]
  %s4 = inlined_call_operand.vmem [shape: f32[128,16], index: 4, kind: output, shape index: {1}]
  %5 = xla_tuple %s3, %s4
  %s6 = sld [smem:[#allocation0]]
  $region53: #{_lambda_.9} parent=0
    _
  %s8 = ssub.s32 1, %s6
  %s9 = scalar_select 0, %s8, %s6
  $region1: #{_lambda_.9} parent=0
    #allocation2 [shape = 'u8[32768]{0}', space=vmem, size = 0x8000, scoped, tag = 'output window, operand 0']
    #allocation3 [shape = 's32[2]{0}', space=sflag, size = 0x8, scoped, tag = 'scoped memory for _lambda_.9']
    %10 = vsyncpa [#allocation3], 0
    %s11 = scalar_lea.sflag [#allocation3], 1
    %12 = vsyncpa %s11, 0
    loop: start=0, step=1, limit=6
    $region2: #{_lambda_.9} parent=1 // loop_pre_header
      _
    $region3: #{_lambda_.9} parent=1 // loop_header
      %s14 = sphi 0, %s18
      %p15 = scmp.ge.s32.totalorder %s14, 6
      %s21 = sphi 0, %s33
      %s22 = sphi 0, %s29
      %s23 = sphi 0, %s21
      %s24 = sphi 0, %s22
      %s25 = sphi 0, %s23
      %s26 = sphi 0, %s24
      %s36 = sphi 0, %s38
      %s39 = sphi 0, %s36
      %s40 = sphi 0, %s39
      %s56 = sphi 0, %s40
      %s60 = sphi 0, %s60
      %s62 = sphi 0, %s60
      %s63 = sphi 0, %s62
      %s77 = sphi 0, %s63
      %s81 = sphi 0, %s81
      %s83 = sphi 0, %s81
      %s84 = sphi 0, %s83
      %s98 = sphi 0, %s84
      %s108 = sphi 0, %s110
      %s111 = sphi 0, %s108
      %s112 = sphi 0, %s111
      %s128 = sphi 0, %s112
      %s138 = sphi 0, %s140
      %s141 = sphi 0, %s138
      %s142 = sphi 0, %s141
      %s158 = sphi 0, %s142
    $region4: #{_lambda_.9} parent=1 // loop_header_branch
      %17 = sbr.rel (%p15) target = $region8
    $region5: #{_lambda_.9} parent=1 // loop_body
      %s19 = ssub.s32 %s14, 1
      %s20 = ssub.s32 %s14, 2
      %s27 = sadd.s32 1, %s22
      %p28 = scmp.ge.s32.totalorder %s27, 2
      %s29 = scalar_select %p28, 0, %s27
      %s30 = sadd.s32 1, %s21
      %s31 = scalar_select %p28, %s30, %s21
      %p32 = scmp.ge.s32.totalorder %s31, 2
      %s33 = scalar_select %p32, 0, %s31
      %s34 = ssub.s32 %s21, %s33
      %p35 = scmp.eq.s32.totalorder %s34, 0
      %s37 = sadd.s32 %s36, 1
      %s38 = scalar_select %p35, %s36, %s37
      %p41 = pneg %p35
      %p42 = scmp.eq.s32.totalorder %s14, 3
      %p43 = por %p41, %p42
      %p44 = scmp.ne.s32.totalorder %s36, %s39
      %p45 = scmp.eq.s32.totalorder %s14, 0
      %p46 = por %p44, %p45
      %p47 = scmp.ne.s32.totalorder %s36, %s39
      %p48 = scmp.eq.s32.totalorder %s19, 3
      %p49 = por %p47, %p48
      %p50 = scmp.ne.s32.totalorder %s39, %s40
      %p51 = scmp.eq.s32.totalorder %s19, 0
      %p52 = por %p50, %p51
      %p53 = scmp.ne.s32.totalorder %s39, %s40
      %p54 = scmp.eq.s32.totalorder %s20, 3
      %p55 = por %p53, %p54
      %p57 = scmp.ne.s32.totalorder %s40, %s56
      %p58 = scmp.eq.s32.totalorder %s20, 0
      %p59 = por %p57, %p58
      %s61 = sadd.s32 %s60, 1
      %p64 = scmp.eq.s32.totalorder %s14, 3
      %p65 = scmp.ne.s32.totalorder %s60, %s62
      %p66 = scmp.eq.s32.totalorder %s14, 0
      %p67 = por %p65, %p66
      %p68 = scmp.ne.s32.totalorder %s60, %s62
      %p69 = scmp.eq.s32.totalorder %s19, 3
      %p70 = por %p68, %p69
      %p71 = scmp.ne.s32.totalorder %s62, %s63
      %p72 = scmp.eq.s32.totalorder %s19, 0
      %p73 = por %p71, %p72
      %p74 = scmp.ne.s32.totalorder %s62, %s63
      %p75 = scmp.eq.s32.totalorder %s20, 3
      %p76 = por %p74, %p75
      %p78 = scmp.ne.s32.totalorder %s63, %s77
      %p79 = scmp.eq.s32.totalorder %s20, 0
      %p80 = por %p78, %p79
      %s82 = sadd.s32 %s81, 1
      %p85 = scmp.eq.s32.totalorder %s14, 3
      %p86 = scmp.ne.s32.totalorder %s81, %s83
      %p87 = scmp.eq.s32.totalorder %s14, 0
      %p88 = por %p86, %p87
      %p89 = scmp.ne.s32.totalorder %s81, %s83
      %p90 = scmp.eq.s32.totalorder %s19, 3
      %p91 = por %p89, %p90
      %p92 = scmp.ne.s32.totalorder %s83, %s84
      %p93 = scmp.eq.s32.totalorder %s19, 0
      %p94 = por %p92, %p93
      %p95 = scmp.ne.s32.totalorder %s83, %s84
      %p96 = scmp.eq.s32.totalorder %s20, 3
      %p97 = por %p95, %p96
      %p99 = scmp.ne.s32.totalorder %s84, %s98
      %p100 = scmp.eq.s32.totalorder %s20, 0
      %p101 = por %p99, %p100
      %s102 = smul.u32 %s21, 2
      %s103 = sadd.s32 %s102, %s22
      %s104 = smul.u32 %s33, 2
      %s105 = sadd.s32 %s104, %s29
      %s106 = ssub.s32 %s103, %s105
      %p107 = scmp.eq.s32.totalorder %s106, 0
      %s109 = sadd.s32 %s108, 1
      %s110 = scalar_select %p107, %s108, %s109
      %p113 = pneg %p107
      %p114 = scmp.eq.s32.totalorder %s14, 3
      %p115 = por %p113, %p114
      %p116 = scmp.ne.s32.totalorder %s108, %s111
      %p117 = scmp.eq.s32.totalorder %s14, 0
      %p118 = por %p116, %p117
      %p119 = scmp.ne.s32.totalorder %s108, %s111
      %p120 = scmp.eq.s32.totalorder %s19, 3
      %p121 = por %p119, %p120
      %p122 = scmp.ne.s32.totalorder %s111, %s112
      %p123 = scmp.eq.s32.totalorder %s19, 0
      %p124 = por %p122, %p123
      %p125 = scmp.ne.s32.totalorder %s111, %s112
      %p126 = scmp.eq.s32.totalorder %s20, 3
      %p127 = por %p125, %p126
      %p129 = scmp.ne.s32.totalorder %s112, %s128
      %p130 = scmp.eq.s32.totalorder %s20, 0
      %p131 = por %p129, %p130
      %s132 = smul.u32 %s21, 2
      %s133 = sadd.s32 %s132, %s22
      %s134 = smul.u32 %s33, 2
      %s135 = sadd.s32 %s134, %s29
      %s136 = ssub.s32 %s133, %s135
      %p137 = scmp.eq.s32.totalorder %s136, 0
      %s139 = sadd.s32 %s138, 1
      %s140 = scalar_select %p137, %s138, %s139
      %p143 = pneg %p137
      %p144 = scmp.eq.s32.totalorder %s14, 3
      %p145 = por %p143, %p144
      %p146 = scmp.ne.s32.totalorder %s138, %s141
      %p147 = scmp.eq.s32.totalorder %s14, 0
      %p148 = por %p146, %p147
      %p149 = scmp.ne.s32.totalorder %s138, %s141
      %p150 = scmp.eq.s32.totalorder %s19, 3
      %p151 = por %p149, %p150
      %p152 = scmp.ne.s32.totalorder %s141, %s142
      %p153 = scmp.eq.s32.totalorder %s19, 0
      %p154 = por %p152, %p153
      %p155 = scmp.ne.s32.totalorder %s141, %s142
      %p156 = scmp.eq.s32.totalorder %s20, 3
      %p157 = por %p155, %p156
      %p159 = scmp.ne.s32.totalorder %s142, %s158
      %p160 = scmp.eq.s32.totalorder %s20, 0
      %p161 = por %p159, %p160
      %p162 = scmp.le.s32.totalorder 1, %s14
      %p163 = scmp.lt.s32.totalorder %s14, 5
      %p164 = pnand %p162, %p163
      %p165 = pneg %p164
      // Predicated region
      $region9: #{_lambda_.9} parent=5 // pred_check
        _
      $region10: #{_lambda_.9} parent=5 // pred_check_branch
        %167 = sbr.rel (%p164) target = $region12
      $region11: #{_lambda_.9} parent=5 // pred_region
        %s168 = ssub.s32 %s14, 1
        // Predicated region
        $region13: #{_lambda_.9} parent=11 // pred_check
          %p169 = pneg %p73
        $region14: #{_lambda_.9} parent=11 // pred_check_branch
          %171 = sbr.rel (%p169) target = $region16
        $region15: #{_lambda_.9} parent=11 // pred_region
          _
        $region16: #{_lambda_.9} parent=11 // pred_fallthru
          _
        // Predicated region
        $region17: #{_lambda_.9} parent=11 // pred_check
          %p172 = pneg %p94
        $region18: #{_lambda_.9} parent=11 // pred_check_branch
          %174 = sbr.rel (%p172) target = $region20
        $region19: #{_lambda_.9} parent=11 // pred_region
          _
        $region20: #{_lambda_.9} parent=11 // pred_fallthru
          _
      $region12: #{_lambda_.9} parent=5 // pred_fallthru
        _
      %p175 = scmp.lt.s32.totalorder %s14, 4
      // Predicated region
      $region21: #{_lambda_.9} parent=5 // pred_check
        %p176 = pneg %p175
      $region22: #{_lambda_.9} parent=5 // pred_check_branch
        %178 = sbr.rel (%p176) target = $region24
      $region23: #{_lambda_.9} parent=5 // pred_region
        // Predicated region
        $region25: #{_lambda_.9} parent=23 // pred_check
          %p179 = pneg %p46
        $region26: #{_lambda_.9} parent=23 // pred_check_branch
          %181 = sbr.rel (%p179) target = $region28
        $region27: #{_lambda_.9} parent=23 // pred_region
          %p182 = scmp.lt.s32.totalorder %s21, 1
          %s183 = scalar_select %p182, %s21, 1
          %s184 = smul.addr %s183, 20
          %s185 = smul.addr %s184, 8
          %s186 = scalar_lea.vmem %s0, %s185
        $region28: #{_lambda_.9} parent=23 // pred_fallthru
          _
      $region24: #{_lambda_.9} parent=5 // pred_fallthru
        _
      %p187 = scmp.le.s32.totalorder 1, %s14
      %p188 = scmp.lt.s32.totalorder %s14, 5
      %p189 = pnand %p187, %p188
      %p190 = pneg %p189
      // Predicated region
      $region29: #{_lambda_.9} parent=5 // pred_check
        _
      $region30: #{_lambda_.9} parent=5 // pred_check_branch
        %192 = sbr.rel (%p189) target = $region32
      $region31: #{_lambda_.9} parent=5 // pred_region
        %s193 = ssub.s32 %s14, 1
        %p194 = scmp.lt.s32.totalorder %s23, 1
        %s195 = scalar_select %p194, %s23, 1
        %s196 = smul.addr %s195, 20
        %s197 = smul.addr %s196, 8
        %s198 = scalar_lea.vmem %s0, %s197
        %p199 = pneg %p52
        %p200 = pneg %p49
        %p201 = pneg %p73
        %p202 = pneg %p70
        %p203 = pneg %p94
        %p204 = pneg %p91
        %p205 = pneg %p124
        %p206 = pneg %p121
        %s207 = sand.u32 %s111, 1
        %s208 = scalar_lea.sflag [#allocation3], %s207
        %s209 = sand.u32 %s111, 1
        %s210 = smul.addr %s209, 32
        %s211 = scalar_lea.vmem [#allocation2], %s210
        %p212 = pneg %p154
        %p213 = pneg %p151
        %s214 = smul.u32 %s23, 2
        %s215 = sadd.s32 %s214, %s24
        %s216 = smul.u32 4, %s215
        %p217 = scmp.lt.s32.totalorder %s216, 15
        %s218 = scalar_select %p217, %s216, 15
        %s219 = smul.addr %s218, 8
        %s220 = scalar_lea.vmem %s4, %s219
        %p221 = scmp.lt.s32.totalorder %s23, 1
        %s222 = scalar_select %p221, %s23, 1
        %s223 = smul.addr %s222, 20
        %s224 = smul.addr %s223, 8
        %s225 = scalar_lea.vmem %s0, %s224
        %s226 = smul.u32 %s23, 2
        %s227 = sadd.s32 %s226, %s24
        %s228 = smul.u32 4, %s227
        %s229 = smul.u32 %s23, 2
        %s230 = sadd.s32 %s229, %s24
        %s231 = smul.u32 4, %s230
        %p232 = scmp.lt.s32.totalorder %s231, 15
        %s233 = scalar_select %p232, %s231, 15
        %s234 = smul.addr %s233, 8
        %s235 = scalar_lea.vmem %s4, %s234
        %s236 = smul.u32 %s23, 2
        %s237 = sadd.s32 %s236, %s24
        %s238 = smul.u32 4, %s237
        %s240 = smul.u32 %s24, 4
        %s241 = smul.u32 %s240, 16
        %s242 = scalar_lea.vmem %s225, %s241
        %v243 = vld [vmem:[%s242] sm:$0xff]
        %v244 = vld [vmem:[%s242 + $0x10] sm:$0xff]
        %v245 = vld [vmem:[%s242 + $0x20] sm:$0xff]
        %v246 = vld [vmem:[%s242 + $0x30] sm:$0xff]
        %v247 = vld [vmem:[%s242 + $0x1] sm:$0xff]
        %v248 = vld [vmem:[%s242 + $0x11] sm:$0xff]
        %v249 = vld [vmem:[%s242 + $0x21] sm:$0xff]
        %v250 = vld [vmem:[%s242 + $0x31] sm:$0xff]
        %v251 = vld [vmem:[%s242 + $0x2] sm:$0xff]
        %v252 = vld [vmem:[%s242 + $0x12] sm:$0xff]
        %v253 = vld [vmem:[%s242 + $0x22] sm:$0xff]
        %v254 = vld [vmem:[%s242 + $0x32] sm:$0xff]
        %s255 = sadd.s32 %s240, 1
        %s256 = smul.u32 %s255, 16
        %s257 = scalar_lea.vmem %s225, %s256
        %v258 = vld [vmem:[%s257] sm:$0xff]
        %v259 = vld [vmem:[%s257 + $0x10] sm:$0xff]
        %v260 = vld [vmem:[%s257 + $0x20] sm:$0xff]
        %v261 = vld [vmem:[%s257 + $0x30] sm:$0xff]
        %v262 = vld [vmem:[%s257 + $0x1] sm:$0xff]
        %v263 = vld [vmem:[%s257 + $0x11] sm:$0xff]
        %v264 = vld [vmem:[%s257 + $0x21] sm:$0xff]
        %v265 = vld [vmem:[%s257 + $0x31] sm:$0xff]
        %v266 = vld [vmem:[%s257 + $0x2] sm:$0xff]
        %v267 = vld [vmem:[%s257 + $0x12] sm:$0xff]
        %v268 = vld [vmem:[%s257 + $0x22] sm:$0xff]
        %v269 = vld [vmem:[%s257 + $0x32] sm:$0xff]
        %s270 = sadd.s32 %s240, 2
        %s271 = smul.u32 %s270, 16
        %s272 = scalar_lea.vmem %s225, %s271
        %v273 = vld [vmem:[%s272] sm:$0xff]
        %v274 = vld [vmem:[%s272 + $0x10] sm:$0xff]
        %v275 = vld [vmem:[%s272 + $0x20] sm:$0xff]
        %v276 = vld [vmem:[%s272 + $0x30] sm:$0xff]
        %v277 = vld [vmem:[%s272 + $0x1] sm:$0xff]
        %v278 = vld [vmem:[%s272 + $0x11] sm:$0xff]
        %v279 = vld [vmem:[%s272 + $0x21] sm:$0xff]
        %v280 = vld [vmem:[%s272 + $0x31] sm:$0xff]
        %v281 = vld [vmem:[%s272 + $0x2] sm:$0xff]
        %v282 = vld [vmem:[%s272 + $0x12] sm:$0xff]
        %v283 = vld [vmem:[%s272 + $0x22] sm:$0xff]
        %v284 = vld [vmem:[%s272 + $0x32] sm:$0xff]
        %289 = vrot.lane.b32.xlu0 %v247, 8
        %v290 = vpop.permute.xlu0 %289
        %291 = vrot.lane.b32.xlu0 %v248, 8
        %v292 = vpop.permute.xlu0 %291
        %293 = vrot.lane.b32.xlu0 %v249, 8
        %v294 = vpop.permute.xlu0 %293
        %295 = vrot.lane.b32.xlu0 %v250, 8
        %v296 = vpop.permute.xlu0 %295
        %305 = vrot.lane.b32.xlu0 %v251, 16
        %v306 = vpop.permute.xlu0 %305
        %307 = vrot.lane.b32.xlu0 %v252, 16
        %v308 = vpop.permute.xlu0 %307
        %309 = vrot.lane.b32.xlu0 %v253, 16
        %v310 = vpop.permute.xlu0 %309
        %311 = vrot.lane.b32.xlu0 %v254, 16
        %v312 = vpop.permute.xlu0 %311
        %321 = vrot.lane.b32.xlu0 %v258, 24
        %v322 = vpop.permute.xlu0 %321
        %323 = vrot.lane.b32.xlu0 %v259, 24
        %v324 = vpop.permute.xlu0 %323
        %325 = vrot.lane.b32.xlu0 %v260, 24
        %v326 = vpop.permute.xlu0 %325
        %327 = vrot.lane.b32.xlu0 %v261, 24
        %v328 = vpop.permute.xlu0 %327
        %337 = vrot.lane.b32.xlu0 %v262, 32
        %v338 = vpop.permute.xlu0 %337
        %339 = vrot.lane.b32.xlu0 %v263, 32
        %v340 = vpop.permute.xlu0 %339
        %341 = vrot.lane.b32.xlu0 %v264, 32
        %v342 = vpop.permute.xlu0 %341
        %343 = vrot.lane.b32.xlu0 %v265, 32
        %v344 = vpop.permute.xlu0 %343
        %353 = vrot.lane.b32.xlu0 %v266, 40
        %v354 = vpop.permute.xlu0 %353
        %355 = vrot.lane.b32.xlu0 %v267, 40
        %v356 = vpop.permute.xlu0 %355
        %357 = vrot.lane.b32.xlu0 %v268, 40
        %v358 = vpop.permute.xlu0 %357
        %359 = vrot.lane.b32.xlu0 %v269, 40
        %v360 = vpop.permute.xlu0 %359
        %369 = vrot.lane.b32.xlu0 %v273, 48
        %v370 = vpop.permute.xlu0 %369
        %371 = vrot.lane.b32.xlu0 %v274, 48
        %v372 = vpop.permute.xlu0 %371
        %373 = vrot.lane.b32.xlu0 %v275, 48
        %v374 = vpop.permute.xlu0 %373
        %375 = vrot.lane.b32.xlu0 %v276, 48
        %v376 = vpop.permute.xlu0 %375
        %385 = vrot.lane.b32.xlu0 %v277, 56
        %v386 = vpop.permute.xlu0 %385
        %387 = vrot.lane.b32.xlu0 %v278, 56
        %v388 = vpop.permute.xlu0 %387
        %389 = vrot.lane.b32.xlu0 %v279, 56
        %v390 = vpop.permute.xlu0 %389
        %391 = vrot.lane.b32.xlu0 %v280, 56
        %v392 = vpop.permute.xlu0 %391
        %401 = vrot.lane.b32.xlu0 %v281, 64
        %v402 = vpop.permute.xlu0 %401
        %403 = vrot.lane.b32.xlu0 %v282, 64
        %v404 = vpop.permute.xlu0 %403
        %405 = vrot.lane.b32.xlu0 %v283, 64
        %v406 = vpop.permute.xlu0 %405
        %407 = vrot.lane.b32.xlu0 %v284, 64
        %v408 = vpop.permute.xlu0 %407
        %vm413 = vcmask 64512
        %v414 = vsel %vm413, %v243, %v290
        %v415 = vsel %vm413, %v244, %v292
        %v416 = vsel %vm413, %v245, %v294
        %v417 = vsel %vm413, %v246, %v296
        %vm418 = vcmask 130048
        %v419 = vsel %vm418, %v414, %v306
        %v420 = vsel %vm418, %v415, %v308
        %v421 = vsel %vm418, %v416, %v310
        %v422 = vsel %vm418, %v417, %v312
        %vm423 = vcmask 195584
        %v424 = vsel %vm423, %v419, %v322
        %v425 = vsel %vm423, %v420, %v324
        %v426 = vsel %vm423, %v421, %v326
        %v427 = vsel %vm423, %v422, %v328
        %vm428 = vcmask 261120
        %v429 = vsel %vm428, %v424, %v338
        %v430 = vsel %vm428, %v425, %v340
        %v431 = vsel %vm428, %v426, %v342
        %v432 = vsel %vm428, %v427, %v344
        %vm433 = vcmask 326656
        %v434 = vsel %vm433, %v429, %v354
        %v435 = vsel %vm433, %v430, %v356
        %v436 = vsel %vm433, %v431, %v358
        %v437 = vsel %vm433, %v432, %v360
        %vm438 = vcmask 392192
        %v439 = vsel %vm438, %v434, %v370
        %v440 = vsel %vm438, %v435, %v372
        %v441 = vsel %vm438, %v436, %v374
        %v442 = vsel %vm438, %v437, %v376
        %vm443 = vcmask 457728
        %v444 = vsel %vm443, %v439, %v386
        %v445 = vsel %vm443, %v440, %v388
        %v446 = vsel %vm443, %v441, %v390
        %v447 = vsel %vm443, %v442, %v392
        %vm448 = vcmask 523264
        %v449 = vsel %vm448, %v444, %v402
        %v450 = vsel %vm448, %v445, %v404
        %v451 = vsel %vm448, %v446, %v406
        %v452 = vsel %vm448, %v447, %v408
        %v453 = vpack.c.bf16 %v450, %v449
        %v454 = vpack.c.bf16 %v452, %v451
        %v455 = vld [vmem:[%s1] sm:$0xf]
        %v456 = vld [vmem:[%s1 + $0x4] sm:$0xf]
        %v457 = vld [vmem:[%s1 + $0x8] sm:$0xf]
        %v458 = vld [vmem:[%s1 + $0xc] sm:$0xf]
        %v459 = vld [vmem:[%s1 + $0x10] sm:$0xf]
        %v460 = vld [vmem:[%s1 + $0x14] sm:$0xf]
        %v461 = vld [vmem:[%s1 + $0x18] sm:$0xf]
        %v462 = vld [vmem:[%s1 + $0x1c] sm:$0xf]
        %v463 = vld [vmem:[%s1 + $0x20] sm:$0xf]
        %v464 = vld [vmem:[%s2] sm:$0x1]
        %v466 = vlaneseq
        %v467 = vshrl.u32 %v466, 7
        %v468 = vsub.s32 0, %v467
        %v469 = vrot.slane %v464, %v468
        %v480 = vunpack.c.l.b16 %v455
        %v481 = vunpack.c.l.b16 %v456
        %v482 = vunpack.c.l.b16 %v457
        %v483 = vunpack.c.l.b16 %v458
        %v484 = vunpack.c.l.b16 %v459
        %v485 = vunpack.c.l.b16 %v460
        %v486 = vunpack.c.l.b16 %v461
        %v487 = vunpack.c.l.b16 %v462
        %v488 = vunpack.c.l.b16 %v463
        %v489 = vpack.c.b16 %v481, %v480
        %v490 = vpack.c.b16 %v483, %v482
        %v491 = vpack.c.b16 %v485, %v484
        %v492 = vpack.c.b16 %v487, %v486
        %v493 = vpack.c.b16 %v488, %v488
        %vm498 = vcmask 588800
        %v500 = vsel %vm498, %v453, 0
        %v503 = vsel %vm498, %v454, 0
        %vm505 = vcmask 1043456
        %v507 = vsel %vm505, %v493, 0
        %509 = vmatprep.subr.bf16.mxu0 0
        %510 = vmatpush1.bf16.msra.mxu0 %v489
        %511 = vmatprep.subr.bf16.mxu0 0
        %512 = vmatpush1.bf16.msra.mxu0 %v490
        %513 = vmatprep.subr.bf16.mxu0 0
        %514 = vmatpush1.bf16.msra.mxu0 %v491
        %515 = vmatprep.subr.bf16.mxu0 0
        %516 = vmatpush1.bf16.msra.mxu0 %v492
        %517 = vmatprep.subr.bf16.mxu0 0
        %518 = vmatpush1.bf16.msra.mxu0 %v507
        %519 = vmatprep.subr.bf16.mxu0 0
        %520 = vmatpush1.bf16.msra.mxu0 0
        %521 = vmatprep.subr.bf16.mxu0 0
        %522 = vmatpush1.bf16.msra.mxu0 0
        %523 = vmatprep.subr.bf16.mxu0 0
        %524 = vmatpush1.bf16.msra.mxu0 0
        %525 = vmatprep.subr.bf16.mxu0 0
        %526 = vmatpush1.bf16.msra.mxu0 0
        %527 = vmatprep.subr.bf16.mxu0 0
        %528 = vmatpush1.bf16.msra.mxu0 0
        %529 = vmatprep.subr.bf16.mxu0 0
        %530 = vmatpush1.bf16.msra.mxu0 0
        %531 = vmatprep.subr.bf16.mxu0 0
        %532 = vmatpush1.bf16.msra.mxu0 0
        %533 = vmatprep.subr.bf16.mxu0 0
        %534 = vmatpush1.bf16.msra.mxu0 0
        %535 = vmatprep.subr.bf16.mxu0 0
        %536 = vmatpush1.bf16.msra.mxu0 0
        %537 = vmatprep.subr.bf16.mxu0 0
        %538 = vmatpush1.bf16.msra.mxu0 0
        %539 = vmatprep.subr.bf16.mxu0 0
        %540 = vmatpush1.bf16.msra.mxu0 0
        %541 = vmatprep.mubr.bf16.mxu0 0
        %542 = vmatmul.mubr.bf16.gmra.mrb[0].mxu0 %v500
        %v543 = vpop.f32.mrb[0].mxu0
        %v544 = vadd.f32 %v469, %v543
        %v545 = vpop.f32.mrb[0].mxu0
        %v546 = vpop.f32.mrb[0].mxu0
        %v547 = vadd.f32 %v469, %v546
        %v548 = vpop.f32.mrb[0].mxu0
        %549 = vmatprep.mubr.bf16.mxu0 0
        %550 = vmatmul.mubr.bf16.gmra.mrb[0].mxu0 %v503
        %v551 = vpop.f32.mrb[0].mxu0
        %v552 = vadd.f32 %v469, %v551
        %v553 = vpop.f32.mrb[0].mxu0
        %v554 = vpop.f32.mrb[0].mxu0
        %v555 = vadd.f32 %v469, %v554
        %v556 = vpop.f32.mrb[0].mxu0
        %557 = vdwg.mxu0
        %558 = vst.msk [vmem:[%s211] sm:$0xff] %vm418, %v544
        %559 = vst.msk [vmem:[%s211 + $0x8] sm:$0xff] %vm418, %v547
        %560 = vst.msk [vmem:[%s211 + $0x10] sm:$0xff] %vm418, %v552
        %561 = vst.msk [vmem:[%s211 + $0x18] sm:$0xff] %vm418, %v555
        %v562 = vmax.f32 %v544, 0.0
        %v563 = vmax.f32 %v547, 0.0
        %v564 = vmax.f32 %v552, 0.0
        %v565 = vmax.f32 %v555, 0.0
        %566 = vst.msk [vmem:[%s235] sm:$0xff] %vm418, %v562
        %567 = vst.msk [vmem:[%s235 + $0x8] sm:$0xff] %vm418, %v563
        %568 = vst.msk [vmem:[%s235 + $0x10] sm:$0xff] %vm418, %v564
        %569 = vst.msk [vmem:[%s235 + $0x18] sm:$0xff] %vm418, %v565
        %s570 = sand.u32 %s111, 1
        %s571 = scalar_lea.sflag [#allocation3], %s570
        %s572 = sand.u32 %s111, 1
        %s573 = smul.addr %s572, 32
        %s574 = scalar_lea.vmem [#allocation2], %s573
        %s575 = smul.u32 %s23, 2
        %s576 = sadd.s32 %s575, %s24
        %s577 = smul.u32 4, %s576
        %p578 = scmp.lt.s32.totalorder %s577, 15
        %s579 = scalar_select %p578, %s577, 15
        %s580 = smul.addr %s579, 8
        %s581 = scalar_lea.vmem %s4, %s580
        // Predicated region
        $region33: #{_lambda_.9} parent=31 // pred_check
          %p582 = pneg %p121
        $region34: #{_lambda_.9} parent=31 // pred_check_branch
          %584 = sbr.rel (%p582) target = $region36
        $region35: #{_lambda_.9} parent=31 // pred_region
          %s585 = smul.u32 %s23, 2
          %s586 = sadd.s32 %s585, %s24
          %s587 = smul.u32 4, %s586
          %s589 = ssub.s32 512, 512
          %590 = vsyncadd %s571, %s589
          %s591 = smul.addr %s587, 128
          %s592 = scalar_lea.hbm %s3, %s591
          %s593 = sshll.u32 %s574, 4
          %s594 = int_to_ptr.vmem [resolvable:$true] %s593
          %599 = dma.vmem_to_hbm [thread:$0]  %s594, 512, %s592, %s571, 128, 128, 8
        $region36: #{_lambda_.9} parent=31 // pred_fallthru
          _
        // Predicated region
        $region37: #{_lambda_.9} parent=31 // pred_check
          %p600 = pneg %p151
        $region38: #{_lambda_.9} parent=31 // pred_check_branch
          %602 = sbr.rel (%p600) target = $region40
        $region39: #{_lambda_.9} parent=31 // pred_region
          %s603 = smul.u32 %s23, 2
          %s604 = sadd.s32 %s603, %s24
          %s605 = smul.u32 4, %s604
        $region40: #{_lambda_.9} parent=31 // pred_fallthru
          _
      $region32: #{_lambda_.9} parent=5 // pred_fallthru
        _
      %p606 = scmp.le.s32.totalorder 2, %s14
      // Predicated region
      $region41: #{_lambda_.9} parent=5 // pred_check
        %p607 = pneg %p606
      $region42: #{_lambda_.9} parent=5 // pred_check_branch
        %609 = sbr.rel (%p607) target = $region44
      $region43: #{_lambda_.9} parent=5 // pred_region
        %s610 = ssub.s32 %s14, 2
        // Predicated region
        $region45: #{_lambda_.9} parent=43 // pred_check
          %p611 = pneg %p127
        $region46: #{_lambda_.9} parent=43 // pred_check_branch
          %613 = sbr.rel (%p611) target = $region48
        $region47: #{_lambda_.9} parent=43 // pred_region
          %s614 = sand.u32 %s112, 1
          %s615 = scalar_lea.sflag [#allocation3], %s614
          %s616 = sand.u32 %s112, 1
          %s617 = smul.addr %s616, 32
          %s618 = scalar_lea.vmem [#allocation2], %s617
          %619 = dma.done %s615, 512
        $region48: #{_lambda_.9} parent=43 // pred_fallthru
          _
        // Predicated region
        $region49: #{_lambda_.9} parent=43 // pred_check
          %p620 = pneg %p157
        $region50: #{_lambda_.9} parent=43 // pred_check_branch
          %622 = sbr.rel (%p620) target = $region52
        $region51: #{_lambda_.9} parent=43 // pred_region
          %s623 = smul.u32 %s25, 2
          %s624 = sadd.s32 %s623, %s26
          %s625 = smul.u32 4, %s624
          %p626 = scmp.lt.s32.totalorder %s625, 15
          %s627 = scalar_select %p626, %s625, 15
          %s628 = smul.addr %s627, 8
          %s629 = scalar_lea.vmem %s4, %s628
        $region52: #{_lambda_.9} parent=43 // pred_fallthru
          _
      $region44: #{_lambda_.9} parent=5 // pred_fallthru
        _
    $region6: #{_lambda_.9} parent=1 // loop_footer
      %s18 = sadd.s32 1, %s14
    $region7: #{_lambda_.9} parent=1 // loop_footer_branch
      %13 = sbr.rel target = $region3
    $region8: #{_lambda_.9} parent=1 // loop_exit
      _
    %630 = vsyncpa [#allocation3], 1
    %s631 = scalar_lea.sflag [#allocation3], 1
    %632 = vsyncpa %s631, 1

// kernel: _lambda_.11
$region0: #{_lambda_.11}
  #allocation0 [shape = 'u32[]', space=smem, size = 0x4, offset = 0x4, fixed_abs, tag = 'smem constant byte address 0x4 - core index']
  #allocation1 [shape = 'u32[144,128]{1,0:T(1,128)}', space=vmem, size = 0x12000, scoped, tag = 'internal scratch']
  %s0 = inlined_call_operand.vmem [shape: f32[2,4,2,4,32], index: 0, kind: input, shape index: {}]
  %s1 = inlined_call_operand.hbm [shape: f32[2,4,4,16], index: 1, kind: output, shape index: {}]
  %s2 = sld [smem:[#allocation0]]
  $region37: #{_lambda_.11} parent=0
    _
  %s4 = ssub.s32 1, %s2
  %s5 = scalar_select 0, %s4, %s2
  $region1: #{_lambda_.11} parent=0
    #allocation2 [shape = 'u8[8192]{0}', space=vmem, size = 0x2000, scoped, tag = 'output window, operand 0']
    #allocation3 [shape = 's32[2]{0}', space=sflag, size = 0x8, scoped, tag = 'scoped memory for _lambda_.11']
    %6 = vsyncpa [#allocation3], 0
    %s7 = scalar_lea.sflag [#allocation3], 1
    %8 = vsyncpa %s7, 0
    loop: start=0, step=1, limit=6
    $region2: #{_lambda_.11} parent=1 // loop_pre_header
      _
    $region3: #{_lambda_.11} parent=1 // loop_header
      %s10 = sphi 0, %s14
      %p11 = scmp.ge.s32.totalorder %s10, 6
      %s17 = sphi 0, %s29
      %s18 = sphi 0, %s25
      %s19 = sphi 0, %s17
      %s20 = sphi 0, %s18
      %s21 = sphi 0, %s19
      %s22 = sphi 0, %s20
      %s34 = sphi 0, %s36
      %s37 = sphi 0, %s34
      %s38 = sphi 0, %s37
      %s54 = sphi 0, %s38
      %s62 = sphi 0, %s64
      %s65 = sphi 0, %s62
      %s66 = sphi 0, %s65
      %s82 = sphi 0, %s66
    $region4: #{_lambda_.11} parent=1 // loop_header_branch
      %13 = sbr.rel (%p11) target = $region8
    $region5: #{_lambda_.11} parent=1 // loop_body
      %s15 = ssub.s32 %s10, 1
      %s16 = ssub.s32 %s10, 2
      %s23 = sadd.s32 1, %s18
      %p24 = scmp.ge.s32.totalorder %s23, 2
      %s25 = scalar_select %p24, 0, %s23
      %s26 = sadd.s32 1, %s17
      %s27 = scalar_select %p24, %s26, %s17
      %p28 = scmp.ge.s32.totalorder %s27, 2
      %s29 = scalar_select %p28, 0, %s27
      %s30 = ssub.s32 %s17, %s29
      %s31 = ssub.s32 %s18, %s25
      %s32 = sor.u32 %s30, %s31
      %p33 = scmp.eq.s32.totalorder %s32, 0
      %s35 = sadd.s32 %s34, 1
      %s36 = scalar_select %p33, %s34, %s35
      %p39 = pneg %p33
      %p40 = scmp.eq.s32.totalorder %s10, 3
      %p41 = por %p39, %p40
      %p42 = scmp.ne.s32.totalorder %s34, %s37
      %p43 = scmp.eq.s32.totalorder %s10, 0
      %p44 = por %p42, %p43
      %p45 = scmp.ne.s32.totalorder %s34, %s37
      %p46 = scmp.eq.s32.totalorder %s15, 3
      %p47 = por %p45, %p46
      %p48 = scmp.ne.s32.totalorder %s37, %s38
      %p49 = scmp.eq.s32.totalorder %s15, 0
      %p50 = por %p48, %p49
      %p51 = scmp.ne.s32.totalorder %s37, %s38
      %p52 = scmp.eq.s32.totalorder %s16, 3
      %p53 = por %p51, %p52
      %p55 = scmp.ne.s32.totalorder %s38, %s54
      %p56 = scmp.eq.s32.totalorder %s16, 0
      %p57 = por %p55, %p56
      %s58 = ssub.s32 %s17, %s29
      %s59 = ssub.s32 %s18, %s25
      %s60 = sor.u32 %s58, %s59
      %p61 = scmp.eq.s32.totalorder %s60, 0
      %s63 = sadd.s32 %s62, 1
      %s64 = scalar_select %p61, %s62, %s63
      %p67 = pneg %p61
      %p68 = scmp.eq.s32.totalorder %s10, 3
      %p69 = por %p67, %p68
      %p70 = scmp.ne.s32.totalorder %s62, %s65
      %p71 = scmp.eq.s32.totalorder %s10, 0
      %p72 = por %p70, %p71
      %p73 = scmp.ne.s32.totalorder %s62, %s65
      %p74 = scmp.eq.s32.totalorder %s15, 3
      %p75 = por %p73, %p74
      %p76 = scmp.ne.s32.totalorder %s65, %s66
      %p77 = scmp.eq.s32.totalorder %s15, 0
      %p78 = por %p76, %p77
      %p79 = scmp.ne.s32.totalorder %s65, %s66
      %p80 = scmp.eq.s32.totalorder %s16, 3
      %p81 = por %p79, %p80
      %p83 = scmp.ne.s32.totalorder %s66, %s82
      %p84 = scmp.eq.s32.totalorder %s16, 0
      %p85 = por %p83, %p84
      %p86 = scmp.le.s32.totalorder 1, %s10
      %p87 = scmp.lt.s32.totalorder %s10, 5
      %p88 = pnand %p86, %p87
      %p89 = pneg %p88
      // Predicated region
      $region9: #{_lambda_.11} parent=5 // pred_check
        _
      $region10: #{_lambda_.11} parent=5 // pred_check_branch
        %91 = sbr.rel (%p88) target = $region12
      $region11: #{_lambda_.11} parent=5 // pred_region
        %s92 = ssub.s32 %s10, 1
      $region12: #{_lambda_.11} parent=5 // pred_fallthru
        _
      %p93 = scmp.lt.s32.totalorder %s10, 4
      // Predicated region
      $region13: #{_lambda_.11} parent=5 // pred_check
        %p94 = pneg %p93
      $region14: #{_lambda_.11} parent=5 // pred_check_branch
        %96 = sbr.rel (%p94) target = $region16
      $region15: #{_lambda_.11} parent=5 // pred_region
        // Predicated region
        $region17: #{_lambda_.11} parent=15 // pred_check
          %p97 = pneg %p44
        $region18: #{_lambda_.11} parent=15 // pred_check_branch
          %99 = sbr.rel (%p97) target = $region20
        $region19: #{_lambda_.11} parent=15 // pred_region
          %s100 = smul.u32 2, %s18
          %p101 = scmp.lt.s32.totalorder %s17, 1
          %s102 = scalar_select %p101, %s17, 1
          %p103 = scmp.lt.s32.totalorder %s100, 3
          %s104 = scalar_select %p103, %s100, 3
          %s105 = smul.addr %s104, 2
          %s106 = smul.addr %s102, 8
          %s107 = sadd.s32 %s105, %s106
          %s108 = smul.addr %s107, 4
          %s109 = scalar_lea.vmem %s0, %s108
          %s110 = smul.u32 2, %s18
        $region20: #{_lambda_.11} parent=15 // pred_fallthru
          _
      $region16: #{_lambda_.11} parent=5 // pred_fallthru
        _
      %p111 = scmp.le.s32.totalorder 1, %s10
      %p112 = scmp.lt.s32.totalorder %s10, 5
      %p113 = pnand %p111, %p112
      %p114 = pneg %p113
      // Predicated region
      $region21: #{_lambda_.11} parent=5 // pred_check
        _
      $region22: #{_lambda_.11} parent=5 // pred_check_branch
        %116 = sbr.rel (%p113) target = $region24
      $region23: #{_lambda_.11} parent=5 // pred_region
        %s117 = ssub.s32 %s10, 1
        %s118 = smul.u32 2, %s20
        %p119 = scmp.lt.s32.totalorder %s19, 1
        %s120 = scalar_select %p119, %s19, 1
        %p121 = scmp.lt.s32.totalorder %s118, 3
        %s122 = scalar_select %p121, %s118, 3
        %s123 = smul.addr %s122, 2
        %s124 = smul.addr %s120, 8
        %s125 = sadd.s32 %s123, %s124
        %s126 = smul.addr %s125, 4
        %s127 = scalar_lea.vmem %s0, %s126
        %p128 = pneg %p50
        %p129 = pneg %p47
        %p130 = pneg %p78
        %p131 = pneg %p75
        %s132 = sand.u32 %s65, 1
        %s133 = scalar_lea.sflag [#allocation3], %s132
        %s134 = sand.u32 %s65, 1
        %s135 = smul.addr %s134, 8
        %s136 = scalar_lea.vmem [#allocation2], %s135
        %s137 = smul.u32 2, %s20
        %p138 = scmp.lt.s32.totalorder %s19, 1
        %s139 = scalar_select %p138, %s19, 1
        %p140 = scmp.lt.s32.totalorder %s137, 3
        %s141 = scalar_select %p140, %s137, 3
        %s142 = smul.addr %s141, 2
        %s143 = smul.addr %s139, 8
        %s144 = sadd.s32 %s142, %s143
        %s145 = smul.addr %s144, 4
        %s146 = scalar_lea.vmem %s0, %s145
        %s147 = smul.u32 2, %s20
        %s148 = smul.u32 2, %s20
        %v149 = vld [vmem:[%s146] sm:$0xf]
        %v150 = vld [vmem:[%s146 + $0x8] sm:$0xf]
        %s151 = scalar_lea.vmem %s146, 4
        %v152 = vld [vmem:[%s151] sm:$0xf]
        %v153 = vld [vmem:[%s151 + $0x8] sm:$0xf]
        %v154 = vmax.f32 %v149, %v152
        %v155 = vmax.f32 %v150, %v153
        %158 = vrot.lane.b32.xlu0 %v154, 112
        %v159 = vpop.permute.xlu0 %158
        %160 = vrot.lane.b32.xlu0 %v155, 112
        %v161 = vpop.permute.xlu0 %160
        %v164 = vmax.f32 %v154, %v159
        %v165 = vmax.f32 %v155, %v161
        %vm166 = vcmask 125952
        %167 = vst.msk [vmem:[%s136] sm:$0xf] %vm166, %v164
        %168 = vst.msk [vmem:[%s136 + $0x4] sm:$0xf] %vm166, %v165
        %s169 = sand.u32 %s65, 1
        %s170 = scalar_lea.sflag [#allocation3], %s169
        %s171 = sand.u32 %s65, 1
        %s172 = smul.addr %s171, 8
        %s173 = scalar_lea.vmem [#allocation2], %s172
        // Predicated region
        $region25: #{_lambda_.11} parent=23 // pred_check
          %p174 = pneg %p75
        $region26: #{_lambda_.11} parent=23 // pred_check_branch
          %176 = sbr.rel (%p174) target = $region28
        $region27: #{_lambda_.11} parent=23 // pred_region
          %s177 = smul.u32 2, %s20
          %s179 = ssub.s32 128, 128
          %180 = vsyncadd %s170, %s179
          %s181 = smul.addr %s19, 4
          %s182 = sadd.s32 %s177, %s181
          %s183 = smul.addr %s182, 64
          %s184 = scalar_lea.hbm %s1, %s183
          %s185 = sshll.u32 %s173, 4
          %s186 = int_to_ptr.vmem [resolvable:$true] %s185
          %191 = dma.vmem_to_hbm [thread:$0]  %s186, 128, %s184, %s170, 64, 64, 4
        $region28: #{_lambda_.11} parent=23 // pred_fallthru
          _
      $region24: #{_lambda_.11} parent=5 // pred_fallthru
        _
      %p192 = scmp.le.s32.totalorder 2, %s10
      // Predicated region
      $region29: #{_lambda_.11} parent=5 // pred_check
        %p193 = pneg %p192
      $region30: #{_lambda_.11} parent=5 // pred_check_branch
        %195 = sbr.rel (%p193) target = $region32
      $region31: #{_lambda_.11} parent=5 // pred_region
        %s196 = ssub.s32 %s10, 2
        // Predicated region
        $region33: #{_lambda_.11} parent=31 // pred_check
          %p197 = pneg %p81
        $region34: #{_lambda_.11} parent=31 // pred_check_branch
          %199 = sbr.rel (%p197) target = $region36
        $region35: #{_lambda_.11} parent=31 // pred_region
          %s200 = sand.u32 %s66, 1
          %s201 = scalar_lea.sflag [#allocation3], %s200
          %s202 = sand.u32 %s66, 1
          %s203 = smul.addr %s202, 8
          %s204 = scalar_lea.vmem [#allocation2], %s203
          %205 = dma.done %s201, 128
        $region36: #{_lambda_.11} parent=31 // pred_fallthru
          _
      $region32: #{_lambda_.11} parent=5 // pred_fallthru
        _
    $region6: #{_lambda_.11} parent=1 // loop_footer
      %s14 = sadd.s32 1, %s10
    $region7: #{_lambda_.11} parent=1 // loop_footer_branch
      %9 = sbr.rel target = $region3
    $region8: #{_lambda_.11} parent=1 // loop_exit
      _
    %206 = vsyncpa [#allocation3], 1
    %s207 = scalar_lea.sflag [#allocation3], 1
    %208 = vsyncpa %s207, 1

// kernel: _lambda_.10
$region0: #{_lambda_.10}
  #allocation0 [shape = 'u32[]', space=smem, size = 0x4, offset = 0x4, fixed_abs, tag = 'smem constant byte address 0x4 - core index']
  #allocation1 [shape = 'u32[144,128]{1,0:T(1,128)}', space=vmem, size = 0x12000, scoped, tag = 'internal scratch']
  %s0 = inlined_call_operand.vmem [shape: f32[2,10,10,16], index: 0, kind: input, shape index: {}]
  %s1 = inlined_call_operand.vmem [shape: bf16[144,16], index: 1, kind: input, shape index: {}]
  %s2 = inlined_call_operand.vmem [shape: f32[1,16], index: 2, kind: input, shape index: {}]
  %s3 = inlined_call_operand.hbm [shape: f32[128,16], index: 3, kind: output, shape index: {0}]
  %s4 = inlined_call_operand.vmem [shape: f32[128,16], index: 4, kind: output, shape index: {1}]
  %5 = xla_tuple %s3, %s4
  %s6 = sld [smem:[#allocation0]]
  $region53: #{_lambda_.10} parent=0
    _
  %s8 = ssub.s32 1, %s6
  %s9 = scalar_select 0, %s8, %s6
  $region1: #{_lambda_.10} parent=0
    #allocation2 [shape = 'u8[32768]{0}', space=vmem, size = 0x8000, scoped, tag = 'output window, operand 0']
    #allocation3 [shape = 's32[2]{0}', space=sflag, size = 0x8, scoped, tag = 'scoped memory for _lambda_.10']
    %10 = vsyncpa [#allocation3], 0
    %s11 = scalar_lea.sflag [#allocation3], 1
    %12 = vsyncpa %s11, 0
    loop: start=0, step=1, limit=6
    $region2: #{_lambda_.10} parent=1 // loop_pre_header
      _
    $region3: #{_lambda_.10} parent=1 // loop_header
      %s14 = sphi 0, %s18
      %p15 = scmp.ge.s32.totalorder %s14, 6
      %s21 = sphi 0, %s33
      %s22 = sphi 0, %s29
      %s23 = sphi 0, %s21
      %s24 = sphi 0, %s22
      %s25 = sphi 0, %s23
      %s26 = sphi 0, %s24
      %s36 = sphi 0, %s38
      %s39 = sphi 0, %s36
      %s40 = sphi 0, %s39
      %s56 = sphi 0, %s40
      %s60 = sphi 0, %s60
      %s62 = sphi 0, %s60
      %s63 = sphi 0, %s62
      %s77 = sphi 0, %s63
      %s81 = sphi 0, %s81
      %s83 = sphi 0, %s81
      %s84 = sphi 0, %s83
      %s98 = sphi 0, %s84
      %s108 = sphi 0, %s110
      %s111 = sphi 0, %s108
      %s112 = sphi 0, %s111
      %s128 = sphi 0, %s112
      %s138 = sphi 0, %s140
      %s141 = sphi 0, %s138
      %s142 = sphi 0, %s141
      %s158 = sphi 0, %s142
    $region4: #{_lambda_.10} parent=1 // loop_header_branch
      %17 = sbr.rel (%p15) target = $region8
    $region5: #{_lambda_.10} parent=1 // loop_body
      %s19 = ssub.s32 %s14, 1
      %s20 = ssub.s32 %s14, 2
      %s27 = sadd.s32 1, %s22
      %p28 = scmp.ge.s32.totalorder %s27, 2
      %s29 = scalar_select %p28, 0, %s27
      %s30 = sadd.s32 1, %s21
      %s31 = scalar_select %p28, %s30, %s21
      %p32 = scmp.ge.s32.totalorder %s31, 2
      %s33 = scalar_select %p32, 0, %s31
      %s34 = ssub.s32 %s21, %s33
      %p35 = scmp.eq.s32.totalorder %s34, 0
      %s37 = sadd.s32 %s36, 1
      %s38 = scalar_select %p35, %s36, %s37
      %p41 = pneg %p35
      %p42 = scmp.eq.s32.totalorder %s14, 3
      %p43 = por %p41, %p42
      %p44 = scmp.ne.s32.totalorder %s36, %s39
      %p45 = scmp.eq.s32.totalorder %s14, 0
      %p46 = por %p44, %p45
      %p47 = scmp.ne.s32.totalorder %s36, %s39
      %p48 = scmp.eq.s32.totalorder %s19, 3
      %p49 = por %p47, %p48
      %p50 = scmp.ne.s32.totalorder %s39, %s40
      %p51 = scmp.eq.s32.totalorder %s19, 0
      %p52 = por %p50, %p51
      %p53 = scmp.ne.s32.totalorder %s39, %s40
      %p54 = scmp.eq.s32.totalorder %s20, 3
      %p55 = por %p53, %p54
      %p57 = scmp.ne.s32.totalorder %s40, %s56
      %p58 = scmp.eq.s32.totalorder %s20, 0
      %p59 = por %p57, %p58
      %s61 = sadd.s32 %s60, 1
      %p64 = scmp.eq.s32.totalorder %s14, 3
      %p65 = scmp.ne.s32.totalorder %s60, %s62
      %p66 = scmp.eq.s32.totalorder %s14, 0
      %p67 = por %p65, %p66
      %p68 = scmp.ne.s32.totalorder %s60, %s62
      %p69 = scmp.eq.s32.totalorder %s19, 3
      %p70 = por %p68, %p69
      %p71 = scmp.ne.s32.totalorder %s62, %s63
      %p72 = scmp.eq.s32.totalorder %s19, 0
      %p73 = por %p71, %p72
      %p74 = scmp.ne.s32.totalorder %s62, %s63
      %p75 = scmp.eq.s32.totalorder %s20, 3
      %p76 = por %p74, %p75
      %p78 = scmp.ne.s32.totalorder %s63, %s77
      %p79 = scmp.eq.s32.totalorder %s20, 0
      %p80 = por %p78, %p79
      %s82 = sadd.s32 %s81, 1
      %p85 = scmp.eq.s32.totalorder %s14, 3
      %p86 = scmp.ne.s32.totalorder %s81, %s83
      %p87 = scmp.eq.s32.totalorder %s14, 0
      %p88 = por %p86, %p87
      %p89 = scmp.ne.s32.totalorder %s81, %s83
      %p90 = scmp.eq.s32.totalorder %s19, 3
      %p91 = por %p89, %p90
      %p92 = scmp.ne.s32.totalorder %s83, %s84
      %p93 = scmp.eq.s32.totalorder %s19, 0
      %p94 = por %p92, %p93
      %p95 = scmp.ne.s32.totalorder %s83, %s84
      %p96 = scmp.eq.s32.totalorder %s20, 3
      %p97 = por %p95, %p96
      %p99 = scmp.ne.s32.totalorder %s84, %s98
      %p100 = scmp.eq.s32.totalorder %s20, 0
      %p101 = por %p99, %p100
      %s102 = smul.u32 %s21, 2
      %s103 = sadd.s32 %s102, %s22
      %s104 = smul.u32 %s33, 2
      %s105 = sadd.s32 %s104, %s29
      %s106 = ssub.s32 %s103, %s105
      %p107 = scmp.eq.s32.totalorder %s106, 0
      %s109 = sadd.s32 %s108, 1
      %s110 = scalar_select %p107, %s108, %s109
      %p113 = pneg %p107
      %p114 = scmp.eq.s32.totalorder %s14, 3
      %p115 = por %p113, %p114
      %p116 = scmp.ne.s32.totalorder %s108, %s111
      %p117 = scmp.eq.s32.totalorder %s14, 0
      %p118 = por %p116, %p117
      %p119 = scmp.ne.s32.totalorder %s108, %s111
      %p120 = scmp.eq.s32.totalorder %s19, 3
      %p121 = por %p119, %p120
      %p122 = scmp.ne.s32.totalorder %s111, %s112
      %p123 = scmp.eq.s32.totalorder %s19, 0
      %p124 = por %p122, %p123
      %p125 = scmp.ne.s32.totalorder %s111, %s112
      %p126 = scmp.eq.s32.totalorder %s20, 3
      %p127 = por %p125, %p126
      %p129 = scmp.ne.s32.totalorder %s112, %s128
      %p130 = scmp.eq.s32.totalorder %s20, 0
      %p131 = por %p129, %p130
      %s132 = smul.u32 %s21, 2
      %s133 = sadd.s32 %s132, %s22
      %s134 = smul.u32 %s33, 2
      %s135 = sadd.s32 %s134, %s29
      %s136 = ssub.s32 %s133, %s135
      %p137 = scmp.eq.s32.totalorder %s136, 0
      %s139 = sadd.s32 %s138, 1
      %s140 = scalar_select %p137, %s138, %s139
      %p143 = pneg %p137
      %p144 = scmp.eq.s32.totalorder %s14, 3
      %p145 = por %p143, %p144
      %p146 = scmp.ne.s32.totalorder %s138, %s141
      %p147 = scmp.eq.s32.totalorder %s14, 0
      %p148 = por %p146, %p147
      %p149 = scmp.ne.s32.totalorder %s138, %s141
      %p150 = scmp.eq.s32.totalorder %s19, 3
      %p151 = por %p149, %p150
      %p152 = scmp.ne.s32.totalorder %s141, %s142
      %p153 = scmp.eq.s32.totalorder %s19, 0
      %p154 = por %p152, %p153
      %p155 = scmp.ne.s32.totalorder %s141, %s142
      %p156 = scmp.eq.s32.totalorder %s20, 3
      %p157 = por %p155, %p156
      %p159 = scmp.ne.s32.totalorder %s142, %s158
      %p160 = scmp.eq.s32.totalorder %s20, 0
      %p161 = por %p159, %p160
      %p162 = scmp.le.s32.totalorder 1, %s14
      %p163 = scmp.lt.s32.totalorder %s14, 5
      %p164 = pnand %p162, %p163
      %p165 = pneg %p164
      // Predicated region
      $region9: #{_lambda_.10} parent=5 // pred_check
        _
      $region10: #{_lambda_.10} parent=5 // pred_check_branch
        %167 = sbr.rel (%p164) target = $region12
      $region11: #{_lambda_.10} parent=5 // pred_region
        %s168 = ssub.s32 %s14, 1
        // Predicated region
        $region13: #{_lambda_.10} parent=11 // pred_check
          %p169 = pneg %p73
        $region14: #{_lambda_.10} parent=11 // pred_check_branch
          %171 = sbr.rel (%p169) target = $region16
        $region15: #{_lambda_.10} parent=11 // pred_region
          _
        $region16: #{_lambda_.10} parent=11 // pred_fallthru
          _
        // Predicated region
        $region17: #{_lambda_.10} parent=11 // pred_check
          %p172 = pneg %p94
        $region18: #{_lambda_.10} parent=11 // pred_check_branch
          %174 = sbr.rel (%p172) target = $region20
        $region19: #{_lambda_.10} parent=11 // pred_region
          _
        $region20: #{_lambda_.10} parent=11 // pred_fallthru
          _
      $region12: #{_lambda_.10} parent=5 // pred_fallthru
        _
      %p175 = scmp.lt.s32.totalorder %s14, 4
      // Predicated region
      $region21: #{_lambda_.10} parent=5 // pred_check
        %p176 = pneg %p175
      $region22: #{_lambda_.10} parent=5 // pred_check_branch
        %178 = sbr.rel (%p176) target = $region24
      $region23: #{_lambda_.10} parent=5 // pred_region
        // Predicated region
        $region25: #{_lambda_.10} parent=23 // pred_check
          %p179 = pneg %p46
        $region26: #{_lambda_.10} parent=23 // pred_check_branch
          %181 = sbr.rel (%p179) target = $region28
        $region27: #{_lambda_.10} parent=23 // pred_region
          %p182 = scmp.lt.s32.totalorder %s21, 1
          %s183 = scalar_select %p182, %s21, 1
          %s184 = smul.addr %s183, 20
          %s185 = smul.addr %s184, 8
          %s186 = scalar_lea.vmem %s0, %s185
        $region28: #{_lambda_.10} parent=23 // pred_fallthru
          _
      $region24: #{_lambda_.10} parent=5 // pred_fallthru
        _
      %p187 = scmp.le.s32.totalorder 1, %s14
      %p188 = scmp.lt.s32.totalorder %s14, 5
      %p189 = pnand %p187, %p188
      %p190 = pneg %p189
      // Predicated region
      $region29: #{_lambda_.10} parent=5 // pred_check
        _
      $region30: #{_lambda_.10} parent=5 // pred_check_branch
        %192 = sbr.rel (%p189) target = $region32
      $region31: #{_lambda_.10} parent=5 // pred_region
        %s193 = ssub.s32 %s14, 1
        %p194 = scmp.lt.s32.totalorder %s23, 1
        %s195 = scalar_select %p194, %s23, 1
        %s196 = smul.addr %s195, 20
        %s197 = smul.addr %s196, 8
        %s198 = scalar_lea.vmem %s0, %s197
        %p199 = pneg %p52
        %p200 = pneg %p49
        %p201 = pneg %p73
        %p202 = pneg %p70
        %p203 = pneg %p94
        %p204 = pneg %p91
        %p205 = pneg %p124
        %p206 = pneg %p121
        %s207 = sand.u32 %s111, 1
        %s208 = scalar_lea.sflag [#allocation3], %s207
        %s209 = sand.u32 %s111, 1
        %s210 = smul.addr %s209, 32
        %s211 = scalar_lea.vmem [#allocation2], %s210
        %p212 = pneg %p154
        %p213 = pneg %p151
        %s214 = smul.u32 %s23, 2
        %s215 = sadd.s32 %s214, %s24
        %s216 = smul.u32 4, %s215
        %p217 = scmp.lt.s32.totalorder %s216, 15
        %s218 = scalar_select %p217, %s216, 15
        %s219 = smul.addr %s218, 8
        %s220 = scalar_lea.vmem %s4, %s219
        %p221 = scmp.lt.s32.totalorder %s23, 1
        %s222 = scalar_select %p221, %s23, 1
        %s223 = smul.addr %s222, 20
        %s224 = smul.addr %s223, 8
        %s225 = scalar_lea.vmem %s0, %s224
        %s226 = smul.u32 %s23, 2
        %s227 = sadd.s32 %s226, %s24
        %s228 = smul.u32 4, %s227
        %s229 = smul.u32 %s23, 2
        %s230 = sadd.s32 %s229, %s24
        %s231 = smul.u32 4, %s230
        %p232 = scmp.lt.s32.totalorder %s231, 15
        %s233 = scalar_select %p232, %s231, 15
        %s234 = smul.addr %s233, 8
        %s235 = scalar_lea.vmem %s4, %s234
        %s236 = smul.u32 %s23, 2
        %s237 = sadd.s32 %s236, %s24
        %s238 = smul.u32 4, %s237
        %s240 = smul.u32 %s24, 4
        %s241 = smul.u32 %s240, 16
        %s242 = scalar_lea.vmem %s225, %s241
        %v243 = vld [vmem:[%s242] sm:$0xff]
        %v244 = vld [vmem:[%s242 + $0x10] sm:$0xff]
        %v245 = vld [vmem:[%s242 + $0x20] sm:$0xff]
        %v246 = vld [vmem:[%s242 + $0x30] sm:$0xff]
        %v247 = vld [vmem:[%s242 + $0x1] sm:$0xff]
        %v248 = vld [vmem:[%s242 + $0x11] sm:$0xff]
        %v249 = vld [vmem:[%s242 + $0x21] sm:$0xff]
        %v250 = vld [vmem:[%s242 + $0x31] sm:$0xff]
        %v251 = vld [vmem:[%s242 + $0x2] sm:$0xff]
        %v252 = vld [vmem:[%s242 + $0x12] sm:$0xff]
        %v253 = vld [vmem:[%s242 + $0x22] sm:$0xff]
        %v254 = vld [vmem:[%s242 + $0x32] sm:$0xff]
        %s255 = sadd.s32 %s240, 1
        %s256 = smul.u32 %s255, 16
        %s257 = scalar_lea.vmem %s225, %s256
        %v258 = vld [vmem:[%s257] sm:$0xff]
        %v259 = vld [vmem:[%s257 + $0x10] sm:$0xff]
        %v260 = vld [vmem:[%s257 + $0x20] sm:$0xff]
        %v261 = vld [vmem:[%s257 + $0x30] sm:$0xff]
        %v262 = vld [vmem:[%s257 + $0x1] sm:$0xff]
        %v263 = vld [vmem:[%s257 + $0x11] sm:$0xff]
        %v264 = vld [vmem:[%s257 + $0x21] sm:$0xff]
        %v265 = vld [vmem:[%s257 + $0x31] sm:$0xff]
        %v266 = vld [vmem:[%s257 + $0x2] sm:$0xff]
        %v267 = vld [vmem:[%s257 + $0x12] sm:$0xff]
        %v268 = vld [vmem:[%s257 + $0x22] sm:$0xff]
        %v269 = vld [vmem:[%s257 + $0x32] sm:$0xff]
        %s270 = sadd.s32 %s240, 2
        %s271 = smul.u32 %s270, 16
        %s272 = scalar_lea.vmem %s225, %s271
        %v273 = vld [vmem:[%s272] sm:$0xff]
        %v274 = vld [vmem:[%s272 + $0x10] sm:$0xff]
        %v275 = vld [vmem:[%s272 + $0x20] sm:$0xff]
        %v276 = vld [vmem:[%s272 + $0x30] sm:$0xff]
        %v277 = vld [vmem:[%s272 + $0x1] sm:$0xff]
        %v278 = vld [vmem:[%s272 + $0x11] sm:$0xff]
        %v279 = vld [vmem:[%s272 + $0x21] sm:$0xff]
        %v280 = vld [vmem:[%s272 + $0x31] sm:$0xff]
        %v281 = vld [vmem:[%s272 + $0x2] sm:$0xff]
        %v282 = vld [vmem:[%s272 + $0x12] sm:$0xff]
        %v283 = vld [vmem:[%s272 + $0x22] sm:$0xff]
        %v284 = vld [vmem:[%s272 + $0x32] sm:$0xff]
        %289 = vrot.lane.b32.xlu0 %v247, 16
        %v290 = vpop.permute.xlu0 %289
        %291 = vrot.lane.b32.xlu0 %v248, 16
        %v292 = vpop.permute.xlu0 %291
        %293 = vrot.lane.b32.xlu0 %v249, 16
        %v294 = vpop.permute.xlu0 %293
        %295 = vrot.lane.b32.xlu0 %v250, 16
        %v296 = vpop.permute.xlu0 %295
        %305 = vrot.lane.b32.xlu0 %v251, 32
        %v306 = vpop.permute.xlu0 %305
        %307 = vrot.lane.b32.xlu0 %v252, 32
        %v308 = vpop.permute.xlu0 %307
        %309 = vrot.lane.b32.xlu0 %v253, 32
        %v310 = vpop.permute.xlu0 %309
        %311 = vrot.lane.b32.xlu0 %v254, 32
        %v312 = vpop.permute.xlu0 %311
        %321 = vrot.lane.b32.xlu0 %v258, 48
        %v322 = vpop.permute.xlu0 %321
        %323 = vrot.lane.b32.xlu0 %v259, 48
        %v324 = vpop.permute.xlu0 %323
        %325 = vrot.lane.b32.xlu0 %v260, 48
        %v326 = vpop.permute.xlu0 %325
        %327 = vrot.lane.b32.xlu0 %v261, 48
        %v328 = vpop.permute.xlu0 %327
        %337 = vrot.lane.b32.xlu0 %v262, 64
        %v338 = vpop.permute.xlu0 %337
        %339 = vrot.lane.b32.xlu0 %v263, 64
        %v340 = vpop.permute.xlu0 %339
        %341 = vrot.lane.b32.xlu0 %v264, 64
        %v342 = vpop.permute.xlu0 %341
        %343 = vrot.lane.b32.xlu0 %v265, 64
        %v344 = vpop.permute.xlu0 %343
        %353 = vrot.lane.b32.xlu0 %v266, 80
        %v354 = vpop.permute.xlu0 %353
        %355 = vrot.lane.b32.xlu0 %v267, 80
        %v356 = vpop.permute.xlu0 %355
        %357 = vrot.lane.b32.xlu0 %v268, 80
        %v358 = vpop.permute.xlu0 %357
        %359 = vrot.lane.b32.xlu0 %v269, 80
        %v360 = vpop.permute.xlu0 %359
        %369 = vrot.lane.b32.xlu0 %v273, 96
        %v370 = vpop.permute.xlu0 %369
        %371 = vrot.lane.b32.xlu0 %v274, 96
        %v372 = vpop.permute.xlu0 %371
        %373 = vrot.lane.b32.xlu0 %v275, 96
        %v374 = vpop.permute.xlu0 %373
        %375 = vrot.lane.b32.xlu0 %v276, 96
        %v376 = vpop.permute.xlu0 %375
        %385 = vrot.lane.b32.xlu0 %v277, 112
        %v386 = vpop.permute.xlu0 %385
        %387 = vrot.lane.b32.xlu0 %v278, 112
        %v388 = vpop.permute.xlu0 %387
        %389 = vrot.lane.b32.xlu0 %v279, 112
        %v390 = vpop.permute.xlu0 %389
        %391 = vrot.lane.b32.xlu0 %v280, 112
        %v392 = vpop.permute.xlu0 %391
        %vm397 = vcmask 130048
        %v398 = vsel %vm397, %v243, %v290
        %v399 = vsel %vm397, %v244, %v292
        %v400 = vsel %vm397, %v245, %v294
        %v401 = vsel %vm397, %v246, %v296
        %vm402 = vcmask 261120
        %v403 = vsel %vm402, %v398, %v306
        %v404 = vsel %vm402, %v399, %v308
        %v405 = vsel %vm402, %v400, %v310
        %v406 = vsel %vm402, %v401, %v312
        %vm407 = vcmask 392192
        %v408 = vsel %vm407, %v403, %v322
        %v409 = vsel %vm407, %v404, %v324
        %v410 = vsel %vm407, %v405, %v326
        %v411 = vsel %vm407, %v406, %v328
        %vm412 = vcmask 523264
        %v413 = vsel %vm412, %v408, %v338
        %v414 = vsel %vm412, %v409, %v340
        %v415 = vsel %vm412, %v410, %v342
        %v416 = vsel %vm412, %v411, %v344
        %vm417 = vcmask 654336
        %v418 = vsel %vm417, %v413, %v354
        %v419 = vsel %vm417, %v414, %v356
        %v420 = vsel %vm417, %v415, %v358
        %v421 = vsel %vm417, %v416, %v360
        %vm422 = vcmask 785408
        %v423 = vsel %vm422, %v418, %v370
        %v424 = vsel %vm422, %v419, %v372
        %v425 = vsel %vm422, %v420, %v374
        %v426 = vsel %vm422, %v421, %v376
        %vm427 = vcmask 916480
        %v428 = vsel %vm427, %v423, %v386
        %v429 = vsel %vm427, %v424, %v388
        %v430 = vsel %vm427, %v425, %v390
        %v431 = vsel %vm427, %v426, %v392
        %v432 = vpack.c.bf16 %v429, %v428
        %v433 = vpack.c.bf16 %v282, %v281
        %v434 = vpack.c.bf16 %v431, %v430
        %v435 = vpack.c.bf16 %v284, %v283
        %v436 = vld [vmem:[%s1] sm:$0xf]
        %v437 = vld [vmem:[%s1 + $0x4] sm:$0xf]
        %v438 = vld [vmem:[%s1 + $0x8] sm:$0xf]
        %v439 = vld [vmem:[%s1 + $0xc] sm:$0xf]
        %v440 = vld [vmem:[%s1 + $0x10] sm:$0xf]
        %v441 = vld [vmem:[%s1 + $0x14] sm:$0xf]
        %v442 = vld [vmem:[%s1 + $0x18] sm:$0xf]
        %v443 = vld [vmem:[%s1 + $0x1c] sm:$0xf]
        %v444 = vld [vmem:[%s1 + $0x20] sm:$0xf]
        %v445 = vld [vmem:[%s1 + $0x24] sm:$0xf]
        %v446 = vld [vmem:[%s1 + $0x28] sm:$0xf]
        %v447 = vld [vmem:[%s1 + $0x2c] sm:$0xf]
        %v448 = vld [vmem:[%s1 + $0x30] sm:$0xf]
        %v449 = vld [vmem:[%s1 + $0x34] sm:$0xf]
        %v450 = vld [vmem:[%s1 + $0x38] sm:$0xf]
        %v451 = vld [vmem:[%s1 + $0x3c] sm:$0xf]
        %v452 = vld [vmem:[%s1 + $0x40] sm:$0xf]
        %v453 = vld [vmem:[%s1 + $0x44] sm:$0xf]
        %v454 = vld [vmem:[%s2] sm:$0x1]
        %v456 = vlaneseq
        %v457 = vshrl.u32 %v456, 7
        %v458 = vsub.s32 0, %v457
        %v459 = vrot.slane %v454, %v458
        %v479 = vunpack.c.l.b16 %v436
        %v480 = vunpack.c.l.b16 %v437
        %v481 = vunpack.c.l.b16 %v438
        %v482 = vunpack.c.l.b16 %v439
        %v483 = vunpack.c.l.b16 %v440
        %v484 = vunpack.c.l.b16 %v441
        %v485 = vunpack.c.l.b16 %v442
        %v486 = vunpack.c.l.b16 %v443
        %v487 = vunpack.c.l.b16 %v444
        %v488 = vunpack.c.l.b16 %v445
        %v489 = vunpack.c.l.b16 %v446
        %v490 = vunpack.c.l.b16 %v447
        %v491 = vunpack.c.l.b16 %v448
        %v492 = vunpack.c.l.b16 %v449
        %v493 = vunpack.c.l.b16 %v450
        %v494 = vunpack.c.l.b16 %v451
        %v495 = vunpack.c.l.b16 %v452
        %v496 = vunpack.c.l.b16 %v453
        %v497 = vpack.c.b16 %v480, %v479
        %v498 = vpack.c.b16 %v482, %v481
        %v499 = vpack.c.b16 %v484, %v483
        %v500 = vpack.c.b16 %v486, %v485
        %v501 = vpack.c.b16 %v488, %v487
        %v502 = vpack.c.b16 %v490, %v489
        %v503 = vpack.c.b16 %v492, %v491
        %v504 = vpack.c.b16 %v494, %v493
        %v505 = vpack.c.b16 %v496, %v495
        %v516 = vsel %vm397, %v433, 0
        %v519 = vsel %vm397, %v435, 0
        %521 = vmatprep.subr.bf16.mxu0 0
        %522 = vmatpush1.bf16.msra.mxu0 %v497
        %523 = vmatprep.subr.bf16.mxu0 0
        %524 = vmatpush1.bf16.msra.mxu0 %v498
        %525 = vmatprep.subr.bf16.mxu0 0
        %526 = vmatpush1.bf16.msra.mxu0 %v499
        %527 = vmatprep.subr.bf16.mxu0 0
        %528 = vmatpush1.bf16.msra.mxu0 %v500
        %529 = vmatprep.subr.bf16.mxu0 0
        %530 = vmatpush1.bf16.msra.mxu0 %v501
        %531 = vmatprep.subr.bf16.mxu0 0
        %532 = vmatpush1.bf16.msra.mxu0 %v502
        %533 = vmatprep.subr.bf16.mxu0 0
        %534 = vmatpush1.bf16.msra.mxu0 %v503
        %535 = vmatprep.subr.bf16.mxu0 0
        %536 = vmatpush1.bf16.msra.mxu0 %v504
        %537 = vmatprep.subr.bf16.mxu0 0
        %538 = vmatpush1.bf16.msra.mxu0 %v505
        %539 = vmatprep.subr.bf16.mxu0 0
        %540 = vmatpush1.bf16.msra.mxu0 0
        %541 = vmatprep.subr.bf16.mxu0 0
        %542 = vmatpush1.bf16.msra.mxu0 0
        %543 = vmatprep.subr.bf16.mxu0 0
        %544 = vmatpush1.bf16.msra.mxu0 0
        %545 = vmatprep.subr.bf16.mxu0 0
        %546 = vmatpush1.bf16.msra.mxu0 0
        %547 = vmatprep.subr.bf16.mxu0 0
        %548 = vmatpush1.bf16.msra.mxu0 0
        %549 = vmatprep.subr.bf16.mxu0 0
        %550 = vmatpush1.bf16.msra.mxu0 0
        %551 = vmatprep.subr.bf16.mxu0 0
        %552 = vmatpush1.bf16.msra.mxu0 0
        %553 = vmatprep.mubr.bf16.mxu0 %v516
        %554 = vmatmul.mubr.bf16.gmra.mrb[0].mxu0 %v432
        %v555 = vpop.f32.mrb[0].mxu0
        %v556 = vadd.f32 %v459, %v555
        %v557 = vpop.f32.mrb[0].mxu0
        %v558 = vpop.f32.mrb[0].mxu0
        %v559 = vadd.f32 %v459, %v558
        %v560 = vpop.f32.mrb[0].mxu0
        %561 = vmatprep.mubr.bf16.mxu0 %v519
        %562 = vmatmul.mubr.bf16.gmra.mrb[0].mxu0 %v434
        %v563 = vpop.f32.mrb[0].mxu0
        %v564 = vadd.f32 %v459, %v563
        %v565 = vpop.f32.mrb[0].mxu0
        %v566 = vpop.f32.mrb[0].mxu0
        %v567 = vadd.f32 %v459, %v566
        %v568 = vpop.f32.mrb[0].mxu0
        %569 = vdwg.mxu0
        %570 = vst.msk [vmem:[%s211] sm:$0xff] %vm397, %v556
        %571 = vst.msk [vmem:[%s211 + $0x8] sm:$0xff] %vm397, %v559
        %572 = vst.msk [vmem:[%s211 + $0x10] sm:$0xff] %vm397, %v564
        %573 = vst.msk [vmem:[%s211 + $0x18] sm:$0xff] %vm397, %v567
        %v574 = vmax.f32 %v556, 0.0
        %v575 = vmax.f32 %v559, 0.0
        %v576 = vmax.f32 %v564, 0.0
        %v577 = vmax.f32 %v567, 0.0
        %578 = vst.msk [vmem:[%s235] sm:$0xff] %vm397, %v574
        %579 = vst.msk [vmem:[%s235 + $0x8] sm:$0xff] %vm397, %v575
        %580 = vst.msk [vmem:[%s235 + $0x10] sm:$0xff] %vm397, %v576
        %581 = vst.msk [vmem:[%s235 + $0x18] sm:$0xff] %vm397, %v577
        %s582 = sand.u32 %s111, 1
        %s583 = scalar_lea.sflag [#allocation3], %s582
        %s584 = sand.u32 %s111, 1
        %s585 = smul.addr %s584, 32
        %s586 = scalar_lea.vmem [#allocation2], %s585
        %s587 = smul.u32 %s23, 2
        %s588 = sadd.s32 %s587, %s24
        %s589 = smul.u32 4, %s588
        %p590 = scmp.lt.s32.totalorder %s589, 15
        %s591 = scalar_select %p590, %s589, 15
        %s592 = smul.addr %s591, 8
        %s593 = scalar_lea.vmem %s4, %s592
        // Predicated region
        $region33: #{_lambda_.10} parent=31 // pred_check
          %p594 = pneg %p121
        $region34: #{_lambda_.10} parent=31 // pred_check_branch
          %596 = sbr.rel (%p594) target = $region36
        $region35: #{_lambda_.10} parent=31 // pred_region
          %s597 = smul.u32 %s23, 2
          %s598 = sadd.s32 %s597, %s24
          %s599 = smul.u32 4, %s598
          %s601 = ssub.s32 512, 512
          %602 = vsyncadd %s583, %s601
          %s603 = smul.addr %s599, 128
          %s604 = scalar_lea.hbm %s3, %s603
          %s605 = sshll.u32 %s586, 4
          %s606 = int_to_ptr.vmem [resolvable:$true] %s605
          %611 = dma.vmem_to_hbm [thread:$0]  %s606, 512, %s604, %s583, 128, 128, 8
        $region36: #{_lambda_.10} parent=31 // pred_fallthru
          _
        // Predicated region
        $region37: #{_lambda_.10} parent=31 // pred_check
          %p612 = pneg %p151
        $region38: #{_lambda_.10} parent=31 // pred_check_branch
          %614 = sbr.rel (%p612) target = $region40
        $region39: #{_lambda_.10} parent=31 // pred_region
          %s615 = smul.u32 %s23, 2
          %s616 = sadd.s32 %s615, %s24
          %s617 = smul.u32 4, %s616
        $region40: #{_lambda_.10} parent=31 // pred_fallthru
          _
      $region32: #{_lambda_.10} parent=5 // pred_fallthru
        _
      %p618 = scmp.le.s32.totalorder 2, %s14
      // Predicated region
      $region41: #{_lambda_.10} parent=5 // pred_check
        %p619 = pneg %p618
      $region42: #{_lambda_.10} parent=5 // pred_check_branch
        %621 = sbr.rel (%p619) target = $region44
      $region43: #{_lambda_.10} parent=5 // pred_region
        %s622 = ssub.s32 %s14, 2
        // Predicated region
        $region45: #{_lambda_.10} parent=43 // pred_check
          %p623 = pneg %p127
        $region46: #{_lambda_.10} parent=43 // pred_check_branch
          %625 = sbr.rel (%p623) target = $region48
        $region47: #{_lambda_.10} parent=43 // pred_region
          %s626 = sand.u32 %s112, 1
          %s627 = scalar_lea.sflag [#allocation3], %s626
          %s628 = sand.u32 %s112, 1
          %s629 = smul.addr %s628, 32
          %s630 = scalar_lea.vmem [#allocation2], %s629
          %631 = dma.done %s627, 512
        $region48: #{_lambda_.10} parent=43 // pred_fallthru
          _
        // Predicated region
        $region49: #{_lambda_.10} parent=43 // pred_check
          %p632 = pneg %p157
        $region50: #{_lambda_.10} parent=43 // pred_check_branch
          %634 = sbr.rel (%p632) target = $region52
        $region51: #{_lambda_.10} parent=43 // pred_region
          %s635 = smul.u32 %s25, 2
          %s636 = sadd.s32 %s635, %s26
          %s637 = smul.u32 4, %s636
          %p638 = scmp.lt.s32.totalorder %s637, 15
          %s639 = scalar_select %p638, %s637, 15
          %s640 = smul.addr %s639, 8
          %s641 = scalar_lea.vmem %s4, %s640
        $region52: #{_lambda_.10} parent=43 // pred_fallthru
          _
      $region44: #{_lambda_.10} parent=5 // pred_fallthru
        _
    $region6: #{_lambda_.10} parent=1 // loop_footer
      %s18 = sadd.s32 1, %s14
    $region7: #{_lambda_.10} parent=1 // loop_footer_branch
      %13 = sbr.rel target = $region3
    $region8: #{_lambda_.10} parent=1 // loop_exit
      _
    %642 = vsyncpa [#allocation3], 1
    %s643 = scalar_lea.sflag [#allocation3], 1
    %644 = vsyncpa %s643, 1

</llo_original>
